<compile_context>
chip_gen: v7x
topology: tpu7x:2x2x1
jax: 0.10.0
libtpu: 0.0.40
codegen_flags: <defaults>
</compile_context>

<pallas_src>
import functools

import jax
import jax.numpy as jnp
from jax.experimental import pallas as pl
from jax.experimental.pallas import tpu as pltpu

INPUT_DIM = 4
OUTPUT_DIM = 25
OUT_PAD = 128            # lane-dense padded width for the final layer output
HIDDEN = (512, 512, 256, 128)
BN_EPS = 1e-5


def _mlp_kernel(
    x_ref,
    w1_ref, b1_ref,
    w2_ref, b2_ref,
    w3_ref, b3_ref,
    w4_ref, b4_ref,
    w5_ref, b5_ref,
    o_ref,
):
    """Fused MLP: 4x (Linear + ReLU) + final Linear.

    BatchNorm has been folded into the weights/biases by the wrapper, so the
    kernel is pure matmul + bias + ReLU. All weights (~1.7 MB) are fully
    resident in VMEM; the grid tiles only the batch dimension.
    """
    cdt = w1_ref.dtype                     # matmul input dtype (f32 or bf16)
    h = x_ref[...].astype(cdt)

    def block(h, w_ref, b_ref):
        y = jnp.dot(h, w_ref[...], preferred_element_type=jnp.float32) + b_ref[...]
        return jnp.maximum(y, 0.0).astype(cdt)   # ReLU, re-cast for next MXU pass

    h = block(h, w1_ref, b1_ref)
    h = block(h, w2_ref, b2_ref)
    h = block(h, w3_ref, b3_ref)
    h = block(h, w4_ref, b4_ref)

    out = jnp.dot(h, w5_ref[...], preferred_element_type=jnp.float32) + b5_ref[...]
    o_ref[...] = out.astype(o_ref.dtype)


def init_params(key, input_dim=INPUT_DIM, output_dim=OUTPUT_DIM, hidden=HIDDEN):
    """Deterministic synthetic parameters.

    Linear weights are (in, out) (pre-transposed vs. PyTorch's (out, in)).
    BatchNorm1d params: gamma, beta, running_mean, running_var.
    """
    dims = (input_dim,) + tuple(hidden) + (output_dim,)
    params = {}
    keys = jax.random.split(key, 32)
    ki = 0
    for layer in range(5):
        fan_in, fan_out = dims[layer], dims[layer + 1]
        bound = 1.0 / jnp.sqrt(fan_in)
        params[f"w{layer+1}"] = jax.random.uniform(
            keys[ki], (fan_in, fan_out), jnp.float32, -bound, bound); ki += 1
        params[f"b{layer+1}"] = jax.random.uniform(
            keys[ki], (1, fan_out), jnp.float32, -bound, bound); ki += 1
        if layer < 4:  # BatchNorm1d after the first four Linear+ReLU
            params[f"gamma{layer+1}"] = 1.0 + 0.1 * jax.random.normal(
                keys[ki], (1, fan_out), jnp.float32); ki += 1
            params[f"beta{layer+1}"] = 0.1 * jax.random.normal(
                keys[ki], (1, fan_out), jnp.float32); ki += 1
            params[f"mean{layer+1}"] = 0.1 * jax.random.normal(
                keys[ki], (1, fan_out), jnp.float32); ki += 1
            params[f"var{layer+1}"] = jnp.abs(
                1.0 + 0.1 * jax.random.normal(keys[ki], (1, fan_out), jnp.float32)); ki += 1
    return params


def _fold_bn(params, i):
    """Eval-mode BatchNorm1d as per-feature scale/shift."""
    inv = params[f"gamma{i}"] * jax.lax.rsqrt(params[f"var{i}"] + BN_EPS)
    scale = inv
    shift = params[f"beta{i}"] - params[f"mean{i}"] * inv
    return scale, shift


def _fold_params(params, compute_dtype):
    """Fold each BN's scale/shift into the NEXT Linear's weights & bias.

    relu(xW_i+b_i)*s_i + t_i followed by W_{i+1} is equivalent to applying
    W_{i+1}' = diag(s_i) @ W_{i+1} and b_{i+1}' = t_i @ W_{i+1} + b_{i+1}.
    Also zero-pads the final layer to OUT_PAD lanes for unmasked stores.
    """
    w = [params[f"w{i}"] for i in range(1, 6)]
    b = [params[f"b{i}"] for i in range(1, 6)]
    for i in range(1, 5):
        s, t = _fold_bn(params, i)             # shapes (1, n_i)
        b[i] = t @ w[i] + b[i]                 # uses the un-scaled W_{i+1}
        w[i] = s.reshape(-1, 1) * w[i]         # diag(s_i) @ W_{i+1}
    w5 = jnp.zeros((w[4].shape[0], OUT_PAD), jnp.float32).at[:, :OUTPUT_DIM].set(w[4])
    b5 = jnp.zeros((1, OUT_PAD), jnp.float32).at[:, :OUTPUT_DIM].set(b[4])
    w[4], b[4] = w5, b5
    w = [wi.astype(compute_dtype) for wi in w]
    b = [bi.astype(jnp.float32) for bi in b]   # biases stay f32 (added to f32 acc)
    return w, b


@functools.partial(jax.jit, static_argnames=("block_b", "use_bf16"))
def flamelet_mlp(x, params, block_b=256, use_bf16=False):
    B, F = x.shape
    compute_dtype = jnp.bfloat16 if use_bf16 else jnp.float32

    w, b = _fold_params(params, compute_dtype)

    # Pad batch to a multiple of block_b (padded rows discarded after the call).
    B_pad = pl.cdiv(B, block_b) * block_b
    x_p = x.astype(compute_dtype)
    if B_pad != B:
        x_p = jnp.pad(x_p, ((0, B_pad - B), (0, 0)))

    operands = (x_p, w[0], b[0], w[1], b[1], w[2], b[2], w[3], b[3], w[4], b[4])

    # Weights/biases are replicated across the batch grid (constant block 0).
    def rep_spec(shape):
        n = len(shape)
        return pl.BlockSpec(shape, lambda i, n=n: (0,) * n)

    in_specs = [pl.BlockSpec((block_b, F), lambda i: (i, 0))]
    in_specs += [rep_spec(op.shape) for op in operands[1:]]

    out = pl.pallas_call(
        _mlp_kernel,
        out_shape=jax.ShapeDtypeStruct((B_pad, OUT_PAD), jnp.float32),
        grid=(B_pad // block_b,),
        in_specs=in_specs,
        out_specs=pl.BlockSpec((block_b, OUT_PAD), lambda i: (i, 0)),
        compiler_params=pltpu.CompilerParams(
            dimension_semantics=("parallel",)),
    )(*operands)

    return out[:B, :OUTPUT_DIM]


def flamelet_mlp_ref(x, params):
    """Pure-JAX reference (unfolded eval-mode semantics) for correctness check."""
    h = x
    for i in range(1, 5):
        h = h @ params[f"w{i}"] + params[f"b{i}"]
        h = jnp.maximum(h, 0.0)
        s, t = _fold_bn(params, i)
        h = h * s + t
    return h @ params["w5"] + params["b5"]


if __name__ == "__main__":
    key = jax.random.PRNGKey(0)
    pkey, xkey = jax.random.split(key)

    params = init_params(pkey)
    batch = 500  # deliberately not a multiple of block_b to exercise padding
    x = jax.random.normal(xkey, (batch, INPUT_DIM), jnp.float32)

    out = flamelet_mlp(x, params)          # block_b=256 default -> grid=(2,)
    out = jax.block_until_ready(out)

    ref = flamelet_mlp_ref(x, params)
    assert out.shape == (batch, OUTPUT_DIM)
    assert jnp.allclose(out, ref, atol=1e-3, rtol=1e-3), "mismatch vs reference"

    print("KERNEL_OK")
</pallas_src>

<mosaic_0001>
module attributes {stable_mosaic.version = 11 : i64} {
  func.func @_mlp_kernel(%arg0: i32, %arg1: memref<256x4xf32, #tpu.memory_space<vmem>>, %arg2: memref<4x512xf32, #tpu.memory_space<vmem>>, %arg3: memref<1x512xf32, #tpu.memory_space<vmem>>, %arg4: memref<512x512xf32, #tpu.memory_space<vmem>>, %arg5: memref<1x512xf32, #tpu.memory_space<vmem>>, %arg6: memref<512x256xf32, #tpu.memory_space<vmem>>, %arg7: memref<1x256xf32, #tpu.memory_space<vmem>>, %arg8: memref<256x128xf32, #tpu.memory_space<vmem>>, %arg9: memref<1x128xf32, #tpu.memory_space<vmem>>, %arg10: memref<128x128xf32, #tpu.memory_space<vmem>>, %arg11: memref<1x128xf32, #tpu.memory_space<vmem>>, %arg12: memref<256x128xf32, #tpu.memory_space<vmem>>) attributes {dimension_semantics = [#tpu.dimension_semantics<parallel>], iteration_bounds = array<i64: 2>, scalar_prefetch = 0 : i64, scratch_operands = 0 : i64, tpu.core_type = #tpu.core_type<tc>, window_params = [{transform_indices = @transform_0, window_bounds = array<i64: 256, 4>}, {pipeline_mode = #tpu.pipeline_mode<synchronous>, transform_indices = @transform_1, window_bounds = array<i64: 4, 512>}, {pipeline_mode = #tpu.pipeline_mode<synchronous>, transform_indices = @transform_2, window_bounds = array<i64: 1, 512>}, {pipeline_mode = #tpu.pipeline_mode<synchronous>, transform_indices = @transform_3, window_bounds = array<i64: 512, 512>}, {pipeline_mode = #tpu.pipeline_mode<synchronous>, transform_indices = @transform_4, window_bounds = array<i64: 1, 512>}, {pipeline_mode = #tpu.pipeline_mode<synchronous>, transform_indices = @transform_5, window_bounds = array<i64: 512, 256>}, {pipeline_mode = #tpu.pipeline_mode<synchronous>, transform_indices = @transform_6, window_bounds = array<i64: 1, 256>}, {pipeline_mode = #tpu.pipeline_mode<synchronous>, transform_indices = @transform_7, window_bounds = array<i64: 256, 128>}, {pipeline_mode = #tpu.pipeline_mode<synchronous>, transform_indices = @transform_8, window_bounds = array<i64: 1, 128>}, {pipeline_mode = #tpu.pipeline_mode<synchronous>, transform_indices = @transform_9, window_bounds = array<i64: 128, 128>}, {pipeline_mode = #tpu.pipeline_mode<synchronous>, transform_indices = @transform_10, window_bounds = array<i64: 1, 128>}, {transform_indices = @transform_11, window_bounds = array<i64: 256, 128>}]} {
    %c0 = arith.constant 0 : index
    %c0_0 = arith.constant 0 : index
    %0 = vector.load %arg1[%c0, %c0_0] : memref<256x4xf32, #tpu.memory_space<vmem>>, vector<256x4xf32>
    %c0_1 = arith.constant 0 : index
    %c0_2 = arith.constant 0 : index
    %1 = vector.load %arg2[%c0_1, %c0_2] : memref<4x512xf32, #tpu.memory_space<vmem>>, vector<4x512xf32>
    %cst = arith.constant dense<0.000000e+00> : vector<256x512xf32>
    %2 = tpu.matmul %0, %1, %cst {dimension_numbers = #tpu.dot_dimension_numbers<[1], [0], [0], [1], [0, 0, 1, 1], [], []>} : vector<256x4xf32>, vector<4x512xf32>, vector<256x512xf32> -> vector<256x512xf32>
    %c0_3 = arith.constant 0 : index
    %c0_4 = arith.constant 0 : index
    %3 = vector.load %arg3[%c0_3, %c0_4] : memref<1x512xf32, #tpu.memory_space<vmem>>, vector<1x512xf32>
    %4 = vector.broadcast %3 : vector<1x512xf32> to vector<256x512xf32>
    %5 = arith.addf %2, %4 : vector<256x512xf32>
    %cst_5 = arith.constant 0.000000e+00 : f32
    %6 = vector.broadcast %cst_5 : f32 to vector<256x512xf32>
    %7 = arith.maximumf %5, %6 : vector<256x512xf32>
    %c0_6 = arith.constant 0 : index
    %c0_7 = arith.constant 0 : index
    %8 = vector.load %arg4[%c0_6, %c0_7] : memref<512x512xf32, #tpu.memory_space<vmem>>, vector<512x512xf32>
    %cst_8 = arith.constant dense<0.000000e+00> : vector<256x512xf32>
    %9 = tpu.matmul %7, %8, %cst_8 {dimension_numbers = #tpu.dot_dimension_numbers<[1], [0], [0], [1], [0, 0, 1, 1], [], []>} : vector<256x512xf32>, vector<512x512xf32>, vector<256x512xf32> -> vector<256x512xf32>
    %c0_9 = arith.constant 0 : index
    %c0_10 = arith.constant 0 : index
    %10 = vector.load %arg5[%c0_9, %c0_10] : memref<1x512xf32, #tpu.memory_space<vmem>>, vector<1x512xf32>
    %11 = vector.broadcast %10 : vector<1x512xf32> to vector<256x512xf32>
    %12 = arith.addf %9, %11 : vector<256x512xf32>
    %cst_11 = arith.constant 0.000000e+00 : f32
    %13 = vector.broadcast %cst_11 : f32 to vector<256x512xf32>
    %14 = arith.maximumf %12, %13 : vector<256x512xf32>
    %c0_12 = arith.constant 0 : index
    %c0_13 = arith.constant 0 : index
    %15 = vector.load %arg6[%c0_12, %c0_13] : memref<512x256xf32, #tpu.memory_space<vmem>>, vector<512x256xf32>
    %cst_14 = arith.constant dense<0.000000e+00> : vector<256x256xf32>
    %16 = tpu.matmul %14, %15, %cst_14 {dimension_numbers = #tpu.dot_dimension_numbers<[1], [0], [0], [1], [0, 0, 1, 1], [], []>} : vector<256x512xf32>, vector<512x256xf32>, vector<256x256xf32> -> vector<256x256xf32>
    %c0_15 = arith.constant 0 : index
    %c0_16 = arith.constant 0 : index
    %17 = vector.load %arg7[%c0_15, %c0_16] : memref<1x256xf32, #tpu.memory_space<vmem>>, vector<1x256xf32>
    %18 = vector.broadcast %17 : vector<1x256xf32> to vector<256x256xf32>
    %19 = arith.addf %16, %18 : vector<256x256xf32>
    %cst_17 = arith.constant 0.000000e+00 : f32
    %20 = vector.broadcast %cst_17 : f32 to vector<256x256xf32>
    %21 = arith.maximumf %19, %20 : vector<256x256xf32>
    %c0_18 = arith.constant 0 : index
    %c0_19 = arith.constant 0 : index
    %22 = vector.load %arg8[%c0_18, %c0_19] : memref<256x128xf32, #tpu.memory_space<vmem>>, vector<256x128xf32>
    %cst_20 = arith.constant dense<0.000000e+00> : vector<256x128xf32>
    %23 = tpu.matmul %21, %22, %cst_20 {dimension_numbers = #tpu.dot_dimension_numbers<[1], [0], [0], [1], [0, 0, 1, 1], [], []>} : vector<256x256xf32>, vector<256x128xf32>, vector<256x128xf32> -> vector<256x128xf32>
    %c0_21 = arith.constant 0 : index
    %c0_22 = arith.constant 0 : index
    %24 = vector.load %arg9[%c0_21, %c0_22] : memref<1x128xf32, #tpu.memory_space<vmem>>, vector<1x128xf32>
    %25 = vector.broadcast %24 : vector<1x128xf32> to vector<256x128xf32>
    %26 = arith.addf %23, %25 : vector<256x128xf32>
    %cst_23 = arith.constant 0.000000e+00 : f32
    %27 = vector.broadcast %cst_23 : f32 to vector<256x128xf32>
    %28 = arith.maximumf %26, %27 : vector<256x128xf32>
    %c0_24 = arith.constant 0 : index
    %c0_25 = arith.constant 0 : index
    %29 = vector.load %arg10[%c0_24, %c0_25] : memref<128x128xf32, #tpu.memory_space<vmem>>, vector<128x128xf32>
    %cst_26 = arith.constant dense<0.000000e+00> : vector<256x128xf32>
    %30 = tpu.matmul %28, %29, %cst_26 {dimension_numbers = #tpu.dot_dimension_numbers<[1], [0], [0], [1], [0, 0, 1, 1], [], []>} : vector<256x128xf32>, vector<128x128xf32>, vector<256x128xf32> -> vector<256x128xf32>
    %c0_27 = arith.constant 0 : index
    %c0_28 = arith.constant 0 : index
    %31 = vector.load %arg11[%c0_27, %c0_28] : memref<1x128xf32, #tpu.memory_space<vmem>>, vector<1x128xf32>
    %32 = vector.broadcast %31 : vector<1x128xf32> to vector<256x128xf32>
    %33 = arith.addf %30, %32 : vector<256x128xf32>
    %c0_29 = arith.constant 0 : index
    %c0_30 = arith.constant 0 : index
    %34 = vector.load %arg12[%c0_29, %c0_30] : memref<256x128xf32, #tpu.memory_space<vmem>>, vector<256x128xf32>
    tpu.vector_store %arg12[%c0_29, %c0_30], %33 {strides = array<i32>} : memref<256x128xf32, #tpu.memory_space<vmem>>, vector<256x128xf32>,
    return
  }
  func.func @transform_0(%arg0: i32) -> (i32, i32) {
    %c0_i32 = arith.constant 0 : i32
    %c0_i32_0 = arith.constant 0 : i32
    return %arg0, %c0_i32 : i32, i32
  }
  func.func @transform_1(%arg0: i32) -> (i32, i32) {
    %c0_i32 = arith.constant 0 : i32
    %c0_i32_0 = arith.constant 0 : i32
    %c0_i32_1 = arith.constant 0 : i32
    return %c0_i32, %c0_i32_0 : i32, i32
  }
  func.func @transform_2(%arg0: i32) -> (i32, i32) {
    %c0_i32 = arith.constant 0 : i32
    %c0_i32_0 = arith.constant 0 : i32
    %c0_i32_1 = arith.constant 0 : i32
    return %c0_i32, %c0_i32_0 : i32, i32
  }
  func.func @transform_3(%arg0: i32) -> (i32, i32) {
    %c0_i32 = arith.constant 0 : i32
    %c0_i32_0 = arith.constant 0 : i32
    %c0_i32_1 = arith.constant 0 : i32
    return %c0_i32, %c0_i32_0 : i32, i32
  }
  func.func @transform_4(%arg0: i32) -> (i32, i32) {
    %c0_i32 = arith.constant 0 : i32
    %c0_i32_0 = arith.constant 0 : i32
    %c0_i32_1 = arith.constant 0 : i32
    return %c0_i32, %c0_i32_0 : i32, i32
  }
  func.func @transform_5(%arg0: i32) -> (i32, i32) {
    %c0_i32 = arith.constant 0 : i32
    %c0_i32_0 = arith.constant 0 : i32
    %c0_i32_1 = arith.constant 0 : i32
    return %c0_i32, %c0_i32_0 : i32, i32
  }
  func.func @transform_6(%arg0: i32) -> (i32, i32) {
    %c0_i32 = arith.constant 0 : i32
    %c0_i32_0 = arith.constant 0 : i32
    %c0_i32_1 = arith.constant 0 : i32
    return %c0_i32, %c0_i32_0 : i32, i32
  }
  func.func @transform_7(%arg0: i32) -> (i32, i32) {
    %c0_i32 = arith.constant 0 : i32
    %c0_i32_0 = arith.constant 0 : i32
    %c0_i32_1 = arith.constant 0 : i32
    return %c0_i32, %c0_i32_0 : i32, i32
  }
  func.func @transform_8(%arg0: i32) -> (i32, i32) {
    %c0_i32 = arith.constant 0 : i32
    %c0_i32_0 = arith.constant 0 : i32
    %c0_i32_1 = arith.constant 0 : i32
    return %c0_i32, %c0_i32_0 : i32, i32
  }
  func.func @transform_9(%arg0: i32) -> (i32, i32) {
    %c0_i32 = arith.constant 0 : i32
    %c0_i32_0 = arith.constant 0 : i32
    %c0_i32_1 = arith.constant 0 : i32
    return %c0_i32, %c0_i32_0 : i32, i32
  }
  func.func @transform_10(%arg0: i32) -> (i32, i32) {
    %c0_i32 = arith.constant 0 : i32
    %c0_i32_0 = arith.constant 0 : i32
    %c0_i32_1 = arith.constant 0 : i32
    return %c0_i32, %c0_i32_0 : i32, i32
  }
  func.func @transform_11(%arg0: i32) -> (i32, i32) {
    %c0_i32 = arith.constant 0 : i32
    %c0_i32_0 = arith.constant 0 : i32
    return %arg0, %c0_i32 : i32, i32
  }
}

</mosaic_0001>

<llo_original>
// kernel: flamelet_mlp.1
$region0: #{flamelet_mlp.1}
  #allocation0 [shape = 'u32[]', space=smem, size = 0x4, offset = 0x4, fixed_abs, tag = 'smem constant byte address 0x4 - core index']
  #allocation1 [shape = 'u32[144,128]{1,0:T(1,128)}', space=vmem, size = 0x12000, scoped, tag = 'internal scratch']
  %s0 = inlined_call_operand.vmem [shape: f32[512,4], index: 0, kind: input, shape index: {}]
  %s1 = inlined_call_operand.vmem [shape: f32[4,512], index: 1, kind: input, shape index: {}]
  %s2 = inlined_call_operand.vmem [shape: f32[1,512], index: 2, kind: input, shape index: {}]
  %s3 = inlined_call_operand.vmem [shape: f32[512,512], index: 3, kind: input, shape index: {}]
  %s4 = inlined_call_operand.vmem [shape: f32[1,512], index: 4, kind: input, shape index: {}]
  %s5 = inlined_call_operand.vmem [shape: f32[512,256], index: 5, kind: input, shape index: {}]
  %s6 = inlined_call_operand.vmem [shape: f32[1,256], index: 6, kind: input, shape index: {}]
  %s7 = inlined_call_operand.vmem [shape: f32[256,128], index: 7, kind: input, shape index: {}]
  %s8 = inlined_call_operand.vmem [shape: f32[1,128], index: 8, kind: input, shape index: {}]
  %s9 = inlined_call_operand.vmem [shape: f32[128,128], index: 9, kind: input, shape index: {}]
  %s10 = inlined_call_operand.vmem [shape: f32[1,128], index: 10, kind: input, shape index: {}]
  %s11 = inlined_call_operand.vmem [shape: f32[512,128], index: 11, kind: output, shape index: {}]
  %s12 = sld [smem:[#allocation0]]
  $region77: #{flamelet_mlp.1} parent=0
    _
  %s14 = ssub.s32 1, %s12
  %s15 = scalar_select 0, %s14, %s12
  loop: start=0, step=1, limit=4
  $region2: #{flamelet_mlp.1} parent=0 // loop_pre_header
    _
  $region3: #{flamelet_mlp.1} parent=0 // loop_header
    %s17 = sphi 0, %s21
    %p18 = scmp.ge.s32.totalorder %s17, 4
    %s27 = sphi 0, %s29
    %s30 = sphi 0, %s27
    %s31 = sphi 0, %s30
    %s47 = sphi 0, %s31
    %s51 = sphi 0, %s51
    %s53 = sphi 0, %s51
    %s54 = sphi 0, %s53
    %s68 = sphi 0, %s54
    %s72 = sphi 0, %s72
    %s74 = sphi 0, %s72
    %s75 = sphi 0, %s74
    %s89 = sphi 0, %s75
    %s93 = sphi 0, %s93
    %s95 = sphi 0, %s93
    %s96 = sphi 0, %s95
    %s110 = sphi 0, %s96
    %s114 = sphi 0, %s114
    %s116 = sphi 0, %s114
    %s117 = sphi 0, %s116
    %s131 = sphi 0, %s117
    %s135 = sphi 0, %s135
    %s137 = sphi 0, %s135
    %s138 = sphi 0, %s137
    %s152 = sphi 0, %s138
    %s156 = sphi 0, %s156
    %s158 = sphi 0, %s156
    %s159 = sphi 0, %s158
    %s173 = sphi 0, %s159
    %s177 = sphi 0, %s177
    %s179 = sphi 0, %s177
    %s180 = sphi 0, %s179
    %s194 = sphi 0, %s180
    %s198 = sphi 0, %s198
    %s200 = sphi 0, %s198
    %s201 = sphi 0, %s200
    %s215 = sphi 0, %s201
    %s219 = sphi 0, %s219
    %s221 = sphi 0, %s219
    %s222 = sphi 0, %s221
    %s236 = sphi 0, %s222
    %s240 = sphi 0, %s240
    %s242 = sphi 0, %s240
    %s243 = sphi 0, %s242
    %s257 = sphi 0, %s243
    %s263 = sphi 0, %s265
    %s266 = sphi 0, %s263
    %s267 = sphi 0, %s266
    %s283 = sphi 0, %s267
  $region4: #{flamelet_mlp.1} parent=0 // loop_header_branch
    %20 = sbr.rel (%p18) target = $region8
  $region5: #{flamelet_mlp.1} parent=0 // loop_body
    %s22 = ssub.s32 %s17, 1
    %s23 = ssub.s32 %s17, 2
    %s24 = sadd.s32 %s17, 1
    %s25 = ssub.s32 %s17, %s24
    %p26 = scmp.eq.s32.totalorder %s25, 0
    %s28 = sadd.s32 %s27, 1
    %s29 = scalar_select %p26, %s27, %s28
    %p32 = pneg %p26
    %p33 = scmp.eq.s32.totalorder %s17, 1
    %p34 = por %p32, %p33
    %p35 = scmp.ne.s32.totalorder %s27, %s30
    %p36 = scmp.eq.s32.totalorder %s17, 0
    %p37 = por %p35, %p36
    %p38 = scmp.ne.s32.totalorder %s27, %s30
    %p39 = scmp.eq.s32.totalorder %s22, 1
    %p40 = por %p38, %p39
    %p41 = scmp.ne.s32.totalorder %s30, %s31
    %p42 = scmp.eq.s32.totalorder %s22, 0
    %p43 = por %p41, %p42
    %p44 = scmp.ne.s32.totalorder %s30, %s31
    %p45 = scmp.eq.s32.totalorder %s23, 1
    %p46 = por %p44, %p45
    %p48 = scmp.ne.s32.totalorder %s31, %s47
    %p49 = scmp.eq.s32.totalorder %s23, 0
    %p50 = por %p48, %p49
    %s52 = sadd.s32 %s51, 1
    %p55 = scmp.eq.s32.totalorder %s17, 1
    %p56 = scmp.ne.s32.totalorder %s51, %s53
    %p57 = scmp.eq.s32.totalorder %s17, 0
    %p58 = por %p56, %p57
    %p59 = scmp.ne.s32.totalorder %s51, %s53
    %p60 = scmp.eq.s32.totalorder %s22, 1
    %p61 = por %p59, %p60
    %p62 = scmp.ne.s32.totalorder %s53, %s54
    %p63 = scmp.eq.s32.totalorder %s22, 0
    %p64 = por %p62, %p63
    %p65 = scmp.ne.s32.totalorder %s53, %s54
    %p66 = scmp.eq.s32.totalorder %s23, 1
    %p67 = por %p65, %p66
    %p69 = scmp.ne.s32.totalorder %s54, %s68
    %p70 = scmp.eq.s32.totalorder %s23, 0
    %p71 = por %p69, %p70
    %s73 = sadd.s32 %s72, 1
    %p76 = scmp.eq.s32.totalorder %s17, 1
    %p77 = scmp.ne.s32.totalorder %s72, %s74
    %p78 = scmp.eq.s32.totalorder %s17, 0
    %p79 = por %p77, %p78
    %p80 = scmp.ne.s32.totalorder %s72, %s74
    %p81 = scmp.eq.s32.totalorder %s22, 1
    %p82 = por %p80, %p81
    %p83 = scmp.ne.s32.totalorder %s74, %s75
    %p84 = scmp.eq.s32.totalorder %s22, 0
    %p85 = por %p83, %p84
    %p86 = scmp.ne.s32.totalorder %s74, %s75
    %p87 = scmp.eq.s32.totalorder %s23, 1
    %p88 = por %p86, %p87
    %p90 = scmp.ne.s32.totalorder %s75, %s89
    %p91 = scmp.eq.s32.totalorder %s23, 0
    %p92 = por %p90, %p91
    %s94 = sadd.s32 %s93, 1
    %p97 = scmp.eq.s32.totalorder %s17, 1
    %p98 = scmp.ne.s32.totalorder %s93, %s95
    %p99 = scmp.eq.s32.totalorder %s17, 0
    %p100 = por %p98, %p99
    %p101 = scmp.ne.s32.totalorder %s93, %s95
    %p102 = scmp.eq.s32.totalorder %s22, 1
    %p103 = por %p101, %p102
    %p104 = scmp.ne.s32.totalorder %s95, %s96
    %p105 = scmp.eq.s32.totalorder %s22, 0
    %p106 = por %p104, %p105
    %p107 = scmp.ne.s32.totalorder %s95, %s96
    %p108 = scmp.eq.s32.totalorder %s23, 1
    %p109 = por %p107, %p108
    %p111 = scmp.ne.s32.totalorder %s96, %s110
    %p112 = scmp.eq.s32.totalorder %s23, 0
    %p113 = por %p111, %p112
    %s115 = sadd.s32 %s114, 1
    %p118 = scmp.eq.s32.totalorder %s17, 1
    %p119 = scmp.ne.s32.totalorder %s114, %s116
    %p120 = scmp.eq.s32.totalorder %s17, 0
    %p121 = por %p119, %p120
    %p122 = scmp.ne.s32.totalorder %s114, %s116
    %p123 = scmp.eq.s32.totalorder %s22, 1
    %p124 = por %p122, %p123
    %p125 = scmp.ne.s32.totalorder %s116, %s117
    %p126 = scmp.eq.s32.totalorder %s22, 0
    %p127 = por %p125, %p126
    %p128 = scmp.ne.s32.totalorder %s116, %s117
    %p129 = scmp.eq.s32.totalorder %s23, 1
    %p130 = por %p128, %p129
    %p132 = scmp.ne.s32.totalorder %s117, %s131
    %p133 = scmp.eq.s32.totalorder %s23, 0
    %p134 = por %p132, %p133
    %s136 = sadd.s32 %s135, 1
    %p139 = scmp.eq.s32.totalorder %s17, 1
    %p140 = scmp.ne.s32.totalorder %s135, %s137
    %p141 = scmp.eq.s32.totalorder %s17, 0
    %p142 = por %p140, %p141
    %p143 = scmp.ne.s32.totalorder %s135, %s137
    %p144 = scmp.eq.s32.totalorder %s22, 1
    %p145 = por %p143, %p144
    %p146 = scmp.ne.s32.totalorder %s137, %s138
    %p147 = scmp.eq.s32.totalorder %s22, 0
    %p148 = por %p146, %p147
    %p149 = scmp.ne.s32.totalorder %s137, %s138
    %p150 = scmp.eq.s32.totalorder %s23, 1
    %p151 = por %p149, %p150
    %p153 = scmp.ne.s32.totalorder %s138, %s152
    %p154 = scmp.eq.s32.totalorder %s23, 0
    %p155 = por %p153, %p154
    %s157 = sadd.s32 %s156, 1
    %p160 = scmp.eq.s32.totalorder %s17, 1
    %p161 = scmp.ne.s32.totalorder %s156, %s158
    %p162 = scmp.eq.s32.totalorder %s17, 0
    %p163 = por %p161, %p162
    %p164 = scmp.ne.s32.totalorder %s156, %s158
    %p165 = scmp.eq.s32.totalorder %s22, 1
    %p166 = por %p164, %p165
    %p167 = scmp.ne.s32.totalorder %s158, %s159
    %p168 = scmp.eq.s32.totalorder %s22, 0
    %p169 = por %p167, %p168
    %p170 = scmp.ne.s32.totalorder %s158, %s159
    %p171 = scmp.eq.s32.totalorder %s23, 1
    %p172 = por %p170, %p171
    %p174 = scmp.ne.s32.totalorder %s159, %s173
    %p175 = scmp.eq.s32.totalorder %s23, 0
    %p176 = por %p174, %p175
    %s178 = sadd.s32 %s177, 1
    %p181 = scmp.eq.s32.totalorder %s17, 1
    %p182 = scmp.ne.s32.totalorder %s177, %s179
    %p183 = scmp.eq.s32.totalorder %s17, 0
    %p184 = por %p182, %p183
    %p185 = scmp.ne.s32.totalorder %s177, %s179
    %p186 = scmp.eq.s32.totalorder %s22, 1
    %p187 = por %p185, %p186
    %p188 = scmp.ne.s32.totalorder %s179, %s180
    %p189 = scmp.eq.s32.totalorder %s22, 0
    %p190 = por %p188, %p189
    %p191 = scmp.ne.s32.totalorder %s179, %s180
    %p192 = scmp.eq.s32.totalorder %s23, 1
    %p193 = por %p191, %p192
    %p195 = scmp.ne.s32.totalorder %s180, %s194
    %p196 = scmp.eq.s32.totalorder %s23, 0
    %p197 = por %p195, %p196
    %s199 = sadd.s32 %s198, 1
    %p202 = scmp.eq.s32.totalorder %s17, 1
    %p203 = scmp.ne.s32.totalorder %s198, %s200
    %p204 = scmp.eq.s32.totalorder %s17, 0
    %p205 = por %p203, %p204
    %p206 = scmp.ne.s32.totalorder %s198, %s200
    %p207 = scmp.eq.s32.totalorder %s22, 1
    %p208 = por %p206, %p207
    %p209 = scmp.ne.s32.totalorder %s200, %s201
    %p210 = scmp.eq.s32.totalorder %s22, 0
    %p211 = por %p209, %p210
    %p212 = scmp.ne.s32.totalorder %s200, %s201
    %p213 = scmp.eq.s32.totalorder %s23, 1
    %p214 = por %p212, %p213
    %p216 = scmp.ne.s32.totalorder %s201, %s215
    %p217 = scmp.eq.s32.totalorder %s23, 0
    %p218 = por %p216, %p217
    %s220 = sadd.s32 %s219, 1
    %p223 = scmp.eq.s32.totalorder %s17, 1
    %p224 = scmp.ne.s32.totalorder %s219, %s221
    %p225 = scmp.eq.s32.totalorder %s17, 0
    %p226 = por %p224, %p225
    %p227 = scmp.ne.s32.totalorder %s219, %s221
    %p228 = scmp.eq.s32.totalorder %s22, 1
    %p229 = por %p227, %p228
    %p230 = scmp.ne.s32.totalorder %s221, %s222
    %p231 = scmp.eq.s32.totalorder %s22, 0
    %p232 = por %p230, %p231
    %p233 = scmp.ne.s32.totalorder %s221, %s222
    %p234 = scmp.eq.s32.totalorder %s23, 1
    %p235 = por %p233, %p234
    %p237 = scmp.ne.s32.totalorder %s222, %s236
    %p238 = scmp.eq.s32.totalorder %s23, 0
    %p239 = por %p237, %p238
    %s241 = sadd.s32 %s240, 1
    %p244 = scmp.eq.s32.totalorder %s17, 1
    %p245 = scmp.ne.s32.totalorder %s240, %s242
    %p246 = scmp.eq.s32.totalorder %s17, 0
    %p247 = por %p245, %p246
    %p248 = scmp.ne.s32.totalorder %s240, %s242
    %p249 = scmp.eq.s32.totalorder %s22, 1
    %p250 = por %p248, %p249
    %p251 = scmp.ne.s32.totalorder %s242, %s243
    %p252 = scmp.eq.s32.totalorder %s22, 0
    %p253 = por %p251, %p252
    %p254 = scmp.ne.s32.totalorder %s242, %s243
    %p255 = scmp.eq.s32.totalorder %s23, 1
    %p256 = por %p254, %p255
    %p258 = scmp.ne.s32.totalorder %s243, %s257
    %p259 = scmp.eq.s32.totalorder %s23, 0
    %p260 = por %p258, %p259
    %s261 = ssub.s32 %s17, %s24
    %p262 = scmp.eq.s32.totalorder %s261, 0
    %s264 = sadd.s32 %s263, 1
    %s265 = scalar_select %p262, %s263, %s264
    %p268 = pneg %p262
    %p269 = scmp.eq.s32.totalorder %s17, 1
    %p270 = por %p268, %p269
    %p271 = scmp.ne.s32.totalorder %s263, %s266
    %p272 = scmp.eq.s32.totalorder %s17, 0
    %p273 = por %p271, %p272
    %p274 = scmp.ne.s32.totalorder %s263, %s266
    %p275 = scmp.eq.s32.totalorder %s22, 1
    %p276 = por %p274, %p275
    %p277 = scmp.ne.s32.totalorder %s266, %s267
    %p278 = scmp.eq.s32.totalorder %s22, 0
    %p279 = por %p277, %p278
    %p280 = scmp.ne.s32.totalorder %s266, %s267
    %p281 = scmp.eq.s32.totalorder %s23, 1
    %p282 = por %p280, %p281
    %p284 = scmp.ne.s32.totalorder %s267, %s283
    %p285 = scmp.eq.s32.totalorder %s23, 0
    %p286 = por %p284, %p285
    %p287 = scmp.le.s32.totalorder 1, %s17
    %p288 = scmp.lt.s32.totalorder %s17, 3
    %p289 = pnand %p287, %p288
    %p290 = pneg %p289
    // Predicated region
    $region9: #{flamelet_mlp.1} parent=5 // pred_check
      _
    $region10: #{flamelet_mlp.1} parent=5 // pred_check_branch
      %292 = sbr.rel (%p289) target = $region12
    $region11: #{flamelet_mlp.1} parent=5 // pred_region
      %s293 = ssub.s32 %s17, 1
      // Predicated region
      $region13: #{flamelet_mlp.1} parent=11 // pred_check
        %p294 = pneg %p64
      $region14: #{flamelet_mlp.1} parent=11 // pred_check_branch
        %296 = sbr.rel (%p294) target = $region16
      $region15: #{flamelet_mlp.1} parent=11 // pred_region
        _
      $region16: #{flamelet_mlp.1} parent=11 // pred_fallthru
        _
      // Predicated region
      $region17: #{flamelet_mlp.1} parent=11 // pred_check
        %p297 = pneg %p85
      $region18: #{flamelet_mlp.1} parent=11 // pred_check_branch
        %299 = sbr.rel (%p297) target = $region20
      $region19: #{flamelet_mlp.1} parent=11 // pred_region
        _
      $region20: #{flamelet_mlp.1} parent=11 // pred_fallthru
        _
      // Predicated region
      $region21: #{flamelet_mlp.1} parent=11 // pred_check
        %p300 = pneg %p106
      $region22: #{flamelet_mlp.1} parent=11 // pred_check_branch
        %302 = sbr.rel (%p300) target = $region24
      $region23: #{flamelet_mlp.1} parent=11 // pred_region
        _
      $region24: #{flamelet_mlp.1} parent=11 // pred_fallthru
        _
      // Predicated region
      $region25: #{flamelet_mlp.1} parent=11 // pred_check
        %p303 = pneg %p127
      $region26: #{flamelet_mlp.1} parent=11 // pred_check_branch
        %305 = sbr.rel (%p303) target = $region28
      $region27: #{flamelet_mlp.1} parent=11 // pred_region
        _
      $region28: #{flamelet_mlp.1} parent=11 // pred_fallthru
        _
      // Predicated region
      $region29: #{flamelet_mlp.1} parent=11 // pred_check
        %p306 = pneg %p148
      $region30: #{flamelet_mlp.1} parent=11 // pred_check_branch
        %308 = sbr.rel (%p306) target = $region32
      $region31: #{flamelet_mlp.1} parent=11 // pred_region
        _
      $region32: #{flamelet_mlp.1} parent=11 // pred_fallthru
        _
      // Predicated region
      $region33: #{flamelet_mlp.1} parent=11 // pred_check
        %p309 = pneg %p169
      $region34: #{flamelet_mlp.1} parent=11 // pred_check_branch
        %311 = sbr.rel (%p309) target = $region36
      $region35: #{flamelet_mlp.1} parent=11 // pred_region
        _
      $region36: #{flamelet_mlp.1} parent=11 // pred_fallthru
        _
      // Predicated region
      $region37: #{flamelet_mlp.1} parent=11 // pred_check
        %p312 = pneg %p190
      $region38: #{flamelet_mlp.1} parent=11 // pred_check_branch
        %314 = sbr.rel (%p312) target = $region40
      $region39: #{flamelet_mlp.1} parent=11 // pred_region
        _
      $region40: #{flamelet_mlp.1} parent=11 // pred_fallthru
        _
      // Predicated region
      $region41: #{flamelet_mlp.1} parent=11 // pred_check
        %p315 = pneg %p211
      $region42: #{flamelet_mlp.1} parent=11 // pred_check_branch
        %317 = sbr.rel (%p315) target = $region44
      $region43: #{flamelet_mlp.1} parent=11 // pred_region
        _
      $region44: #{flamelet_mlp.1} parent=11 // pred_fallthru
        _
      // Predicated region
      $region45: #{flamelet_mlp.1} parent=11 // pred_check
        %p318 = pneg %p232
      $region46: #{flamelet_mlp.1} parent=11 // pred_check_branch
        %320 = sbr.rel (%p318) target = $region48
      $region47: #{flamelet_mlp.1} parent=11 // pred_region
        _
      $region48: #{flamelet_mlp.1} parent=11 // pred_fallthru
        _
      // Predicated region
      $region49: #{flamelet_mlp.1} parent=11 // pred_check
        %p321 = pneg %p253
      $region50: #{flamelet_mlp.1} parent=11 // pred_check_branch
        %323 = sbr.rel (%p321) target = $region52
      $region51: #{flamelet_mlp.1} parent=11 // pred_region
        _
      $region52: #{flamelet_mlp.1} parent=11 // pred_fallthru
        _
    $region12: #{flamelet_mlp.1} parent=5 // pred_fallthru
      _
    %p324 = scmp.lt.s32.totalorder %s17, 2
    // Predicated region
    $region53: #{flamelet_mlp.1} parent=5 // pred_check
      %p325 = pneg %p324
    $region54: #{flamelet_mlp.1} parent=5 // pred_check_branch
      %327 = sbr.rel (%p325) target = $region56
    $region55: #{flamelet_mlp.1} parent=5 // pred_region
      // Predicated region
      $region57: #{flamelet_mlp.1} parent=55 // pred_check
        %p328 = pneg %p37
      $region58: #{flamelet_mlp.1} parent=55 // pred_check_branch
        %330 = sbr.rel (%p328) target = $region60
      $region59: #{flamelet_mlp.1} parent=55 // pred_region
        %s331 = smul.u32 32, %s17
        %p332 = scmp.lt.s32.totalorder %s331, 63
        %s333 = scalar_select %p332, %s331, 63
        %s334 = smul.addr %s333, 8
        %s335 = scalar_lea.vmem %s0, %s334
        %s336 = smul.u32 32, %s17
      $region60: #{flamelet_mlp.1} parent=55 // pred_fallthru
        _
    $region56: #{flamelet_mlp.1} parent=5 // pred_fallthru
      _
    %p337 = scmp.le.s32.totalorder 1, %s17
    %p338 = scmp.lt.s32.totalorder %s17, 3
    %p339 = pnand %p337, %p338
    %p340 = pneg %p339
    // Predicated region
    $region61: #{flamelet_mlp.1} parent=5 // pred_check
      _
    $region62: #{flamelet_mlp.1} parent=5 // pred_check_branch
      %342 = sbr.rel (%p339) target = $region64
    $region63: #{flamelet_mlp.1} parent=5 // pred_region
      %s343 = ssub.s32 %s17, 1
      %s344 = smul.u32 32, %s22
      %p345 = scmp.lt.s32.totalorder %s344, 63
      %s346 = scalar_select %p345, %s344, 63
      %s347 = smul.addr %s346, 8
      %s348 = scalar_lea.vmem %s0, %s347
      %p349 = pneg %p43
      %p350 = pneg %p40
      %p351 = pneg %p64
      %p352 = pneg %p61
      %p353 = pneg %p85
      %p354 = pneg %p82
      %p355 = pneg %p106
      %p356 = pneg %p103
      %p357 = pneg %p127
      %p358 = pneg %p124
      %p359 = pneg %p148
      %p360 = pneg %p145
      %p361 = pneg %p169
      %p362 = pneg %p166
      %p363 = pneg %p190
      %p364 = pneg %p187
      %p365 = pneg %p211
      %p366 = pneg %p208
      %p367 = pneg %p232
      %p368 = pneg %p229
      %p369 = pneg %p253
      %p370 = pneg %p250
      %p371 = pneg %p279
      %p372 = pneg %p276
      %s373 = smul.u32 32, %s22
      %p374 = scmp.lt.s32.totalorder %s373, 63
      %s375 = scalar_select %p374, %s373, 63
      %s376 = smul.addr %s375, 8
      %s377 = scalar_lea.vmem %s11, %s376
      %s378 = smul.u32 32, %s22
      %p379 = scmp.lt.s32.totalorder %s378, 63
      %s380 = scalar_select %p379, %s378, 63
      %s381 = smul.addr %s380, 8
      %s382 = scalar_lea.vmem %s0, %s381
      %s383 = smul.u32 32, %s22
      %s384 = smul.u32 32, %s22
      %p385 = scmp.lt.s32.totalorder %s384, 63
      %s386 = scalar_select %p385, %s384, 63
      %s387 = smul.addr %s386, 8
      %s388 = scalar_lea.vmem %s11, %s387
      %s389 = smul.u32 32, %s22
      %v390 = vld [vmem:[%s382] sm:$0xff]
      %v391 = vld [vmem:[%s382 + $0x8] sm:$0xff]
      %v392 = vld [vmem:[%s382 + $0x10] sm:$0xff]
      %v393 = vld [vmem:[%s382 + $0x18] sm:$0xff]
      %v394 = vld [vmem:[%s382 + $0x20] sm:$0xff]
      %v395 = vld [vmem:[%s382 + $0x28] sm:$0xff]
      %v396 = vld [vmem:[%s382 + $0x30] sm:$0xff]
      %v397 = vld [vmem:[%s382 + $0x38] sm:$0xff]
      %v398 = vld [vmem:[%s382 + $0x40] sm:$0xff]
      %v399 = vld [vmem:[%s382 + $0x48] sm:$0xff]
      %v400 = vld [vmem:[%s382 + $0x50] sm:$0xff]
      %v401 = vld [vmem:[%s382 + $0x58] sm:$0xff]
      %v402 = vld [vmem:[%s382 + $0x60] sm:$0xff]
      %v403 = vld [vmem:[%s382 + $0x68] sm:$0xff]
      %v404 = vld [vmem:[%s382 + $0x70] sm:$0xff]
      %v405 = vld [vmem:[%s382 + $0x78] sm:$0xff]
      %v406 = vld [vmem:[%s382 + $0x80] sm:$0xff]
      %v407 = vld [vmem:[%s382 + $0x88] sm:$0xff]
      %v408 = vld [vmem:[%s382 + $0x90] sm:$0xff]
      %v409 = vld [vmem:[%s382 + $0x98] sm:$0xff]
      %v410 = vld [vmem:[%s382 + $0xa0] sm:$0xff]
      %v411 = vld [vmem:[%s382 + $0xa8] sm:$0xff]
      %v412 = vld [vmem:[%s382 + $0xb0] sm:$0xff]
      %v413 = vld [vmem:[%s382 + $0xb8] sm:$0xff]
      %v414 = vld [vmem:[%s382 + $0xc0] sm:$0xff]
      %v415 = vld [vmem:[%s382 + $0xc8] sm:$0xff]
      %v416 = vld [vmem:[%s382 + $0xd0] sm:$0xff]
      %v417 = vld [vmem:[%s382 + $0xd8] sm:$0xff]
      %v418 = vld [vmem:[%s382 + $0xe0] sm:$0xff]
      %v419 = vld [vmem:[%s382 + $0xe8] sm:$0xff]
      %v420 = vld [vmem:[%s382 + $0xf0] sm:$0xff]
      %v421 = vld [vmem:[%s382 + $0xf8] sm:$0xff]
      %v422 = vld [vmem:[%s1] sm:$0xff]
      %v423 = vld [vmem:[%s1 + $0x8] sm:$0xff]
      %v424 = vld [vmem:[%s2] sm:$0xf]
      %v426 = vlaneseq
      %v427 = vshrl.u32 %v426, 7
      %v428 = vsub.s32 0, %v427
      %v429 = vrot.slane %v424, %v428
      %v430 = vlaneseq
      %v431 = vshrl.u32 %v430, 7
      %v432 = vsub.s32 1, %v431
      %v433 = vrot.slane %v424, %v432
      %v434 = vlaneseq
      %v435 = vshrl.u32 %v434, 7
      %v436 = vsub.s32 2, %v435
      %v437 = vrot.slane %v424, %v436
      %v438 = vlaneseq
      %v439 = vshrl.u32 %v438, 7
      %v440 = vsub.s32 3, %v439
      %v441 = vrot.slane %v424, %v440
      %v448 = vcombine.high %v422, %v422
      %v449 = vcombine.high %v423, %v423
      %vm450 = vcmask 31744
      %v452 = vsel %vm450, %v390, 0
      %v455 = vsel %vm450, %v391, 0
      %v458 = vsel %vm450, %v392, 0
      %v461 = vsel %vm450, %v393, 0
      %v464 = vsel %vm450, %v394, 0
      %v467 = vsel %vm450, %v395, 0
      %v470 = vsel %vm450, %v396, 0
      %v473 = vsel %vm450, %v397, 0
      %v476 = vsel %vm450, %v398, 0
      %v479 = vsel %vm450, %v399, 0
      %v482 = vsel %vm450, %v400, 0
      %v485 = vsel %vm450, %v401, 0
      %v488 = vsel %vm450, %v402, 0
      %v491 = vsel %vm450, %v403, 0
      %v494 = vsel %vm450, %v404, 0
      %v497 = vsel %vm450, %v405, 0
      %v500 = vsel %vm450, %v406, 0
      %v503 = vsel %vm450, %v407, 0
      %v506 = vsel %vm450, %v408, 0
      %v509 = vsel %vm450, %v409, 0
      %v512 = vsel %vm450, %v410, 0
      %v515 = vsel %vm450, %v411, 0
      %v518 = vsel %vm450, %v412, 0
      %v521 = vsel %vm450, %v413, 0
      %v524 = vsel %vm450, %v414, 0
      %v527 = vsel %vm450, %v415, 0
      %v530 = vsel %vm450, %v416, 0
      %v533 = vsel %vm450, %v417, 0
      %v536 = vsel %vm450, %v418, 0
      %v539 = vsel %vm450, %v419, 0
      %v542 = vsel %vm450, %v420, 0
      %v545 = vsel %vm450, %v421, 0
      %vm547 = vcmask 1043456
      %v548 = vsel %vm547, %v422, 0
      %v550 = vsel %vm547, %v448, 0
      %v552 = vsel %vm547, %v423, 0
      %v554 = vsel %vm547, %v449, 0
      %556 = vmatprep.subr.mxu0 %v550
      %557 = vmatpush1.msra.mxu0 %v548
      %558 = vmatprep.subr.mxu0 0.0
      %559 = vmatpush1.msra.mxu0 0.0
      %560 = vmatprep.subr.mxu0 0.0
      %561 = vmatpush1.msra.mxu0 0.0
      %562 = vmatprep.subr.mxu0 0.0
      %563 = vmatpush1.msra.mxu0 0.0
      %564 = vmatprep.subr.mxu0 0.0
      %565 = vmatpush1.msra.mxu0 0.0
      %566 = vmatprep.subr.mxu0 0.0
      %567 = vmatpush1.msra.mxu0 0.0
      %568 = vmatprep.subr.mxu0 0.0
      %569 = vmatpush1.msra.mxu0 0.0
      %570 = vmatprep.subr.mxu0 0.0
      %571 = vmatpush1.msra.mxu0 0.0
      %572 = vmatprep.subr.mxu0 0.0
      %573 = vmatpush1.msra.mxu0 0.0
      %574 = vmatprep.subr.mxu0 0.0
      %575 = vmatpush1.msra.mxu0 0.0
      %576 = vmatprep.subr.mxu0 0.0
      %577 = vmatpush1.msra.mxu0 0.0
      %578 = vmatprep.subr.mxu0 0.0
      %579 = vmatpush1.msra.mxu0 0.0
      %580 = vmatprep.subr.mxu0 0.0
      %581 = vmatpush1.msra.mxu0 0.0
      %582 = vmatprep.subr.mxu0 0.0
      %583 = vmatpush1.msra.mxu0 0.0
      %584 = vmatprep.subr.mxu0 0.0
      %585 = vmatpush1.msra.mxu0 0.0
      %586 = vmatprep.subr.mxu0 0.0
      %587 = vmatpush1.msra.mxu0 0.0
      %588 = vmatprep.subr.mxu0 0.0
      %589 = vmatpush1.msra.mxu0 0.0
      %590 = vmatprep.subr.mxu0 0.0
      %591 = vmatpush1.msra.mxu0 0.0
      %592 = vmatprep.subr.mxu0 0.0
      %593 = vmatpush1.msra.mxu0 0.0
      %594 = vmatprep.subr.mxu0 0.0
      %595 = vmatpush1.msra.mxu0 0.0
      %596 = vmatprep.subr.mxu0 0.0
      %597 = vmatpush1.msra.mxu0 0.0
      %598 = vmatprep.subr.mxu0 0.0
      %599 = vmatpush1.msra.mxu0 0.0
      %600 = vmatprep.subr.mxu0 0.0
      %601 = vmatpush1.msra.mxu0 0.0
      %602 = vmatprep.subr.mxu0 0.0
      %603 = vmatpush1.msra.mxu0 0.0
      %604 = vmatprep.subr.mxu0 0.0
      %605 = vmatpush1.msra.mxu0 0.0
      %606 = vmatprep.subr.mxu0 0.0
      %607 = vmatpush1.msra.mxu0 0.0
      %608 = vmatprep.subr.mxu0 0.0
      %609 = vmatpush1.msra.mxu0 0.0
      %610 = vmatprep.subr.mxu0 0.0
      %611 = vmatpush1.msra.mxu0 0.0
      %612 = vmatprep.subr.mxu0 0.0
      %613 = vmatpush1.msra.mxu0 0.0
      %614 = vmatprep.subr.mxu0 0.0
      %615 = vmatpush1.msra.mxu0 0.0
      %616 = vmatprep.subr.mxu0 0.0
      %617 = vmatpush1.msra.mxu0 0.0
      %618 = vmatprep.subr.mxu0 0.0
      %619 = vmatpush1.msra.mxu0 0.0
      %620 = vmatprep.mubr.f32.mxu0 0.0
      %621 = vmatmul.mubr.f32.gmra.mrb[0].mxu0 %v452
      %v622 = vpop.f32.mrb[0].mxu0
      %v623 = vadd.f32 %v429, %v622
      %v624 = vpop.f32.mrb[0].mxu0
      %v625 = vadd.f32 %v433, %v624
      %626 = vmatprep.mubr.f32.mxu0 0.0
      %627 = vmatmul.mubr.f32.gmra.mrb[0].mxu0 %v455
      %v628 = vpop.f32.mrb[0].mxu0
      %v629 = vadd.f32 %v429, %v628
      %v630 = vpop.f32.mrb[0].mxu0
      %v631 = vadd.f32 %v433, %v630
      %632 = vmatprep.mubr.f32.mxu0 0.0
      %633 = vmatmul.mubr.f32.gmra.mrb[0].mxu0 %v458
      %v634 = vpop.f32.mrb[0].mxu0
      %v635 = vadd.f32 %v429, %v634
      %v636 = vpop.f32.mrb[0].mxu0
      %v637 = vadd.f32 %v433, %v636
      %638 = vmatprep.mubr.f32.mxu0 0.0
      %639 = vmatmul.mubr.f32.gmra.mrb[0].mxu0 %v461
      %v640 = vpop.f32.mrb[0].mxu0
      %v641 = vadd.f32 %v429, %v640
      %v642 = vpop.f32.mrb[0].mxu0
      %v643 = vadd.f32 %v433, %v642
      %644 = vmatprep.mubr.f32.mxu0 0.0
      %645 = vmatmul.mubr.f32.gmra.mrb[0].mxu0 %v464
      %v646 = vpop.f32.mrb[0].mxu0
      %v647 = vadd.f32 %v429, %v646
      %v648 = vpop.f32.mrb[0].mxu0
      %v649 = vadd.f32 %v433, %v648
      %650 = vmatprep.mubr.f32.mxu0 0.0
      %651 = vmatmul.mubr.f32.gmra.mrb[0].mxu0 %v467
      %v652 = vpop.f32.mrb[0].mxu0
      %v653 = vadd.f32 %v429, %v652
      %v654 = vpop.f32.mrb[0].mxu0
      %v655 = vadd.f32 %v433, %v654
      %656 = vmatprep.mubr.f32.mxu0 0.0
      %657 = vmatmul.mubr.f32.gmra.mrb[0].mxu0 %v470
      %v658 = vpop.f32.mrb[0].mxu0
      %v659 = vadd.f32 %v429, %v658
      %v660 = vpop.f32.mrb[0].mxu0
      %v661 = vadd.f32 %v433, %v660
      %662 = vmatprep.mubr.f32.mxu0 0.0
      %663 = vmatmul.mubr.f32.gmra.mrb[0].mxu0 %v473
      %v664 = vpop.f32.mrb[0].mxu0
      %v665 = vadd.f32 %v429, %v664
      %v666 = vpop.f32.mrb[0].mxu0
      %v667 = vadd.f32 %v433, %v666
      %668 = vmatprep.mubr.f32.mxu0 0.0
      %669 = vmatmul.mubr.f32.gmra.mrb[0].mxu0 %v476
      %v670 = vpop.f32.mrb[0].mxu0
      %v671 = vadd.f32 %v429, %v670
      %v672 = vpop.f32.mrb[0].mxu0
      %v673 = vadd.f32 %v433, %v672
      %674 = vmatprep.mubr.f32.mxu0 0.0
      %675 = vmatmul.mubr.f32.gmra.mrb[0].mxu0 %v479
      %v676 = vpop.f32.mrb[0].mxu0
      %v677 = vadd.f32 %v429, %v676
      %v678 = vpop.f32.mrb[0].mxu0
      %v679 = vadd.f32 %v433, %v678
      %680 = vmatprep.mubr.f32.mxu0 0.0
      %681 = vmatmul.mubr.f32.gmra.mrb[0].mxu0 %v482
      %v682 = vpop.f32.mrb[0].mxu0
      %v683 = vadd.f32 %v429, %v682
      %v684 = vpop.f32.mrb[0].mxu0
      %v685 = vadd.f32 %v433, %v684
      %686 = vmatprep.mubr.f32.mxu0 0.0
      %687 = vmatmul.mubr.f32.gmra.mrb[0].mxu0 %v485
      %v688 = vpop.f32.mrb[0].mxu0
      %v689 = vadd.f32 %v429, %v688
      %v690 = vpop.f32.mrb[0].mxu0
      %v691 = vadd.f32 %v433, %v690
      %692 = vmatprep.mubr.f32.mxu0 0.0
      %693 = vmatmul.mubr.f32.gmra.mrb[0].mxu0 %v488
      %v694 = vpop.f32.mrb[0].mxu0
      %v695 = vadd.f32 %v429, %v694
      %v696 = vpop.f32.mrb[0].mxu0
      %v697 = vadd.f32 %v433, %v696
      %698 = vmatprep.mubr.f32.mxu0 0.0
      %699 = vmatmul.mubr.f32.gmra.mrb[0].mxu0 %v491
      %v700 = vpop.f32.mrb[0].mxu0
      %v701 = vadd.f32 %v429, %v700
      %v702 = vpop.f32.mrb[0].mxu0
      %v703 = vadd.f32 %v433, %v702
      %704 = vmatprep.mubr.f32.mxu0 0.0
      %705 = vmatmul.mubr.f32.gmra.mrb[0].mxu0 %v494
      %v706 = vpop.f32.mrb[0].mxu0
      %v707 = vadd.f32 %v429, %v706
      %v708 = vpop.f32.mrb[0].mxu0
      %v709 = vadd.f32 %v433, %v708
      %710 = vmatprep.mubr.f32.mxu0 0.0
      %711 = vmatmul.mubr.f32.gmra.mrb[0].mxu0 %v497
      %v712 = vpop.f32.mrb[0].mxu0
      %v713 = vadd.f32 %v429, %v712
      %v714 = vpop.f32.mrb[0].mxu0
      %v715 = vadd.f32 %v433, %v714
      %716 = vmatprep.mubr.f32.mxu0 0.0
      %717 = vmatmul.mubr.f32.gmra.mrb[0].mxu0 %v500
      %v718 = vpop.f32.mrb[0].mxu0
      %v719 = vadd.f32 %v429, %v718
      %v720 = vpop.f32.mrb[0].mxu0
      %v721 = vadd.f32 %v433, %v720
      %722 = vmatprep.mubr.f32.mxu0 0.0
      %723 = vmatmul.mubr.f32.gmra.mrb[0].mxu0 %v503
      %v724 = vpop.f32.mrb[0].mxu0
      %v725 = vadd.f32 %v429, %v724
      %v726 = vpop.f32.mrb[0].mxu0
      %v727 = vadd.f32 %v433, %v726
      %728 = vmatprep.mubr.f32.mxu0 0.0
      %729 = vmatmul.mubr.f32.gmra.mrb[0].mxu0 %v506
      %v730 = vpop.f32.mrb[0].mxu0
      %v731 = vadd.f32 %v429, %v730
      %v732 = vpop.f32.mrb[0].mxu0
      %v733 = vadd.f32 %v433, %v732
      %734 = vmatprep.mubr.f32.mxu0 0.0
      %735 = vmatmul.mubr.f32.gmra.mrb[0].mxu0 %v509
      %v736 = vpop.f32.mrb[0].mxu0
      %v737 = vadd.f32 %v429, %v736
      %v738 = vpop.f32.mrb[0].mxu0
      %v739 = vadd.f32 %v433, %v738
      %740 = vmatprep.mubr.f32.mxu0 0.0
      %741 = vmatmul.mubr.f32.gmra.mrb[0].mxu0 %v512
      %v742 = vpop.f32.mrb[0].mxu0
      %v743 = vadd.f32 %v429, %v742
      %v744 = vpop.f32.mrb[0].mxu0
      %v745 = vadd.f32 %v433, %v744
      %746 = vmatprep.mubr.f32.mxu0 0.0
      %747 = vmatmul.mubr.f32.gmra.mrb[0].mxu0 %v515
      %v748 = vpop.f32.mrb[0].mxu0
      %v749 = vadd.f32 %v429, %v748
      %v750 = vpop.f32.mrb[0].mxu0
      %v751 = vadd.f32 %v433, %v750
      %752 = vmatprep.mubr.f32.mxu0 0.0
      %753 = vmatmul.mubr.f32.gmra.mrb[0].mxu0 %v518
      %v754 = vpop.f32.mrb[0].mxu0
      %v755 = vadd.f32 %v429, %v754
      %v756 = vpop.f32.mrb[0].mxu0
      %v757 = vadd.f32 %v433, %v756
      %758 = vmatprep.mubr.f32.mxu0 0.0
      %759 = vmatmul.mubr.f32.gmra.mrb[0].mxu0 %v521
      %v760 = vpop.f32.mrb[0].mxu0
      %v761 = vadd.f32 %v429, %v760
      %v762 = vpop.f32.mrb[0].mxu0
      %v763 = vadd.f32 %v433, %v762
      %764 = vmatprep.mubr.f32.mxu0 0.0
      %765 = vmatmul.mubr.f32.gmra.mrb[0].mxu0 %v524
      %v766 = vpop.f32.mrb[0].mxu0
      %v767 = vadd.f32 %v429, %v766
      %v768 = vpop.f32.mrb[0].mxu0
      %v769 = vadd.f32 %v433, %v768
      %770 = vmatprep.mubr.f32.mxu0 0.0
      %771 = vmatmul.mubr.f32.gmra.mrb[0].mxu0 %v527
      %v772 = vpop.f32.mrb[0].mxu0
      %v773 = vadd.f32 %v429, %v772
      %v774 = vpop.f32.mrb[0].mxu0
      %v775 = vadd.f32 %v433, %v774
      %776 = vmatprep.mubr.f32.mxu0 0.0
      %777 = vmatmul.mubr.f32.gmra.mrb[0].mxu0 %v530
      %v778 = vpop.f32.mrb[0].mxu0
      %v779 = vadd.f32 %v429, %v778
      %v780 = vpop.f32.mrb[0].mxu0
      %v781 = vadd.f32 %v433, %v780
      %782 = vmatprep.mubr.f32.mxu0 0.0
      %783 = vmatmul.mubr.f32.gmra.mrb[0].mxu0 %v533
      %v784 = vpop.f32.mrb[0].mxu0
      %v785 = vadd.f32 %v429, %v784
      %v786 = vpop.f32.mrb[0].mxu0
      %v787 = vadd.f32 %v433, %v786
      %788 = vmatprep.mubr.f32.mxu0 0.0
      %789 = vmatmul.mubr.f32.gmra.mrb[0].mxu0 %v536
      %v790 = vpop.f32.mrb[0].mxu0
      %v791 = vadd.f32 %v429, %v790
      %v792 = vpop.f32.mrb[0].mxu0
      %v793 = vadd.f32 %v433, %v792
      %794 = vmatprep.mubr.f32.mxu0 0.0
      %795 = vmatmul.mubr.f32.gmra.mrb[0].mxu0 %v539
      %v796 = vpop.f32.mrb[0].mxu0
      %v797 = vadd.f32 %v429, %v796
      %v798 = vpop.f32.mrb[0].mxu0
      %v799 = vadd.f32 %v433, %v798
      %800 = vmatprep.mubr.f32.mxu0 0.0
      %801 = vmatmul.mubr.f32.gmra.mrb[0].mxu0 %v542
      %v802 = vpop.f32.mrb[0].mxu0
      %v803 = vadd.f32 %v429, %v802
      %v804 = vpop.f32.mrb[0].mxu0
      %v805 = vadd.f32 %v433, %v804
      %806 = vmatprep.mubr.f32.mxu0 0.0
      %807 = vmatmul.mubr.f32.gmra.mrb[0].mxu0 %v545
      %v808 = vpop.f32.mrb[0].mxu0
      %v809 = vadd.f32 %v429, %v808
      %v810 = vpop.f32.mrb[0].mxu0
      %v811 = vadd.f32 %v433, %v810
      %812 = vdwg.mxu0
      %813 = vmatprep.subr.mxu0 %v554
      %814 = vmatpush1.msra.mxu0 %v552
      %815 = vmatprep.subr.mxu0 0.0
      %816 = vmatpush1.msra.mxu0 0.0
      %817 = vmatprep.subr.mxu0 0.0
      %818 = vmatpush1.msra.mxu0 0.0
      %819 = vmatprep.subr.mxu0 0.0
      %820 = vmatpush1.msra.mxu0 0.0
      %821 = vmatprep.subr.mxu0 0.0
      %822 = vmatpush1.msra.mxu0 0.0
      %823 = vmatprep.subr.mxu0 0.0
      %824 = vmatpush1.msra.mxu0 0.0
      %825 = vmatprep.subr.mxu0 0.0
      %826 = vmatpush1.msra.mxu0 0.0
      %827 = vmatprep.subr.mxu0 0.0
      %828 = vmatpush1.msra.mxu0 0.0
      %829 = vmatprep.subr.mxu0 0.0
      %830 = vmatpush1.msra.mxu0 0.0
      %831 = vmatprep.subr.mxu0 0.0
      %832 = vmatpush1.msra.mxu0 0.0
      %833 = vmatprep.subr.mxu0 0.0
      %834 = vmatpush1.msra.mxu0 0.0
      %835 = vmatprep.subr.mxu0 0.0
      %836 = vmatpush1.msra.mxu0 0.0
      %837 = vmatprep.subr.mxu0 0.0
      %838 = vmatpush1.msra.mxu0 0.0
      %839 = vmatprep.subr.mxu0 0.0
      %840 = vmatpush1.msra.mxu0 0.0
      %841 = vmatprep.subr.mxu0 0.0
      %842 = vmatpush1.msra.mxu0 0.0
      %843 = vmatprep.subr.mxu0 0.0
      %844 = vmatpush1.msra.mxu0 0.0
      %845 = vmatprep.subr.mxu0 0.0
      %846 = vmatpush1.msra.mxu0 0.0
      %847 = vmatprep.subr.mxu0 0.0
      %848 = vmatpush1.msra.mxu0 0.0
      %849 = vmatprep.subr.mxu0 0.0
      %850 = vmatpush1.msra.mxu0 0.0
      %851 = vmatprep.subr.mxu0 0.0
      %852 = vmatpush1.msra.mxu0 0.0
      %853 = vmatprep.subr.mxu0 0.0
      %854 = vmatpush1.msra.mxu0 0.0
      %855 = vmatprep.subr.mxu0 0.0
      %856 = vmatpush1.msra.mxu0 0.0
      %857 = vmatprep.subr.mxu0 0.0
      %858 = vmatpush1.msra.mxu0 0.0
      %859 = vmatprep.subr.mxu0 0.0
      %860 = vmatpush1.msra.mxu0 0.0
      %861 = vmatprep.subr.mxu0 0.0
      %862 = vmatpush1.msra.mxu0 0.0
      %863 = vmatprep.subr.mxu0 0.0
      %864 = vmatpush1.msra.mxu0 0.0
      %865 = vmatprep.subr.mxu0 0.0
      %866 = vmatpush1.msra.mxu0 0.0
      %867 = vmatprep.subr.mxu0 0.0
      %868 = vmatpush1.msra.mxu0 0.0
      %869 = vmatprep.subr.mxu0 0.0
      %870 = vmatpush1.msra.mxu0 0.0
      %871 = vmatprep.subr.mxu0 0.0
      %872 = vmatpush1.msra.mxu0 0.0
      %873 = vmatprep.subr.mxu0 0.0
      %874 = vmatpush1.msra.mxu0 0.0
      %875 = vmatprep.subr.mxu0 0.0
      %876 = vmatpush1.msra.mxu0 0.0
      %877 = vmatprep.mubr.f32.mxu0 0.0
      %878 = vmatmul.mubr.f32.gmra.mrb[0].mxu0 %v452
      %v879 = vpop.f32.mrb[0].mxu0
      %v880 = vadd.f32 %v437, %v879
      %v881 = vpop.f32.mrb[0].mxu0
      %v882 = vadd.f32 %v441, %v881
      %883 = vmatprep.mubr.f32.mxu0 0.0
      %884 = vmatmul.mubr.f32.gmra.mrb[0].mxu0 %v455
      %v885 = vpop.f32.mrb[0].mxu0
      %v886 = vadd.f32 %v437, %v885
      %v887 = vpop.f32.mrb[0].mxu0
      %v888 = vadd.f32 %v441, %v887
      %889 = vmatprep.mubr.f32.mxu0 0.0
      %890 = vmatmul.mubr.f32.gmra.mrb[0].mxu0 %v458
      %v891 = vpop.f32.mrb[0].mxu0
      %v892 = vadd.f32 %v437, %v891
      %v893 = vpop.f32.mrb[0].mxu0
      %v894 = vadd.f32 %v441, %v893
      %895 = vmatprep.mubr.f32.mxu0 0.0
      %896 = vmatmul.mubr.f32.gmra.mrb[0].mxu0 %v461
      %v897 = vpop.f32.mrb[0].mxu0
      %v898 = vadd.f32 %v437, %v897
      %v899 = vpop.f32.mrb[0].mxu0
      %v900 = vadd.f32 %v441, %v899
      %901 = vmatprep.mubr.f32.mxu0 0.0
      %902 = vmatmul.mubr.f32.gmra.mrb[0].mxu0 %v464
      %v903 = vpop.f32.mrb[0].mxu0
      %v904 = vadd.f32 %v437, %v903
      %v905 = vpop.f32.mrb[0].mxu0
      %v906 = vadd.f32 %v441, %v905
      %907 = vmatprep.mubr.f32.mxu0 0.0
      %908 = vmatmul.mubr.f32.gmra.mrb[0].mxu0 %v467
      %v909 = vpop.f32.mrb[0].mxu0
      %v910 = vadd.f32 %v437, %v909
      %v911 = vpop.f32.mrb[0].mxu0
      %v912 = vadd.f32 %v441, %v911
      %913 = vmatprep.mubr.f32.mxu0 0.0
      %914 = vmatmul.mubr.f32.gmra.mrb[0].mxu0 %v470
      %v915 = vpop.f32.mrb[0].mxu0
      %v916 = vadd.f32 %v437, %v915
      %v917 = vpop.f32.mrb[0].mxu0
      %v918 = vadd.f32 %v441, %v917
      %919 = vmatprep.mubr.f32.mxu0 0.0
      %920 = vmatmul.mubr.f32.gmra.mrb[0].mxu0 %v473
      %v921 = vpop.f32.mrb[0].mxu0
      %v922 = vadd.f32 %v437, %v921
      %v923 = vpop.f32.mrb[0].mxu0
      %v924 = vadd.f32 %v441, %v923
      %925 = vmatprep.mubr.f32.mxu0 0.0
      %926 = vmatmul.mubr.f32.gmra.mrb[0].mxu0 %v476
      %v927 = vpop.f32.mrb[0].mxu0
      %v928 = vadd.f32 %v437, %v927
      %v929 = vpop.f32.mrb[0].mxu0
      %v930 = vadd.f32 %v441, %v929
      %931 = vmatprep.mubr.f32.mxu0 0.0
      %932 = vmatmul.mubr.f32.gmra.mrb[0].mxu0 %v479
      %v933 = vpop.f32.mrb[0].mxu0
      %v934 = vadd.f32 %v437, %v933
      %v935 = vpop.f32.mrb[0].mxu0
      %v936 = vadd.f32 %v441, %v935
      %937 = vmatprep.mubr.f32.mxu0 0.0
      %938 = vmatmul.mubr.f32.gmra.mrb[0].mxu0 %v482
      %v939 = vpop.f32.mrb[0].mxu0
      %v940 = vadd.f32 %v437, %v939
      %v941 = vpop.f32.mrb[0].mxu0
      %v942 = vadd.f32 %v441, %v941
      %943 = vmatprep.mubr.f32.mxu0 0.0
      %944 = vmatmul.mubr.f32.gmra.mrb[0].mxu0 %v485
      %v945 = vpop.f32.mrb[0].mxu0
      %v946 = vadd.f32 %v437, %v945
      %v947 = vpop.f32.mrb[0].mxu0
      %v948 = vadd.f32 %v441, %v947
      %949 = vmatprep.mubr.f32.mxu0 0.0
      %950 = vmatmul.mubr.f32.gmra.mrb[0].mxu0 %v488
      %v951 = vpop.f32.mrb[0].mxu0
      %v952 = vadd.f32 %v437, %v951
      %v953 = vpop.f32.mrb[0].mxu0
      %v954 = vadd.f32 %v441, %v953
      %955 = vmatprep.mubr.f32.mxu0 0.0
      %956 = vmatmul.mubr.f32.gmra.mrb[0].mxu0 %v491
      %v957 = vpop.f32.mrb[0].mxu0
      %v958 = vadd.f32 %v437, %v957
      %v959 = vpop.f32.mrb[0].mxu0
      %v960 = vadd.f32 %v441, %v959
      %961 = vmatprep.mubr.f32.mxu0 0.0
      %962 = vmatmul.mubr.f32.gmra.mrb[0].mxu0 %v494
      %v963 = vpop.f32.mrb[0].mxu0
      %v964 = vadd.f32 %v437, %v963
      %v965 = vpop.f32.mrb[0].mxu0
      %v966 = vadd.f32 %v441, %v965
      %967 = vmatprep.mubr.f32.mxu0 0.0
      %968 = vmatmul.mubr.f32.gmra.mrb[0].mxu0 %v497
      %v969 = vpop.f32.mrb[0].mxu0
      %v970 = vadd.f32 %v437, %v969
      %v971 = vpop.f32.mrb[0].mxu0
      %v972 = vadd.f32 %v441, %v971
      %973 = vmatprep.mubr.f32.mxu0 0.0
      %974 = vmatmul.mubr.f32.gmra.mrb[0].mxu0 %v500
      %v975 = vpop.f32.mrb[0].mxu0
      %v976 = vadd.f32 %v437, %v975
      %v977 = vpop.f32.mrb[0].mxu0
      %v978 = vadd.f32 %v441, %v977
      %979 = vmatprep.mubr.f32.mxu0 0.0
      %980 = vmatmul.mubr.f32.gmra.mrb[0].mxu0 %v503
      %v981 = vpop.f32.mrb[0].mxu0
      %v982 = vadd.f32 %v437, %v981
      %v983 = vpop.f32.mrb[0].mxu0
      %v984 = vadd.f32 %v441, %v983
      %985 = vmatprep.mubr.f32.mxu0 0.0
      %986 = vmatmul.mubr.f32.gmra.mrb[0].mxu0 %v506
      %v987 = vpop.f32.mrb[0].mxu0
      %v988 = vadd.f32 %v437, %v987
      %v989 = vpop.f32.mrb[0].mxu0
      %v990 = vadd.f32 %v441, %v989
      %991 = vmatprep.mubr.f32.mxu0 0.0
      %992 = vmatmul.mubr.f32.gmra.mrb[0].mxu0 %v509
      %v993 = vpop.f32.mrb[0].mxu0
      %v994 = vadd.f32 %v437, %v993
      %v995 = vpop.f32.mrb[0].mxu0
      %v996 = vadd.f32 %v441, %v995
      %997 = vmatprep.mubr.f32.mxu0 0.0
      %998 = vmatmul.mubr.f32.gmra.mrb[0].mxu0 %v512
      %v999 = vpop.f32.mrb[0].mxu0
      %v1000 = vadd.f32 %v437, %v999
      %v1001 = vpop.f32.mrb[0].mxu0
      %v1002 = vadd.f32 %v441, %v1001
      %1003 = vmatprep.mubr.f32.mxu0 0.0
      %1004 = vmatmul.mubr.f32.gmra.mrb[0].mxu0 %v515
      %v1005 = vpop.f32.mrb[0].mxu0
      %v1006 = vadd.f32 %v437, %v1005
      %v1007 = vpop.f32.mrb[0].mxu0
      %v1008 = vadd.f32 %v441, %v1007
      %1009 = vmatprep.mubr.f32.mxu0 0.0
      %1010 = vmatmul.mubr.f32.gmra.mrb[0].mxu0 %v518
      %v1011 = vpop.f32.mrb[0].mxu0
      %v1012 = vadd.f32 %v437, %v1011
      %v1013 = vpop.f32.mrb[0].mxu0
      %v1014 = vadd.f32 %v441, %v1013
      %1015 = vmatprep.mubr.f32.mxu0 0.0
      %1016 = vmatmul.mubr.f32.gmra.mrb[0].mxu0 %v521
      %v1017 = vpop.f32.mrb[0].mxu0
      %v1018 = vadd.f32 %v437, %v1017
      %v1019 = vpop.f32.mrb[0].mxu0
      %v1020 = vadd.f32 %v441, %v1019
      %1021 = vmatprep.mubr.f32.mxu0 0.0
      %1022 = vmatmul.mubr.f32.gmra.mrb[0].mxu0 %v524
      %v1023 = vpop.f32.mrb[0].mxu0
      %v1024 = vadd.f32 %v437, %v1023
      %v1025 = vpop.f32.mrb[0].mxu0
      %v1026 = vadd.f32 %v441, %v1025
      %1027 = vmatprep.mubr.f32.mxu0 0.0
      %1028 = vmatmul.mubr.f32.gmra.mrb[0].mxu0 %v527
      %v1029 = vpop.f32.mrb[0].mxu0
      %v1030 = vadd.f32 %v437, %v1029
      %v1031 = vpop.f32.mrb[0].mxu0
      %v1032 = vadd.f32 %v441, %v1031
      %1033 = vmatprep.mubr.f32.mxu0 0.0
      %1034 = vmatmul.mubr.f32.gmra.mrb[0].mxu0 %v530
      %v1035 = vpop.f32.mrb[0].mxu0
      %v1036 = vadd.f32 %v437, %v1035
      %v1037 = vpop.f32.mrb[0].mxu0
      %v1038 = vadd.f32 %v441, %v1037
      %1039 = vmatprep.mubr.f32.mxu0 0.0
      %1040 = vmatmul.mubr.f32.gmra.mrb[0].mxu0 %v533
      %v1041 = vpop.f32.mrb[0].mxu0
      %v1042 = vadd.f32 %v437, %v1041
      %v1043 = vpop.f32.mrb[0].mxu0
      %v1044 = vadd.f32 %v441, %v1043
      %1045 = vmatprep.mubr.f32.mxu0 0.0
      %1046 = vmatmul.mubr.f32.gmra.mrb[0].mxu0 %v536
      %v1047 = vpop.f32.mrb[0].mxu0
      %v1048 = vadd.f32 %v437, %v1047
      %v1049 = vpop.f32.mrb[0].mxu0
      %v1050 = vadd.f32 %v441, %v1049
      %1051 = vmatprep.mubr.f32.mxu0 0.0
      %1052 = vmatmul.mubr.f32.gmra.mrb[0].mxu0 %v539
      %v1053 = vpop.f32.mrb[0].mxu0
      %v1054 = vadd.f32 %v437, %v1053
      %v1055 = vpop.f32.mrb[0].mxu0
      %v1056 = vadd.f32 %v441, %v1055
      %1057 = vmatprep.mubr.f32.mxu0 0.0
      %1058 = vmatmul.mubr.f32.gmra.mrb[0].mxu0 %v542
      %v1059 = vpop.f32.mrb[0].mxu0
      %v1060 = vadd.f32 %v437, %v1059
      %v1061 = vpop.f32.mrb[0].mxu0
      %v1062 = vadd.f32 %v441, %v1061
      %1063 = vmatprep.mubr.f32.mxu0 0.0
      %1064 = vmatmul.mubr.f32.gmra.mrb[0].mxu0 %v545
      %v1065 = vpop.f32.mrb[0].mxu0
      %v1066 = vadd.f32 %v437, %v1065
      %v1067 = vpop.f32.mrb[0].mxu0
      %v1068 = vadd.f32 %v441, %v1067
      %1069 = vdwg.mxu0
      %v1070 = vmax.f32 %v623, 0.0
      %v1071 = vmax.f32 %v625, 0.0
      %v1072 = vmax.f32 %v880, 0.0
      %v1073 = vmax.f32 %v882, 0.0
      %v1074 = vmax.f32 %v629, 0.0
      %v1075 = vmax.f32 %v631, 0.0
      %v1076 = vmax.f32 %v886, 0.0
      %v1077 = vmax.f32 %v888, 0.0
      %v1078 = vmax.f32 %v635, 0.0
      %v1079 = vmax.f32 %v637, 0.0
      %v1080 = vmax.f32 %v892, 0.0
      %v1081 = vmax.f32 %v894, 0.0
      %v1082 = vmax.f32 %v641, 0.0
      %v1083 = vmax.f32 %v643, 0.0
      %v1084 = vmax.f32 %v898, 0.0
      %v1085 = vmax.f32 %v900, 0.0
      %v1086 = vmax.f32 %v647, 0.0
      %v1087 = vmax.f32 %v649, 0.0
      %v1088 = vmax.f32 %v904, 0.0
      %v1089 = vmax.f32 %v906, 0.0
      %v1090 = vmax.f32 %v653, 0.0
      %v1091 = vmax.f32 %v655, 0.0
      %v1092 = vmax.f32 %v910, 0.0
      %v1093 = vmax.f32 %v912, 0.0
      %v1094 = vmax.f32 %v659, 0.0
      %v1095 = vmax.f32 %v661, 0.0
      %v1096 = vmax.f32 %v916, 0.0
      %v1097 = vmax.f32 %v918, 0.0
      %v1098 = vmax.f32 %v665, 0.0
      %v1099 = vmax.f32 %v667, 0.0
      %v1100 = vmax.f32 %v922, 0.0
      %v1101 = vmax.f32 %v924, 0.0
      %v1102 = vmax.f32 %v671, 0.0
      %v1103 = vmax.f32 %v673, 0.0
      %v1104 = vmax.f32 %v928, 0.0
      %v1105 = vmax.f32 %v930, 0.0
      %v1106 = vmax.f32 %v677, 0.0
      %v1107 = vmax.f32 %v679, 0.0
      %v1108 = vmax.f32 %v934, 0.0
      %v1109 = vmax.f32 %v936, 0.0
      %v1110 = vmax.f32 %v683, 0.0
      %v1111 = vmax.f32 %v685, 0.0
      %v1112 = vmax.f32 %v940, 0.0
      %v1113 = vmax.f32 %v942, 0.0
      %v1114 = vmax.f32 %v689, 0.0
      %v1115 = vmax.f32 %v691, 0.0
      %v1116 = vmax.f32 %v946, 0.0
      %v1117 = vmax.f32 %v948, 0.0
      %v1118 = vmax.f32 %v695, 0.0
      %v1119 = vmax.f32 %v697, 0.0
      %v1120 = vmax.f32 %v952, 0.0
      %v1121 = vmax.f32 %v954, 0.0
      %v1122 = vmax.f32 %v701, 0.0
      %v1123 = vmax.f32 %v703, 0.0
      %v1124 = vmax.f32 %v958, 0.0
      %v1125 = vmax.f32 %v960, 0.0
      %v1126 = vmax.f32 %v707, 0.0
      %v1127 = vmax.f32 %v709, 0.0
      %v1128 = vmax.f32 %v964, 0.0
      %v1129 = vmax.f32 %v966, 0.0
      %v1130 = vmax.f32 %v713, 0.0
      %v1131 = vmax.f32 %v715, 0.0
      %v1132 = vmax.f32 %v970, 0.0
      %v1133 = vmax.f32 %v972, 0.0
      %v1134 = vmax.f32 %v719, 0.0
      %v1135 = vmax.f32 %v721, 0.0
      %v1136 = vmax.f32 %v976, 0.0
      %v1137 = vmax.f32 %v978, 0.0
      %v1138 = vmax.f32 %v725, 0.0
      %v1139 = vmax.f32 %v727, 0.0
      %v1140 = vmax.f32 %v982, 0.0
      %v1141 = vmax.f32 %v984, 0.0
      %v1142 = vmax.f32 %v731, 0.0
      %v1143 = vmax.f32 %v733, 0.0
      %v1144 = vmax.f32 %v988, 0.0
      %v1145 = vmax.f32 %v990, 0.0
      %v1146 = vmax.f32 %v737, 0.0
      %v1147 = vmax.f32 %v739, 0.0
      %v1148 = vmax.f32 %v994, 0.0
      %v1149 = vmax.f32 %v996, 0.0
      %v1150 = vmax.f32 %v743, 0.0
      %v1151 = vmax.f32 %v745, 0.0
      %v1152 = vmax.f32 %v1000, 0.0
      %v1153 = vmax.f32 %v1002, 0.0
      %v1154 = vmax.f32 %v749, 0.0
      %v1155 = vmax.f32 %v751, 0.0
      %v1156 = vmax.f32 %v1006, 0.0
      %v1157 = vmax.f32 %v1008, 0.0
      %v1158 = vmax.f32 %v755, 0.0
      %v1159 = vmax.f32 %v757, 0.0
      %v1160 = vmax.f32 %v1012, 0.0
      %v1161 = vmax.f32 %v1014, 0.0
      %v1162 = vmax.f32 %v761, 0.0
      %v1163 = vmax.f32 %v763, 0.0
      %v1164 = vmax.f32 %v1018, 0.0
      %v1165 = vmax.f32 %v1020, 0.0
      %v1166 = vmax.f32 %v767, 0.0
      %v1167 = vmax.f32 %v769, 0.0
      %v1168 = vmax.f32 %v1024, 0.0
      %v1169 = vmax.f32 %v1026, 0.0
      %v1170 = vmax.f32 %v773, 0.0
      %v1171 = vmax.f32 %v775, 0.0
      %v1172 = vmax.f32 %v1030, 0.0
      %v1173 = vmax.f32 %v1032, 0.0
      %v1174 = vmax.f32 %v779, 0.0
      %v1175 = vmax.f32 %v781, 0.0
      %v1176 = vmax.f32 %v1036, 0.0
      %v1177 = vmax.f32 %v1038, 0.0
      %v1178 = vmax.f32 %v785, 0.0
      %v1179 = vmax.f32 %v787, 0.0
      %v1180 = vmax.f32 %v1042, 0.0
      %v1181 = vmax.f32 %v1044, 0.0
      %v1182 = vmax.f32 %v791, 0.0
      %v1183 = vmax.f32 %v793, 0.0
      %v1184 = vmax.f32 %v1048, 0.0
      %v1185 = vmax.f32 %v1050, 0.0
      %v1186 = vmax.f32 %v797, 0.0
      %v1187 = vmax.f32 %v799, 0.0
      %v1188 = vmax.f32 %v1054, 0.0
      %v1189 = vmax.f32 %v1056, 0.0
      %v1190 = vmax.f32 %v803, 0.0
      %v1191 = vmax.f32 %v805, 0.0
      %v1192 = vmax.f32 %v1060, 0.0
      %v1193 = vmax.f32 %v1062, 0.0
      %v1194 = vmax.f32 %v809, 0.0
      %v1195 = vmax.f32 %v811, 0.0
      %v1196 = vmax.f32 %v1066, 0.0
      %v1197 = vmax.f32 %v1068, 0.0
      %v1198 = vld [vmem:[%s3] sm:$0xff]
      %v1199 = vld [vmem:[%s3 + $0x8] sm:$0xff]
      %v1200 = vld [vmem:[%s3 + $0x10] sm:$0xff]
      %v1201 = vld [vmem:[%s3 + $0x18] sm:$0xff]
      %v1202 = vld [vmem:[%s3 + $0x20] sm:$0xff]
      %v1203 = vld [vmem:[%s3 + $0x28] sm:$0xff]
      %v1204 = vld [vmem:[%s3 + $0x30] sm:$0xff]
      %v1205 = vld [vmem:[%s3 + $0x38] sm:$0xff]
      %v1206 = vld [vmem:[%s3 + $0x40] sm:$0xff]
      %v1207 = vld [vmem:[%s3 + $0x48] sm:$0xff]
      %v1208 = vld [vmem:[%s3 + $0x50] sm:$0xff]
      %v1209 = vld [vmem:[%s3 + $0x58] sm:$0xff]
      %v1210 = vld [vmem:[%s3 + $0x60] sm:$0xff]
      %v1211 = vld [vmem:[%s3 + $0x68] sm:$0xff]
      %v1212 = vld [vmem:[%s3 + $0x70] sm:$0xff]
      %v1213 = vld [vmem:[%s3 + $0x78] sm:$0xff]
      %v1214 = vld [vmem:[%s3 + $0x80] sm:$0xff]
      %v1215 = vld [vmem:[%s3 + $0x88] sm:$0xff]
      %v1216 = vld [vmem:[%s3 + $0x90] sm:$0xff]
      %v1217 = vld [vmem:[%s3 + $0x98] sm:$0xff]
      %v1218 = vld [vmem:[%s3 + $0xa0] sm:$0xff]
      %v1219 = vld [vmem:[%s3 + $0xa8] sm:$0xff]
      %v1220 = vld [vmem:[%s3 + $0xb0] sm:$0xff]
      %v1221 = vld [vmem:[%s3 + $0xb8] sm:$0xff]
      %v1222 = vld [vmem:[%s3 + $0xc0] sm:$0xff]
      %v1223 = vld [vmem:[%s3 + $0xc8] sm:$0xff]
      %v1224 = vld [vmem:[%s3 + $0xd0] sm:$0xff]
      %v1225 = vld [vmem:[%s3 + $0xd8] sm:$0xff]
      %v1226 = vld [vmem:[%s3 + $0xe0] sm:$0xff]
      %v1227 = vld [vmem:[%s3 + $0xe8] sm:$0xff]
      %v1228 = vld [vmem:[%s3 + $0xf0] sm:$0xff]
      %v1229 = vld [vmem:[%s3 + $0xf8] sm:$0xff]
      %v1230 = vld [vmem:[%s3 + $0x100] sm:$0xff]
      %v1231 = vld [vmem:[%s3 + $0x108] sm:$0xff]
      %v1232 = vld [vmem:[%s3 + $0x110] sm:$0xff]
      %v1233 = vld [vmem:[%s3 + $0x118] sm:$0xff]
      %v1234 = vld [vmem:[%s3 + $0x120] sm:$0xff]
      %v1235 = vld [vmem:[%s3 + $0x128] sm:$0xff]
      %v1236 = vld [vmem:[%s3 + $0x130] sm:$0xff]
      %v1237 = vld [vmem:[%s3 + $0x138] sm:$0xff]
      %v1238 = vld [vmem:[%s3 + $0x140] sm:$0xff]
      %v1239 = vld [vmem:[%s3 + $0x148] sm:$0xff]
      %v1240 = vld [vmem:[%s3 + $0x150] sm:$0xff]
      %v1241 = vld [vmem:[%s3 + $0x158] sm:$0xff]
      %v1242 = vld [vmem:[%s3 + $0x160] sm:$0xff]
      %v1243 = vld [vmem:[%s3 + $0x168] sm:$0xff]
      %v1244 = vld [vmem:[%s3 + $0x170] sm:$0xff]
      %v1245 = vld [vmem:[%s3 + $0x178] sm:$0xff]
      %v1246 = vld [vmem:[%s3 + $0x180] sm:$0xff]
      %v1247 = vld [vmem:[%s3 + $0x188] sm:$0xff]
      %v1248 = vld [vmem:[%s3 + $0x190] sm:$0xff]
      %v1249 = vld [vmem:[%s3 + $0x198] sm:$0xff]
      %v1250 = vld [vmem:[%s3 + $0x1a0] sm:$0xff]
      %v1251 = vld [vmem:[%s3 + $0x1a8] sm:$0xff]
      %v1252 = vld [vmem:[%s3 + $0x1b0] sm:$0xff]
      %v1253 = vld [vmem:[%s3 + $0x1b8] sm:$0xff]
      %v1254 = vld [vmem:[%s3 + $0x1c0] sm:$0xff]
      %v1255 = vld [vmem:[%s3 + $0x1c8] sm:$0xff]
      %v1256 = vld [vmem:[%s3 + $0x1d0] sm:$0xff]
      %v1257 = vld [vmem:[%s3 + $0x1d8] sm:$0xff]
      %v1258 = vld [vmem:[%s3 + $0x1e0] sm:$0xff]
      %v1259 = vld [vmem:[%s3 + $0x1e8] sm:$0xff]
      %v1260 = vld [vmem:[%s3 + $0x1f0] sm:$0xff]
      %v1261 = vld [vmem:[%s3 + $0x1f8] sm:$0xff]
      %v1262 = vld [vmem:[%s3 + $0x200] sm:$0xff]
      %v1263 = vld [vmem:[%s3 + $0x208] sm:$0xff]
      %v1264 = vld [vmem:[%s3 + $0x210] sm:$0xff]
      %v1265 = vld [vmem:[%s3 + $0x218] sm:$0xff]
      %v1266 = vld [vmem:[%s3 + $0x220] sm:$0xff]
      %v1267 = vld [vmem:[%s3 + $0x228] sm:$0xff]
      %v1268 = vld [vmem:[%s3 + $0x230] sm:$0xff]
      %v1269 = vld [vmem:[%s3 + $0x238] sm:$0xff]
      %v1270 = vld [vmem:[%s3 + $0x240] sm:$0xff]
      %v1271 = vld [vmem:[%s3 + $0x248] sm:$0xff]
      %v1272 = vld [vmem:[%s3 + $0x250] sm:$0xff]
      %v1273 = vld [vmem:[%s3 + $0x258] sm:$0xff]
      %v1274 = vld [vmem:[%s3 + $0x260] sm:$0xff]
      %v1275 = vld [vmem:[%s3 + $0x268] sm:$0xff]
      %v1276 = vld [vmem:[%s3 + $0x270] sm:$0xff]
      %v1277 = vld [vmem:[%s3 + $0x278] sm:$0xff]
      %v1278 = vld [vmem:[%s3 + $0x280] sm:$0xff]
      %v1279 = vld [vmem:[%s3 + $0x288] sm:$0xff]
      %v1280 = vld [vmem:[%s3 + $0x290] sm:$0xff]
      %v1281 = vld [vmem:[%s3 + $0x298] sm:$0xff]
      %v1282 = vld [vmem:[%s3 + $0x2a0] sm:$0xff]
      %v1283 = vld [vmem:[%s3 + $0x2a8] sm:$0xff]
      %v1284 = vld [vmem:[%s3 + $0x2b0] sm:$0xff]
      %v1285 = vld [vmem:[%s3 + $0x2b8] sm:$0xff]
      %v1286 = vld [vmem:[%s3 + $0x2c0] sm:$0xff]
      %v1287 = vld [vmem:[%s3 + $0x2c8] sm:$0xff]
      %v1288 = vld [vmem:[%s3 + $0x2d0] sm:$0xff]
      %v1289 = vld [vmem:[%s3 + $0x2d8] sm:$0xff]
      %v1290 = vld [vmem:[%s3 + $0x2e0] sm:$0xff]
      %v1291 = vld [vmem:[%s3 + $0x2e8] sm:$0xff]
      %v1292 = vld [vmem:[%s3 + $0x2f0] sm:$0xff]
      %v1293 = vld [vmem:[%s3 + $0x2f8] sm:$0xff]
      %v1294 = vld [vmem:[%s3 + $0x300] sm:$0xff]
      %v1295 = vld [vmem:[%s3 + $0x308] sm:$0xff]
      %v1296 = vld [vmem:[%s3 + $0x310] sm:$0xff]
      %v1297 = vld [vmem:[%s3 + $0x318] sm:$0xff]
      %v1298 = vld [vmem:[%s3 + $0x320] sm:$0xff]
      %v1299 = vld [vmem:[%s3 + $0x328] sm:$0xff]
      %v1300 = vld [vmem:[%s3 + $0x330] sm:$0xff]
      %v1301 = vld [vmem:[%s3 + $0x338] sm:$0xff]
      %v1302 = vld [vmem:[%s3 + $0x340] sm:$0xff]
      %v1303 = vld [vmem:[%s3 + $0x348] sm:$0xff]
      %v1304 = vld [vmem:[%s3 + $0x350] sm:$0xff]
      %v1305 = vld [vmem:[%s3 + $0x358] sm:$0xff]
      %v1306 = vld [vmem:[%s3 + $0x360] sm:$0xff]
      %v1307 = vld [vmem:[%s3 + $0x368] sm:$0xff]
      %v1308 = vld [vmem:[%s3 + $0x370] sm:$0xff]
      %v1309 = vld [vmem:[%s3 + $0x378] sm:$0xff]
      %v1310 = vld [vmem:[%s3 + $0x380] sm:$0xff]
      %v1311 = vld [vmem:[%s3 + $0x388] sm:$0xff]
      %v1312 = vld [vmem:[%s3 + $0x390] sm:$0xff]
      %v1313 = vld [vmem:[%s3 + $0x398] sm:$0xff]
      %v1314 = vld [vmem:[%s3 + $0x3a0] sm:$0xff]
      %v1315 = vld [vmem:[%s3 + $0x3a8] sm:$0xff]
      %v1316 = vld [vmem:[%s3 + $0x3b0] sm:$0xff]
      %v1317 = vld [vmem:[%s3 + $0x3b8] sm:$0xff]
      %v1318 = vld [vmem:[%s3 + $0x3c0] sm:$0xff]
      %v1319 = vld [vmem:[%s3 + $0x3c8] sm:$0xff]
      %v1320 = vld [vmem:[%s3 + $0x3d0] sm:$0xff]
      %v1321 = vld [vmem:[%s3 + $0x3d8] sm:$0xff]
      %v1322 = vld [vmem:[%s3 + $0x3e0] sm:$0xff]
      %v1323 = vld [vmem:[%s3 + $0x3e8] sm:$0xff]
      %v1324 = vld [vmem:[%s3 + $0x3f0] sm:$0xff]
      %v1325 = vld [vmem:[%s3 + $0x3f8] sm:$0xff]
      %v1326 = vld [vmem:[%s3 + $0x400] sm:$0xff]
      %v1327 = vld [vmem:[%s3 + $0x408] sm:$0xff]
      %v1328 = vld [vmem:[%s3 + $0x410] sm:$0xff]
      %v1329 = vld [vmem:[%s3 + $0x418] sm:$0xff]
      %v1330 = vld [vmem:[%s3 + $0x420] sm:$0xff]
      %v1331 = vld [vmem:[%s3 + $0x428] sm:$0xff]
      %v1332 = vld [vmem:[%s3 + $0x430] sm:$0xff]
      %v1333 = vld [vmem:[%s3 + $0x438] sm:$0xff]
      %v1334 = vld [vmem:[%s3 + $0x440] sm:$0xff]
      %v1335 = vld [vmem:[%s3 + $0x448] sm:$0xff]
      %v1336 = vld [vmem:[%s3 + $0x450] sm:$0xff]
      %v1337 = vld [vmem:[%s3 + $0x458] sm:$0xff]
      %v1338 = vld [vmem:[%s3 + $0x460] sm:$0xff]
      %v1339 = vld [vmem:[%s3 + $0x468] sm:$0xff]
      %v1340 = vld [vmem:[%s3 + $0x470] sm:$0xff]
      %v1341 = vld [vmem:[%s3 + $0x478] sm:$0xff]
      %v1342 = vld [vmem:[%s3 + $0x480] sm:$0xff]
      %v1343 = vld [vmem:[%s3 + $0x488] sm:$0xff]
      %v1344 = vld [vmem:[%s3 + $0x490] sm:$0xff]
      %v1345 = vld [vmem:[%s3 + $0x498] sm:$0xff]
      %v1346 = vld [vmem:[%s3 + $0x4a0] sm:$0xff]
      %v1347 = vld [vmem:[%s3 + $0x4a8] sm:$0xff]
      %v1348 = vld [vmem:[%s3 + $0x4b0] sm:$0xff]
      %v1349 = vld [vmem:[%s3 + $0x4b8] sm:$0xff]
      %v1350 = vld [vmem:[%s3 + $0x4c0] sm:$0xff]
      %v1351 = vld [vmem:[%s3 + $0x4c8] sm:$0xff]
      %v1352 = vld [vmem:[%s3 + $0x4d0] sm:$0xff]
      %v1353 = vld [vmem:[%s3 + $0x4d8] sm:$0xff]
      %v1354 = vld [vmem:[%s3 + $0x4e0] sm:$0xff]
      %v1355 = vld [vmem:[%s3 + $0x4e8] sm:$0xff]
      %v1356 = vld [vmem:[%s3 + $0x4f0] sm:$0xff]
      %v1357 = vld [vmem:[%s3 + $0x4f8] sm:$0xff]
      %v1358 = vld [vmem:[%s3 + $0x500] sm:$0xff]
      %v1359 = vld [vmem:[%s3 + $0x508] sm:$0xff]
      %v1360 = vld [vmem:[%s3 + $0x510] sm:$0xff]
      %v1361 = vld [vmem:[%s3 + $0x518] sm:$0xff]
      %v1362 = vld [vmem:[%s3 + $0x520] sm:$0xff]
      %v1363 = vld [vmem:[%s3 + $0x528] sm:$0xff]
      %v1364 = vld [vmem:[%s3 + $0x530] sm:$0xff]
      %v1365 = vld [vmem:[%s3 + $0x538] sm:$0xff]
      %v1366 = vld [vmem:[%s3 + $0x540] sm:$0xff]
      %v1367 = vld [vmem:[%s3 + $0x548] sm:$0xff]
      %v1368 = vld [vmem:[%s3 + $0x550] sm:$0xff]
      %v1369 = vld [vmem:[%s3 + $0x558] sm:$0xff]
      %v1370 = vld [vmem:[%s3 + $0x560] sm:$0xff]
      %v1371 = vld [vmem:[%s3 + $0x568] sm:$0xff]
      %v1372 = vld [vmem:[%s3 + $0x570] sm:$0xff]
      %v1373 = vld [vmem:[%s3 + $0x578] sm:$0xff]
      %v1374 = vld [vmem:[%s3 + $0x580] sm:$0xff]
      %v1375 = vld [vmem:[%s3 + $0x588] sm:$0xff]
      %v1376 = vld [vmem:[%s3 + $0x590] sm:$0xff]
      %v1377 = vld [vmem:[%s3 + $0x598] sm:$0xff]
      %v1378 = vld [vmem:[%s3 + $0x5a0] sm:$0xff]
      %v1379 = vld [vmem:[%s3 + $0x5a8] sm:$0xff]
      %v1380 = vld [vmem:[%s3 + $0x5b0] sm:$0xff]
      %v1381 = vld [vmem:[%s3 + $0x5b8] sm:$0xff]
      %v1382 = vld [vmem:[%s3 + $0x5c0] sm:$0xff]
      %v1383 = vld [vmem:[%s3 + $0x5c8] sm:$0xff]
      %v1384 = vld [vmem:[%s3 + $0x5d0] sm:$0xff]
      %v1385 = vld [vmem:[%s3 + $0x5d8] sm:$0xff]
      %v1386 = vld [vmem:[%s3 + $0x5e0] sm:$0xff]
      %v1387 = vld [vmem:[%s3 + $0x5e8] sm:$0xff]
      %v1388 = vld [vmem:[%s3 + $0x5f0] sm:$0xff]
      %v1389 = vld [vmem:[%s3 + $0x5f8] sm:$0xff]
      %v1390 = vld [vmem:[%s3 + $0x600] sm:$0xff]
      %v1391 = vld [vmem:[%s3 + $0x608] sm:$0xff]
      %v1392 = vld [vmem:[%s3 + $0x610] sm:$0xff]
      %v1393 = vld [vmem:[%s3 + $0x618] sm:$0xff]
      %v1394 = vld [vmem:[%s3 + $0x620] sm:$0xff]
      %v1395 = vld [vmem:[%s3 + $0x628] sm:$0xff]
      %v1396 = vld [vmem:[%s3 + $0x630] sm:$0xff]
      %v1397 = vld [vmem:[%s3 + $0x638] sm:$0xff]
      %v1398 = vld [vmem:[%s3 + $0x640] sm:$0xff]
      %v1399 = vld [vmem:[%s3 + $0x648] sm:$0xff]
      %v1400 = vld [vmem:[%s3 + $0x650] sm:$0xff]
      %v1401 = vld [vmem:[%s3 + $0x658] sm:$0xff]
      %v1402 = vld [vmem:[%s3 + $0x660] sm:$0xff]
      %v1403 = vld [vmem:[%s3 + $0x668] sm:$0xff]
      %v1404 = vld [vmem:[%s3 + $0x670] sm:$0xff]
      %v1405 = vld [vmem:[%s3 + $0x678] sm:$0xff]
      %v1406 = vld [vmem:[%s3 + $0x680] sm:$0xff]
      %v1407 = vld [vmem:[%s3 + $0x688] sm:$0xff]
      %v1408 = vld [vmem:[%s3 + $0x690] sm:$0xff]
      %v1409 = vld [vmem:[%s3 + $0x698] sm:$0xff]
      %v1410 = vld [vmem:[%s3 + $0x6a0] sm:$0xff]
      %v1411 = vld [vmem:[%s3 + $0x6a8] sm:$0xff]
      %v1412 = vld [vmem:[%s3 + $0x6b0] sm:$0xff]
      %v1413 = vld [vmem:[%s3 + $0x6b8] sm:$0xff]
      %v1414 = vld [vmem:[%s3 + $0x6c0] sm:$0xff]
      %v1415 = vld [vmem:[%s3 + $0x6c8] sm:$0xff]
      %v1416 = vld [vmem:[%s3 + $0x6d0] sm:$0xff]
      %v1417 = vld [vmem:[%s3 + $0x6d8] sm:$0xff]
      %v1418 = vld [vmem:[%s3 + $0x6e0] sm:$0xff]
      %v1419 = vld [vmem:[%s3 + $0x6e8] sm:$0xff]
      %v1420 = vld [vmem:[%s3 + $0x6f0] sm:$0xff]
      %v1421 = vld [vmem:[%s3 + $0x6f8] sm:$0xff]
      %v1422 = vld [vmem:[%s3 + $0x700] sm:$0xff]
      %v1423 = vld [vmem:[%s3 + $0x708] sm:$0xff]
      %v1424 = vld [vmem:[%s3 + $0x710] sm:$0xff]
      %v1425 = vld [vmem:[%s3 + $0x718] sm:$0xff]
      %v1426 = vld [vmem:[%s3 + $0x720] sm:$0xff]
      %v1427 = vld [vmem:[%s3 + $0x728] sm:$0xff]
      %v1428 = vld [vmem:[%s3 + $0x730] sm:$0xff]
      %v1429 = vld [vmem:[%s3 + $0x738] sm:$0xff]
      %v1430 = vld [vmem:[%s3 + $0x740] sm:$0xff]
      %v1431 = vld [vmem:[%s3 + $0x748] sm:$0xff]
      %v1432 = vld [vmem:[%s3 + $0x750] sm:$0xff]
      %v1433 = vld [vmem:[%s3 + $0x758] sm:$0xff]
      %v1434 = vld [vmem:[%s3 + $0x760] sm:$0xff]
      %v1435 = vld [vmem:[%s3 + $0x768] sm:$0xff]
      %v1436 = vld [vmem:[%s3 + $0x770] sm:$0xff]
      %v1437 = vld [vmem:[%s3 + $0x778] sm:$0xff]
      %v1438 = vld [vmem:[%s3 + $0x780] sm:$0xff]
      %v1439 = vld [vmem:[%s3 + $0x788] sm:$0xff]
      %v1440 = vld [vmem:[%s3 + $0x790] sm:$0xff]
      %v1441 = vld [vmem:[%s3 + $0x798] sm:$0xff]
      %v1442 = vld [vmem:[%s3 + $0x7a0] sm:$0xff]
      %v1443 = vld [vmem:[%s3 + $0x7a8] sm:$0xff]
      %v1444 = vld [vmem:[%s3 + $0x7b0] sm:$0xff]
      %v1445 = vld [vmem:[%s3 + $0x7b8] sm:$0xff]
      %v1446 = vld [vmem:[%s3 + $0x7c0] sm:$0xff]
      %v1447 = vld [vmem:[%s3 + $0x7c8] sm:$0xff]
      %v1448 = vld [vmem:[%s3 + $0x7d0] sm:$0xff]
      %v1449 = vld [vmem:[%s3 + $0x7d8] sm:$0xff]
      %v1450 = vld [vmem:[%s3 + $0x7e0] sm:$0xff]
      %v1451 = vld [vmem:[%s3 + $0x7e8] sm:$0xff]
      %v1452 = vld [vmem:[%s3 + $0x7f0] sm:$0xff]
      %v1453 = vld [vmem:[%s3 + $0x7f8] sm:$0xff]
      %v1454 = vld [vmem:[%s4] sm:$0xf]
      %v1456 = vlaneseq
      %v1457 = vshrl.u32 %v1456, 7
      %v1458 = vsub.s32 0, %v1457
      %v1459 = vrot.slane %v1454, %v1458
      %v1460 = vlaneseq
      %v1461 = vshrl.u32 %v1460, 7
      %v1462 = vsub.s32 1, %v1461
      %v1463 = vrot.slane %v1454, %v1462
      %v1464 = vlaneseq
      %v1465 = vshrl.u32 %v1464, 7
      %v1466 = vsub.s32 2, %v1465
      %v1467 = vrot.slane %v1454, %v1466
      %v1468 = vlaneseq
      %v1469 = vshrl.u32 %v1468, 7
      %v1470 = vsub.s32 3, %v1469
      %v1471 = vrot.slane %v1454, %v1470
      %1476 = vmatprep.subr.mxu0 %v1199
      %1477 = vmatpush1.msra.mxu0 %v1198
      %1478 = vmatprep.subr.mxu0 %v1203
      %1479 = vmatpush1.msra.mxu0 %v1202
      %1480 = vmatprep.subr.mxu0 %v1207
      %1481 = vmatpush1.msra.mxu0 %v1206
      %1482 = vmatprep.subr.mxu0 %v1211
      %1483 = vmatpush1.msra.mxu0 %v1210
      %1484 = vmatprep.subr.mxu0 %v1215
      %1485 = vmatpush1.msra.mxu0 %v1214
      %1486 = vmatprep.subr.mxu0 %v1219
      %1487 = vmatpush1.msra.mxu0 %v1218
      %1488 = vmatprep.subr.mxu0 %v1223
      %1489 = vmatpush1.msra.mxu0 %v1222
      %1490 = vmatprep.subr.mxu0 %v1227
      %1491 = vmatpush1.msra.mxu0 %v1226
      %1492 = vmatprep.subr.mxu0 %v1231
      %1493 = vmatpush1.msra.mxu0 %v1230
      %1494 = vmatprep.subr.mxu0 %v1235
      %1495 = vmatpush1.msra.mxu0 %v1234
      %1496 = vmatprep.subr.mxu0 %v1239
      %1497 = vmatpush1.msra.mxu0 %v1238
      %1498 = vmatprep.subr.mxu0 %v1243
      %1499 = vmatpush1.msra.mxu0 %v1242
      %1500 = vmatprep.subr.mxu0 %v1247
      %1501 = vmatpush1.msra.mxu0 %v1246
      %1502 = vmatprep.subr.mxu0 %v1251
      %1503 = vmatpush1.msra.mxu0 %v1250
      %1504 = vmatprep.subr.mxu0 %v1255
      %1505 = vmatpush1.msra.mxu0 %v1254
      %1506 = vmatprep.subr.mxu0 %v1259
      %1507 = vmatpush1.msra.mxu0 %v1258
      %1508 = vmatprep.subr.mxu0 %v1263
      %1509 = vmatpush1.msra.mxu0 %v1262
      %1510 = vmatprep.subr.mxu0 %v1267
      %1511 = vmatpush1.msra.mxu0 %v1266
      %1512 = vmatprep.subr.mxu0 %v1271
      %1513 = vmatpush1.msra.mxu0 %v1270
      %1514 = vmatprep.subr.mxu0 %v1275
      %1515 = vmatpush1.msra.mxu0 %v1274
      %1516 = vmatprep.subr.mxu0 %v1279
      %1517 = vmatpush1.msra.mxu0 %v1278
      %1518 = vmatprep.subr.mxu0 %v1283
      %1519 = vmatpush1.msra.mxu0 %v1282
      %1520 = vmatprep.subr.mxu0 %v1287
      %1521 = vmatpush1.msra.mxu0 %v1286
      %1522 = vmatprep.subr.mxu0 %v1291
      %1523 = vmatpush1.msra.mxu0 %v1290
      %1524 = vmatprep.subr.mxu0 %v1295
      %1525 = vmatpush1.msra.mxu0 %v1294
      %1526 = vmatprep.subr.mxu0 %v1299
      %1527 = vmatpush1.msra.mxu0 %v1298
      %1528 = vmatprep.subr.mxu0 %v1303
      %1529 = vmatpush1.msra.mxu0 %v1302
      %1530 = vmatprep.subr.mxu0 %v1307
      %1531 = vmatpush1.msra.mxu0 %v1306
      %1532 = vmatprep.subr.mxu0 %v1311
      %1533 = vmatpush1.msra.mxu0 %v1310
      %1534 = vmatprep.subr.mxu0 %v1315
      %1535 = vmatpush1.msra.mxu0 %v1314
      %1536 = vmatprep.subr.mxu0 %v1319
      %1537 = vmatpush1.msra.mxu0 %v1318
      %1538 = vmatprep.subr.mxu0 %v1323
      %1539 = vmatpush1.msra.mxu0 %v1322
      %1540 = vmatprep.mubr.f32.mxu0 %v1071
      %1541 = vmatmul.mubr.f32.gmra.mrb[0].mxu0 %v1070
      %v1542 = vpop.f32.mrb[0].mxu0
      %v1543 = vadd.f32 %v1459, %v1542
      %v1544 = vpop.f32.mrb[0].mxu0
      %v1545 = vadd.f32 %v1463, %v1544
      %1546 = vmatprep.mubr.f32.mxu0 %v1075
      %1547 = vmatmul.mubr.f32.gmra.mrb[0].mxu0 %v1074
      %v1548 = vpop.f32.mrb[0].mxu0
      %v1549 = vadd.f32 %v1459, %v1548
      %v1550 = vpop.f32.mrb[0].mxu0
      %v1551 = vadd.f32 %v1463, %v1550
      %1552 = vmatprep.mubr.f32.mxu0 %v1079
      %1553 = vmatmul.mubr.f32.gmra.mrb[0].mxu0 %v1078
      %v1554 = vpop.f32.mrb[0].mxu0
      %v1555 = vadd.f32 %v1459, %v1554
      %v1556 = vpop.f32.mrb[0].mxu0
      %v1557 = vadd.f32 %v1463, %v1556
      %1558 = vmatprep.mubr.f32.mxu0 %v1083
      %1559 = vmatmul.mubr.f32.gmra.mrb[0].mxu0 %v1082
      %v1560 = vpop.f32.mrb[0].mxu0
      %v1561 = vadd.f32 %v1459, %v1560
      %v1562 = vpop.f32.mrb[0].mxu0
      %v1563 = vadd.f32 %v1463, %v1562
      %1564 = vmatprep.mubr.f32.mxu0 %v1087
      %1565 = vmatmul.mubr.f32.gmra.mrb[0].mxu0 %v1086
      %v1566 = vpop.f32.mrb[0].mxu0
      %v1567 = vadd.f32 %v1459, %v1566
      %v1568 = vpop.f32.mrb[0].mxu0
      %v1569 = vadd.f32 %v1463, %v1568
      %1570 = vmatprep.mubr.f32.mxu0 %v1091
      %1571 = vmatmul.mubr.f32.gmra.mrb[0].mxu0 %v1090
      %v1572 = vpop.f32.mrb[0].mxu0
      %v1573 = vadd.f32 %v1459, %v1572
      %v1574 = vpop.f32.mrb[0].mxu0
      %v1575 = vadd.f32 %v1463, %v1574
      %1576 = vmatprep.mubr.f32.mxu0 %v1095
      %1577 = vmatmul.mubr.f32.gmra.mrb[0].mxu0 %v1094
      %v1578 = vpop.f32.mrb[0].mxu0
      %v1579 = vadd.f32 %v1459, %v1578
      %v1580 = vpop.f32.mrb[0].mxu0
      %v1581 = vadd.f32 %v1463, %v1580
      %1582 = vmatprep.mubr.f32.mxu0 %v1099
      %1583 = vmatmul.mubr.f32.gmra.mrb[0].mxu0 %v1098
      %v1584 = vpop.f32.mrb[0].mxu0
      %v1585 = vadd.f32 %v1459, %v1584
      %v1586 = vpop.f32.mrb[0].mxu0
      %v1587 = vadd.f32 %v1463, %v1586
      %1588 = vmatprep.mubr.f32.mxu0 %v1103
      %1589 = vmatmul.mubr.f32.gmra.mrb[0].mxu0 %v1102
      %v1590 = vpop.f32.mrb[0].mxu0
      %v1591 = vadd.f32 %v1459, %v1590
      %v1592 = vpop.f32.mrb[0].mxu0
      %v1593 = vadd.f32 %v1463, %v1592
      %1594 = vmatprep.mubr.f32.mxu0 %v1107
      %1595 = vmatmul.mubr.f32.gmra.mrb[0].mxu0 %v1106
      %v1596 = vpop.f32.mrb[0].mxu0
      %v1597 = vadd.f32 %v1459, %v1596
      %v1598 = vpop.f32.mrb[0].mxu0
      %v1599 = vadd.f32 %v1463, %v1598
      %1600 = vmatprep.mubr.f32.mxu0 %v1111
      %1601 = vmatmul.mubr.f32.gmra.mrb[0].mxu0 %v1110
      %v1602 = vpop.f32.mrb[0].mxu0
      %v1603 = vadd.f32 %v1459, %v1602
      %v1604 = vpop.f32.mrb[0].mxu0
      %v1605 = vadd.f32 %v1463, %v1604
      %1606 = vmatprep.mubr.f32.mxu0 %v1115
      %1607 = vmatmul.mubr.f32.gmra.mrb[0].mxu0 %v1114
      %v1608 = vpop.f32.mrb[0].mxu0
      %v1609 = vadd.f32 %v1459, %v1608
      %v1610 = vpop.f32.mrb[0].mxu0
      %v1611 = vadd.f32 %v1463, %v1610
      %1612 = vmatprep.mubr.f32.mxu0 %v1119
      %1613 = vmatmul.mubr.f32.gmra.mrb[0].mxu0 %v1118
      %v1614 = vpop.f32.mrb[0].mxu0
      %v1615 = vadd.f32 %v1459, %v1614
      %v1616 = vpop.f32.mrb[0].mxu0
      %v1617 = vadd.f32 %v1463, %v1616
      %1618 = vmatprep.mubr.f32.mxu0 %v1123
      %1619 = vmatmul.mubr.f32.gmra.mrb[0].mxu0 %v1122
      %v1620 = vpop.f32.mrb[0].mxu0
      %v1621 = vadd.f32 %v1459, %v1620
      %v1622 = vpop.f32.mrb[0].mxu0
      %v1623 = vadd.f32 %v1463, %v1622
      %1624 = vmatprep.mubr.f32.mxu0 %v1127
      %1625 = vmatmul.mubr.f32.gmra.mrb[0].mxu0 %v1126
      %v1626 = vpop.f32.mrb[0].mxu0
      %v1627 = vadd.f32 %v1459, %v1626
      %v1628 = vpop.f32.mrb[0].mxu0
      %v1629 = vadd.f32 %v1463, %v1628
      %1630 = vmatprep.mubr.f32.mxu0 %v1131
      %1631 = vmatmul.mubr.f32.gmra.mrb[0].mxu0 %v1130
      %v1632 = vpop.f32.mrb[0].mxu0
      %v1633 = vadd.f32 %v1459, %v1632
      %v1634 = vpop.f32.mrb[0].mxu0
      %v1635 = vadd.f32 %v1463, %v1634
      %1636 = vmatprep.mubr.f32.mxu0 %v1135
      %1637 = vmatmul.mubr.f32.gmra.mrb[0].mxu0 %v1134
      %v1638 = vpop.f32.mrb[0].mxu0
      %v1639 = vadd.f32 %v1459, %v1638
      %v1640 = vpop.f32.mrb[0].mxu0
      %v1641 = vadd.f32 %v1463, %v1640
      %1642 = vmatprep.mubr.f32.mxu0 %v1139
      %1643 = vmatmul.mubr.f32.gmra.mrb[0].mxu0 %v1138
      %v1644 = vpop.f32.mrb[0].mxu0
      %v1645 = vadd.f32 %v1459, %v1644
      %v1646 = vpop.f32.mrb[0].mxu0
      %v1647 = vadd.f32 %v1463, %v1646
      %1648 = vmatprep.mubr.f32.mxu0 %v1143
      %1649 = vmatmul.mubr.f32.gmra.mrb[0].mxu0 %v1142
      %v1650 = vpop.f32.mrb[0].mxu0
      %v1651 = vadd.f32 %v1459, %v1650
      %v1652 = vpop.f32.mrb[0].mxu0
      %v1653 = vadd.f32 %v1463, %v1652
      %1654 = vmatprep.mubr.f32.mxu0 %v1147
      %1655 = vmatmul.mubr.f32.gmra.mrb[0].mxu0 %v1146
      %v1656 = vpop.f32.mrb[0].mxu0
      %v1657 = vadd.f32 %v1459, %v1656
      %v1658 = vpop.f32.mrb[0].mxu0
      %v1659 = vadd.f32 %v1463, %v1658
      %1660 = vmatprep.mubr.f32.mxu0 %v1151
      %1661 = vmatmul.mubr.f32.gmra.mrb[0].mxu0 %v1150
      %v1662 = vpop.f32.mrb[0].mxu0
      %v1663 = vadd.f32 %v1459, %v1662
      %v1664 = vpop.f32.mrb[0].mxu0
      %v1665 = vadd.f32 %v1463, %v1664
      %1666 = vmatprep.mubr.f32.mxu0 %v1155
      %1667 = vmatmul.mubr.f32.gmra.mrb[0].mxu0 %v1154
      %v1668 = vpop.f32.mrb[0].mxu0
      %v1669 = vadd.f32 %v1459, %v1668
      %v1670 = vpop.f32.mrb[0].mxu0
      %v1671 = vadd.f32 %v1463, %v1670
      %1672 = vmatprep.mubr.f32.mxu0 %v1159
      %1673 = vmatmul.mubr.f32.gmra.mrb[0].mxu0 %v1158
      %v1674 = vpop.f32.mrb[0].mxu0
      %v1675 = vadd.f32 %v1459, %v1674
      %v1676 = vpop.f32.mrb[0].mxu0
      %v1677 = vadd.f32 %v1463, %v1676
      %1678 = vmatprep.mubr.f32.mxu0 %v1163
      %1679 = vmatmul.mubr.f32.gmra.mrb[0].mxu0 %v1162
      %v1680 = vpop.f32.mrb[0].mxu0
      %v1681 = vadd.f32 %v1459, %v1680
      %v1682 = vpop.f32.mrb[0].mxu0
      %v1683 = vadd.f32 %v1463, %v1682
      %1684 = vmatprep.mubr.f32.mxu0 %v1167
      %1685 = vmatmul.mubr.f32.gmra.mrb[0].mxu0 %v1166
      %v1686 = vpop.f32.mrb[0].mxu0
      %v1687 = vadd.f32 %v1459, %v1686
      %v1688 = vpop.f32.mrb[0].mxu0
      %v1689 = vadd.f32 %v1463, %v1688
      %1690 = vmatprep.mubr.f32.mxu0 %v1171
      %1691 = vmatmul.mubr.f32.gmra.mrb[0].mxu0 %v1170
      %v1692 = vpop.f32.mrb[0].mxu0
      %v1693 = vadd.f32 %v1459, %v1692
      %v1694 = vpop.f32.mrb[0].mxu0
      %v1695 = vadd.f32 %v1463, %v1694
      %1696 = vmatprep.mubr.f32.mxu0 %v1175
      %1697 = vmatmul.mubr.f32.gmra.mrb[0].mxu0 %v1174
      %v1698 = vpop.f32.mrb[0].mxu0
      %v1699 = vadd.f32 %v1459, %v1698
      %v1700 = vpop.f32.mrb[0].mxu0
      %v1701 = vadd.f32 %v1463, %v1700
      %1702 = vmatprep.mubr.f32.mxu0 %v1179
      %1703 = vmatmul.mubr.f32.gmra.mrb[0].mxu0 %v1178
      %v1704 = vpop.f32.mrb[0].mxu0
      %v1705 = vadd.f32 %v1459, %v1704
      %v1706 = vpop.f32.mrb[0].mxu0
      %v1707 = vadd.f32 %v1463, %v1706
      %1708 = vmatprep.mubr.f32.mxu0 %v1183
      %1709 = vmatmul.mubr.f32.gmra.mrb[0].mxu0 %v1182
      %v1710 = vpop.f32.mrb[0].mxu0
      %v1711 = vadd.f32 %v1459, %v1710
      %v1712 = vpop.f32.mrb[0].mxu0
      %v1713 = vadd.f32 %v1463, %v1712
      %1714 = vmatprep.mubr.f32.mxu0 %v1187
      %1715 = vmatmul.mubr.f32.gmra.mrb[0].mxu0 %v1186
      %v1716 = vpop.f32.mrb[0].mxu0
      %v1717 = vadd.f32 %v1459, %v1716
      %v1718 = vpop.f32.mrb[0].mxu0
      %v1719 = vadd.f32 %v1463, %v1718
      %1720 = vmatprep.mubr.f32.mxu0 %v1191
      %1721 = vmatmul.mubr.f32.gmra.mrb[0].mxu0 %v1190
      %v1722 = vpop.f32.mrb[0].mxu0
      %v1723 = vadd.f32 %v1459, %v1722
      %v1724 = vpop.f32.mrb[0].mxu0
      %v1725 = vadd.f32 %v1463, %v1724
      %1726 = vmatprep.mubr.f32.mxu0 %v1195
      %1727 = vmatmul.mubr.f32.gmra.mrb[0].mxu0 %v1194
      %v1728 = vpop.f32.mrb[0].mxu0
      %v1729 = vadd.f32 %v1459, %v1728
      %v1730 = vpop.f32.mrb[0].mxu0
      %v1731 = vadd.f32 %v1463, %v1730
      %1732 = vdwg.mxu0
      %1733 = vmatprep.subr.mxu0 %v1327
      %1734 = vmatpush1.msra.mxu0 %v1326
      %1735 = vmatprep.subr.mxu0 %v1331
      %1736 = vmatpush1.msra.mxu0 %v1330
      %1737 = vmatprep.subr.mxu0 %v1335
      %1738 = vmatpush1.msra.mxu0 %v1334
      %1739 = vmatprep.subr.mxu0 %v1339
      %1740 = vmatpush1.msra.mxu0 %v1338
      %1741 = vmatprep.subr.mxu0 %v1343
      %1742 = vmatpush1.msra.mxu0 %v1342
      %1743 = vmatprep.subr.mxu0 %v1347
      %1744 = vmatpush1.msra.mxu0 %v1346
      %1745 = vmatprep.subr.mxu0 %v1351
      %1746 = vmatpush1.msra.mxu0 %v1350
      %1747 = vmatprep.subr.mxu0 %v1355
      %1748 = vmatpush1.msra.mxu0 %v1354
      %1749 = vmatprep.subr.mxu0 %v1359
      %1750 = vmatpush1.msra.mxu0 %v1358
      %1751 = vmatprep.subr.mxu0 %v1363
      %1752 = vmatpush1.msra.mxu0 %v1362
      %1753 = vmatprep.subr.mxu0 %v1367
      %1754 = vmatpush1.msra.mxu0 %v1366
      %1755 = vmatprep.subr.mxu0 %v1371
      %1756 = vmatpush1.msra.mxu0 %v1370
      %1757 = vmatprep.subr.mxu0 %v1375
      %1758 = vmatpush1.msra.mxu0 %v1374
      %1759 = vmatprep.subr.mxu0 %v1379
      %1760 = vmatpush1.msra.mxu0 %v1378
      %1761 = vmatprep.subr.mxu0 %v1383
      %1762 = vmatpush1.msra.mxu0 %v1382
      %1763 = vmatprep.subr.mxu0 %v1387
      %1764 = vmatpush1.msra.mxu0 %v1386
      %1765 = vmatprep.subr.mxu0 %v1391
      %1766 = vmatpush1.msra.mxu0 %v1390
      %1767 = vmatprep.subr.mxu0 %v1395
      %1768 = vmatpush1.msra.mxu0 %v1394
      %1769 = vmatprep.subr.mxu0 %v1399
      %1770 = vmatpush1.msra.mxu0 %v1398
      %1771 = vmatprep.subr.mxu0 %v1403
      %1772 = vmatpush1.msra.mxu0 %v1402
      %1773 = vmatprep.subr.mxu0 %v1407
      %1774 = vmatpush1.msra.mxu0 %v1406
      %1775 = vmatprep.subr.mxu0 %v1411
      %1776 = vmatpush1.msra.mxu0 %v1410
      %1777 = vmatprep.subr.mxu0 %v1415
      %1778 = vmatpush1.msra.mxu0 %v1414
      %1779 = vmatprep.subr.mxu0 %v1419
      %1780 = vmatpush1.msra.mxu0 %v1418
      %1781 = vmatprep.subr.mxu0 %v1423
      %1782 = vmatpush1.msra.mxu0 %v1422
      %1783 = vmatprep.subr.mxu0 %v1427
      %1784 = vmatpush1.msra.mxu0 %v1426
      %1785 = vmatprep.subr.mxu0 %v1431
      %1786 = vmatpush1.msra.mxu0 %v1430
      %1787 = vmatprep.subr.mxu0 %v1435
      %1788 = vmatpush1.msra.mxu0 %v1434
      %1789 = vmatprep.subr.mxu0 %v1439
      %1790 = vmatpush1.msra.mxu0 %v1438
      %1791 = vmatprep.subr.mxu0 %v1443
      %1792 = vmatpush1.msra.mxu0 %v1442
      %1793 = vmatprep.subr.mxu0 %v1447
      %1794 = vmatpush1.msra.mxu0 %v1446
      %1795 = vmatprep.subr.mxu0 %v1451
      %1796 = vmatpush1.msra.mxu0 %v1450
      %1797 = vmatprep.mubr.f32.mxu0 %v1073
      %1798 = vmatmul.mubr.f32.gmra.mrb[0].mxu0 %v1072
      %v1799 = vpop.f32.mrb[0].mxu0
      %v1800 = vadd.f32 %v1543, %v1799
      %v1801 = vpop.f32.mrb[0].mxu0
      %v1802 = vadd.f32 %v1545, %v1801
      %1803 = vmatprep.mubr.f32.mxu0 %v1077
      %1804 = vmatmul.mubr.f32.gmra.mrb[0].mxu0 %v1076
      %v1805 = vpop.f32.mrb[0].mxu0
      %v1806 = vadd.f32 %v1549, %v1805
      %v1807 = vpop.f32.mrb[0].mxu0
      %v1808 = vadd.f32 %v1551, %v1807
      %1809 = vmatprep.mubr.f32.mxu0 %v1081
      %1810 = vmatmul.mubr.f32.gmra.mrb[0].mxu0 %v1080
      %v1811 = vpop.f32.mrb[0].mxu0
      %v1812 = vadd.f32 %v1555, %v1811
      %v1813 = vpop.f32.mrb[0].mxu0
      %v1814 = vadd.f32 %v1557, %v1813
      %1815 = vmatprep.mubr.f32.mxu0 %v1085
      %1816 = vmatmul.mubr.f32.gmra.mrb[0].mxu0 %v1084
      %v1817 = vpop.f32.mrb[0].mxu0
      %v1818 = vadd.f32 %v1561, %v1817
      %v1819 = vpop.f32.mrb[0].mxu0
      %v1820 = vadd.f32 %v1563, %v1819
      %1821 = vmatprep.mubr.f32.mxu0 %v1089
      %1822 = vmatmul.mubr.f32.gmra.mrb[0].mxu0 %v1088
      %v1823 = vpop.f32.mrb[0].mxu0
      %v1824 = vadd.f32 %v1567, %v1823
      %v1825 = vpop.f32.mrb[0].mxu0
      %v1826 = vadd.f32 %v1569, %v1825
      %1827 = vmatprep.mubr.f32.mxu0 %v1093
      %1828 = vmatmul.mubr.f32.gmra.mrb[0].mxu0 %v1092
      %v1829 = vpop.f32.mrb[0].mxu0
      %v1830 = vadd.f32 %v1573, %v1829
      %v1831 = vpop.f32.mrb[0].mxu0
      %v1832 = vadd.f32 %v1575, %v1831
      %1833 = vmatprep.mubr.f32.mxu0 %v1097
      %1834 = vmatmul.mubr.f32.gmra.mrb[0].mxu0 %v1096
      %v1835 = vpop.f32.mrb[0].mxu0
      %v1836 = vadd.f32 %v1579, %v1835
      %v1837 = vpop.f32.mrb[0].mxu0
      %v1838 = vadd.f32 %v1581, %v1837
      %1839 = vmatprep.mubr.f32.mxu0 %v1101
      %1840 = vmatmul.mubr.f32.gmra.mrb[0].mxu0 %v1100
      %v1841 = vpop.f32.mrb[0].mxu0
      %v1842 = vadd.f32 %v1585, %v1841
      %v1843 = vpop.f32.mrb[0].mxu0
      %v1844 = vadd.f32 %v1587, %v1843
      %1845 = vmatprep.mubr.f32.mxu0 %v1105
      %1846 = vmatmul.mubr.f32.gmra.mrb[0].mxu0 %v1104
      %v1847 = vpop.f32.mrb[0].mxu0
      %v1848 = vadd.f32 %v1591, %v1847
      %v1849 = vpop.f32.mrb[0].mxu0
      %v1850 = vadd.f32 %v1593, %v1849
      %1851 = vmatprep.mubr.f32.mxu0 %v1109
      %1852 = vmatmul.mubr.f32.gmra.mrb[0].mxu0 %v1108
      %v1853 = vpop.f32.mrb[0].mxu0
      %v1854 = vadd.f32 %v1597, %v1853
      %v1855 = vpop.f32.mrb[0].mxu0
      %v1856 = vadd.f32 %v1599, %v1855
      %1857 = vmatprep.mubr.f32.mxu0 %v1113
      %1858 = vmatmul.mubr.f32.gmra.mrb[0].mxu0 %v1112
      %v1859 = vpop.f32.mrb[0].mxu0
      %v1860 = vadd.f32 %v1603, %v1859
      %v1861 = vpop.f32.mrb[0].mxu0
      %v1862 = vadd.f32 %v1605, %v1861
      %1863 = vmatprep.mubr.f32.mxu0 %v1117
      %1864 = vmatmul.mubr.f32.gmra.mrb[0].mxu0 %v1116
      %v1865 = vpop.f32.mrb[0].mxu0
      %v1866 = vadd.f32 %v1609, %v1865
      %v1867 = vpop.f32.mrb[0].mxu0
      %v1868 = vadd.f32 %v1611, %v1867
      %1869 = vmatprep.mubr.f32.mxu0 %v1121
      %1870 = vmatmul.mubr.f32.gmra.mrb[0].mxu0 %v1120
      %v1871 = vpop.f32.mrb[0].mxu0
      %v1872 = vadd.f32 %v1615, %v1871
      %v1873 = vpop.f32.mrb[0].mxu0
      %v1874 = vadd.f32 %v1617, %v1873
      %1875 = vmatprep.mubr.f32.mxu0 %v1125
      %1876 = vmatmul.mubr.f32.gmra.mrb[0].mxu0 %v1124
      %v1877 = vpop.f32.mrb[0].mxu0
      %v1878 = vadd.f32 %v1621, %v1877
      %v1879 = vpop.f32.mrb[0].mxu0
      %v1880 = vadd.f32 %v1623, %v1879
      %1881 = vmatprep.mubr.f32.mxu0 %v1129
      %1882 = vmatmul.mubr.f32.gmra.mrb[0].mxu0 %v1128
      %v1883 = vpop.f32.mrb[0].mxu0
      %v1884 = vadd.f32 %v1627, %v1883
      %v1885 = vpop.f32.mrb[0].mxu0
      %v1886 = vadd.f32 %v1629, %v1885
      %1887 = vmatprep.mubr.f32.mxu0 %v1133
      %1888 = vmatmul.mubr.f32.gmra.mrb[0].mxu0 %v1132
      %v1889 = vpop.f32.mrb[0].mxu0
      %v1890 = vadd.f32 %v1633, %v1889
      %v1891 = vpop.f32.mrb[0].mxu0
      %v1892 = vadd.f32 %v1635, %v1891
      %1893 = vmatprep.mubr.f32.mxu0 %v1137
      %1894 = vmatmul.mubr.f32.gmra.mrb[0].mxu0 %v1136
      %v1895 = vpop.f32.mrb[0].mxu0
      %v1896 = vadd.f32 %v1639, %v1895
      %v1897 = vpop.f32.mrb[0].mxu0
      %v1898 = vadd.f32 %v1641, %v1897
      %1899 = vmatprep.mubr.f32.mxu0 %v1141
      %1900 = vmatmul.mubr.f32.gmra.mrb[0].mxu0 %v1140
      %v1901 = vpop.f32.mrb[0].mxu0
      %v1902 = vadd.f32 %v1645, %v1901
      %v1903 = vpop.f32.mrb[0].mxu0
      %v1904 = vadd.f32 %v1647, %v1903
      %1905 = vmatprep.mubr.f32.mxu0 %v1145
      %1906 = vmatmul.mubr.f32.gmra.mrb[0].mxu0 %v1144
      %v1907 = vpop.f32.mrb[0].mxu0
      %v1908 = vadd.f32 %v1651, %v1907
      %v1909 = vpop.f32.mrb[0].mxu0
      %v1910 = vadd.f32 %v1653, %v1909
      %1911 = vmatprep.mubr.f32.mxu0 %v1149
      %1912 = vmatmul.mubr.f32.gmra.mrb[0].mxu0 %v1148
      %v1913 = vpop.f32.mrb[0].mxu0
      %v1914 = vadd.f32 %v1657, %v1913
      %v1915 = vpop.f32.mrb[0].mxu0
      %v1916 = vadd.f32 %v1659, %v1915
      %1917 = vmatprep.mubr.f32.mxu0 %v1153
      %1918 = vmatmul.mubr.f32.gmra.mrb[0].mxu0 %v1152
      %v1919 = vpop.f32.mrb[0].mxu0
      %v1920 = vadd.f32 %v1663, %v1919
      %v1921 = vpop.f32.mrb[0].mxu0
      %v1922 = vadd.f32 %v1665, %v1921
      %1923 = vmatprep.mubr.f32.mxu0 %v1157
      %1924 = vmatmul.mubr.f32.gmra.mrb[0].mxu0 %v1156
      %v1925 = vpop.f32.mrb[0].mxu0
      %v1926 = vadd.f32 %v1669, %v1925
      %v1927 = vpop.f32.mrb[0].mxu0
      %v1928 = vadd.f32 %v1671, %v1927
      %1929 = vmatprep.mubr.f32.mxu0 %v1161
      %1930 = vmatmul.mubr.f32.gmra.mrb[0].mxu0 %v1160
      %v1931 = vpop.f32.mrb[0].mxu0
      %v1932 = vadd.f32 %v1675, %v1931
      %v1933 = vpop.f32.mrb[0].mxu0
      %v1934 = vadd.f32 %v1677, %v1933
      %1935 = vmatprep.mubr.f32.mxu0 %v1165
      %1936 = vmatmul.mubr.f32.gmra.mrb[0].mxu0 %v1164
      %v1937 = vpop.f32.mrb[0].mxu0
      %v1938 = vadd.f32 %v1681, %v1937
      %v1939 = vpop.f32.mrb[0].mxu0
      %v1940 = vadd.f32 %v1683, %v1939
      %1941 = vmatprep.mubr.f32.mxu0 %v1169
      %1942 = vmatmul.mubr.f32.gmra.mrb[0].mxu0 %v1168
      %v1943 = vpop.f32.mrb[0].mxu0
      %v1944 = vadd.f32 %v1687, %v1943
      %v1945 = vpop.f32.mrb[0].mxu0
      %v1946 = vadd.f32 %v1689, %v1945
      %1947 = vmatprep.mubr.f32.mxu0 %v1173
      %1948 = vmatmul.mubr.f32.gmra.mrb[0].mxu0 %v1172
      %v1949 = vpop.f32.mrb[0].mxu0
      %v1950 = vadd.f32 %v1693, %v1949
      %v1951 = vpop.f32.mrb[0].mxu0
      %v1952 = vadd.f32 %v1695, %v1951
      %1953 = vmatprep.mubr.f32.mxu0 %v1177
      %1954 = vmatmul.mubr.f32.gmra.mrb[0].mxu0 %v1176
      %v1955 = vpop.f32.mrb[0].mxu0
      %v1956 = vadd.f32 %v1699, %v1955
      %v1957 = vpop.f32.mrb[0].mxu0
      %v1958 = vadd.f32 %v1701, %v1957
      %1959 = vmatprep.mubr.f32.mxu0 %v1181
      %1960 = vmatmul.mubr.f32.gmra.mrb[0].mxu0 %v1180
      %v1961 = vpop.f32.mrb[0].mxu0
      %v1962 = vadd.f32 %v1705, %v1961
      %v1963 = vpop.f32.mrb[0].mxu0
      %v1964 = vadd.f32 %v1707, %v1963
      %1965 = vmatprep.mubr.f32.mxu0 %v1185
      %1966 = vmatmul.mubr.f32.gmra.mrb[0].mxu0 %v1184
      %v1967 = vpop.f32.mrb[0].mxu0
      %v1968 = vadd.f32 %v1711, %v1967
      %v1969 = vpop.f32.mrb[0].mxu0
      %v1970 = vadd.f32 %v1713, %v1969
      %1971 = vmatprep.mubr.f32.mxu0 %v1189
      %1972 = vmatmul.mubr.f32.gmra.mrb[0].mxu0 %v1188
      %v1973 = vpop.f32.mrb[0].mxu0
      %v1974 = vadd.f32 %v1717, %v1973
      %v1975 = vpop.f32.mrb[0].mxu0
      %v1976 = vadd.f32 %v1719, %v1975
      %1977 = vmatprep.mubr.f32.mxu0 %v1193
      %1978 = vmatmul.mubr.f32.gmra.mrb[0].mxu0 %v1192
      %v1979 = vpop.f32.mrb[0].mxu0
      %v1980 = vadd.f32 %v1723, %v1979
      %v1981 = vpop.f32.mrb[0].mxu0
      %v1982 = vadd.f32 %v1725, %v1981
      %1983 = vmatprep.mubr.f32.mxu0 %v1197
      %1984 = vmatmul.mubr.f32.gmra.mrb[0].mxu0 %v1196
      %v1985 = vpop.f32.mrb[0].mxu0
      %v1986 = vadd.f32 %v1729, %v1985
      %v1987 = vpop.f32.mrb[0].mxu0
      %v1988 = vadd.f32 %v1731, %v1987
      %1989 = vdwg.mxu0
      %1990 = vmatprep.subr.mxu0 %v1201
      %1991 = vmatpush1.msra.mxu0 %v1200
      %1992 = vmatprep.subr.mxu0 %v1205
      %1993 = vmatpush1.msra.mxu0 %v1204
      %1994 = vmatprep.subr.mxu0 %v1209
      %1995 = vmatpush1.msra.mxu0 %v1208
      %1996 = vmatprep.subr.mxu0 %v1213
      %1997 = vmatpush1.msra.mxu0 %v1212
      %1998 = vmatprep.subr.mxu0 %v1217
      %1999 = vmatpush1.msra.mxu0 %v1216
      %2000 = vmatprep.subr.mxu0 %v1221
      %2001 = vmatpush1.msra.mxu0 %v1220
      %2002 = vmatprep.subr.mxu0 %v1225
      %2003 = vmatpush1.msra.mxu0 %v1224
      %2004 = vmatprep.subr.mxu0 %v1229
      %2005 = vmatpush1.msra.mxu0 %v1228
      %2006 = vmatprep.subr.mxu0 %v1233
      %2007 = vmatpush1.msra.mxu0 %v1232
      %2008 = vmatprep.subr.mxu0 %v1237
      %2009 = vmatpush1.msra.mxu0 %v1236
      %2010 = vmatprep.subr.mxu0 %v1241
      %2011 = vmatpush1.msra.mxu0 %v1240
      %2012 = vmatprep.subr.mxu0 %v1245
      %2013 = vmatpush1.msra.mxu0 %v1244
      %2014 = vmatprep.subr.mxu0 %v1249
      %2015 = vmatpush1.msra.mxu0 %v1248
      %2016 = vmatprep.subr.mxu0 %v1253
      %2017 = vmatpush1.msra.mxu0 %v1252
      %2018 = vmatprep.subr.mxu0 %v1257
      %2019 = vmatpush1.msra.mxu0 %v1256
      %2020 = vmatprep.subr.mxu0 %v1261
      %2021 = vmatpush1.msra.mxu0 %v1260
      %2022 = vmatprep.subr.mxu0 %v1265
      %2023 = vmatpush1.msra.mxu0 %v1264
      %2024 = vmatprep.subr.mxu0 %v1269
      %2025 = vmatpush1.msra.mxu0 %v1268
      %2026 = vmatprep.subr.mxu0 %v1273
      %2027 = vmatpush1.msra.mxu0 %v1272
      %2028 = vmatprep.subr.mxu0 %v1277
      %2029 = vmatpush1.msra.mxu0 %v1276
      %2030 = vmatprep.subr.mxu0 %v1281
      %2031 = vmatpush1.msra.mxu0 %v1280
      %2032 = vmatprep.subr.mxu0 %v1285
      %2033 = vmatpush1.msra.mxu0 %v1284
      %2034 = vmatprep.subr.mxu0 %v1289
      %2035 = vmatpush1.msra.mxu0 %v1288
      %2036 = vmatprep.subr.mxu0 %v1293
      %2037 = vmatpush1.msra.mxu0 %v1292
      %2038 = vmatprep.subr.mxu0 %v1297
      %2039 = vmatpush1.msra.mxu0 %v1296
      %2040 = vmatprep.subr.mxu0 %v1301
      %2041 = vmatpush1.msra.mxu0 %v1300
      %2042 = vmatprep.subr.mxu0 %v1305
      %2043 = vmatpush1.msra.mxu0 %v1304
      %2044 = vmatprep.subr.mxu0 %v1309
      %2045 = vmatpush1.msra.mxu0 %v1308
      %2046 = vmatprep.subr.mxu0 %v1313
      %2047 = vmatpush1.msra.mxu0 %v1312
      %2048 = vmatprep.subr.mxu0 %v1317
      %2049 = vmatpush1.msra.mxu0 %v1316
      %2050 = vmatprep.subr.mxu0 %v1321
      %2051 = vmatpush1.msra.mxu0 %v1320
      %2052 = vmatprep.subr.mxu0 %v1325
      %2053 = vmatpush1.msra.mxu0 %v1324
      %2054 = vmatprep.mubr.f32.mxu0 %v1071
      %2055 = vmatmul.mubr.f32.gmra.mrb[0].mxu0 %v1070
      %v2056 = vpop.f32.mrb[0].mxu0
      %v2057 = vadd.f32 %v1467, %v2056
      %v2058 = vpop.f32.mrb[0].mxu0
      %v2059 = vadd.f32 %v1471, %v2058
      %2060 = vmatprep.mubr.f32.mxu0 %v1075
      %2061 = vmatmul.mubr.f32.gmra.mrb[0].mxu0 %v1074
      %v2062 = vpop.f32.mrb[0].mxu0
      %v2063 = vadd.f32 %v1467, %v2062
      %v2064 = vpop.f32.mrb[0].mxu0
      %v2065 = vadd.f32 %v1471, %v2064
      %2066 = vmatprep.mubr.f32.mxu0 %v1079
      %2067 = vmatmul.mubr.f32.gmra.mrb[0].mxu0 %v1078
      %v2068 = vpop.f32.mrb[0].mxu0
      %v2069 = vadd.f32 %v1467, %v2068
      %v2070 = vpop.f32.mrb[0].mxu0
      %v2071 = vadd.f32 %v1471, %v2070
      %2072 = vmatprep.mubr.f32.mxu0 %v1083
      %2073 = vmatmul.mubr.f32.gmra.mrb[0].mxu0 %v1082
      %v2074 = vpop.f32.mrb[0].mxu0
      %v2075 = vadd.f32 %v1467, %v2074
      %v2076 = vpop.f32.mrb[0].mxu0
      %v2077 = vadd.f32 %v1471, %v2076
      %2078 = vmatprep.mubr.f32.mxu0 %v1087
      %2079 = vmatmul.mubr.f32.gmra.mrb[0].mxu0 %v1086
      %v2080 = vpop.f32.mrb[0].mxu0
      %v2081 = vadd.f32 %v1467, %v2080
      %v2082 = vpop.f32.mrb[0].mxu0
      %v2083 = vadd.f32 %v1471, %v2082
      %2084 = vmatprep.mubr.f32.mxu0 %v1091
      %2085 = vmatmul.mubr.f32.gmra.mrb[0].mxu0 %v1090
      %v2086 = vpop.f32.mrb[0].mxu0
      %v2087 = vadd.f32 %v1467, %v2086
      %v2088 = vpop.f32.mrb[0].mxu0
      %v2089 = vadd.f32 %v1471, %v2088
      %2090 = vmatprep.mubr.f32.mxu0 %v1095
      %2091 = vmatmul.mubr.f32.gmra.mrb[0].mxu0 %v1094
      %v2092 = vpop.f32.mrb[0].mxu0
      %v2093 = vadd.f32 %v1467, %v2092
      %v2094 = vpop.f32.mrb[0].mxu0
      %v2095 = vadd.f32 %v1471, %v2094
      %2096 = vmatprep.mubr.f32.mxu0 %v1099
      %2097 = vmatmul.mubr.f32.gmra.mrb[0].mxu0 %v1098
      %v2098 = vpop.f32.mrb[0].mxu0
      %v2099 = vadd.f32 %v1467, %v2098
      %v2100 = vpop.f32.mrb[0].mxu0
      %v2101 = vadd.f32 %v1471, %v2100
      %2102 = vmatprep.mubr.f32.mxu0 %v1103
      %2103 = vmatmul.mubr.f32.gmra.mrb[0].mxu0 %v1102
      %v2104 = vpop.f32.mrb[0].mxu0
      %v2105 = vadd.f32 %v1467, %v2104
      %v2106 = vpop.f32.mrb[0].mxu0
      %v2107 = vadd.f32 %v1471, %v2106
      %2108 = vmatprep.mubr.f32.mxu0 %v1107
      %2109 = vmatmul.mubr.f32.gmra.mrb[0].mxu0 %v1106
      %v2110 = vpop.f32.mrb[0].mxu0
      %v2111 = vadd.f32 %v1467, %v2110
      %v2112 = vpop.f32.mrb[0].mxu0
      %v2113 = vadd.f32 %v1471, %v2112
      %2114 = vmatprep.mubr.f32.mxu0 %v1111
      %2115 = vmatmul.mubr.f32.gmra.mrb[0].mxu0 %v1110
      %v2116 = vpop.f32.mrb[0].mxu0
      %v2117 = vadd.f32 %v1467, %v2116
      %v2118 = vpop.f32.mrb[0].mxu0
      %v2119 = vadd.f32 %v1471, %v2118
      %2120 = vmatprep.mubr.f32.mxu0 %v1115
      %2121 = vmatmul.mubr.f32.gmra.mrb[0].mxu0 %v1114
      %v2122 = vpop.f32.mrb[0].mxu0
      %v2123 = vadd.f32 %v1467, %v2122
      %v2124 = vpop.f32.mrb[0].mxu0
      %v2125 = vadd.f32 %v1471, %v2124
      %2126 = vmatprep.mubr.f32.mxu0 %v1119
      %2127 = vmatmul.mubr.f32.gmra.mrb[0].mxu0 %v1118
      %v2128 = vpop.f32.mrb[0].mxu0
      %v2129 = vadd.f32 %v1467, %v2128
      %v2130 = vpop.f32.mrb[0].mxu0
      %v2131 = vadd.f32 %v1471, %v2130
      %2132 = vmatprep.mubr.f32.mxu0 %v1123
      %2133 = vmatmul.mubr.f32.gmra.mrb[0].mxu0 %v1122
      %v2134 = vpop.f32.mrb[0].mxu0
      %v2135 = vadd.f32 %v1467, %v2134
      %v2136 = vpop.f32.mrb[0].mxu0
      %v2137 = vadd.f32 %v1471, %v2136
      %2138 = vmatprep.mubr.f32.mxu0 %v1127
      %2139 = vmatmul.mubr.f32.gmra.mrb[0].mxu0 %v1126
      %v2140 = vpop.f32.mrb[0].mxu0
      %v2141 = vadd.f32 %v1467, %v2140
      %v2142 = vpop.f32.mrb[0].mxu0
      %v2143 = vadd.f32 %v1471, %v2142
      %2144 = vmatprep.mubr.f32.mxu0 %v1131
      %2145 = vmatmul.mubr.f32.gmra.mrb[0].mxu0 %v1130
      %v2146 = vpop.f32.mrb[0].mxu0
      %v2147 = vadd.f32 %v1467, %v2146
      %v2148 = vpop.f32.mrb[0].mxu0
      %v2149 = vadd.f32 %v1471, %v2148
      %2150 = vmatprep.mubr.f32.mxu0 %v1135
      %2151 = vmatmul.mubr.f32.gmra.mrb[0].mxu0 %v1134
      %v2152 = vpop.f32.mrb[0].mxu0
      %v2153 = vadd.f32 %v1467, %v2152
      %v2154 = vpop.f32.mrb[0].mxu0
      %v2155 = vadd.f32 %v1471, %v2154
      %2156 = vmatprep.mubr.f32.mxu0 %v1139
      %2157 = vmatmul.mubr.f32.gmra.mrb[0].mxu0 %v1138
      %v2158 = vpop.f32.mrb[0].mxu0
      %v2159 = vadd.f32 %v1467, %v2158
      %v2160 = vpop.f32.mrb[0].mxu0
      %v2161 = vadd.f32 %v1471, %v2160
      %2162 = vmatprep.mubr.f32.mxu0 %v1143
      %2163 = vmatmul.mubr.f32.gmra.mrb[0].mxu0 %v1142
      %v2164 = vpop.f32.mrb[0].mxu0
      %v2165 = vadd.f32 %v1467, %v2164
      %v2166 = vpop.f32.mrb[0].mxu0
      %v2167 = vadd.f32 %v1471, %v2166
      %2168 = vmatprep.mubr.f32.mxu0 %v1147
      %2169 = vmatmul.mubr.f32.gmra.mrb[0].mxu0 %v1146
      %v2170 = vpop.f32.mrb[0].mxu0
      %v2171 = vadd.f32 %v1467, %v2170
      %v2172 = vpop.f32.mrb[0].mxu0
      %v2173 = vadd.f32 %v1471, %v2172
      %2174 = vmatprep.mubr.f32.mxu0 %v1151
      %2175 = vmatmul.mubr.f32.gmra.mrb[0].mxu0 %v1150
      %v2176 = vpop.f32.mrb[0].mxu0
      %v2177 = vadd.f32 %v1467, %v2176
      %v2178 = vpop.f32.mrb[0].mxu0
      %v2179 = vadd.f32 %v1471, %v2178
      %2180 = vmatprep.mubr.f32.mxu0 %v1155
      %2181 = vmatmul.mubr.f32.gmra.mrb[0].mxu0 %v1154
      %v2182 = vpop.f32.mrb[0].mxu0
      %v2183 = vadd.f32 %v1467, %v2182
      %v2184 = vpop.f32.mrb[0].mxu0
      %v2185 = vadd.f32 %v1471, %v2184
      %2186 = vmatprep.mubr.f32.mxu0 %v1159
      %2187 = vmatmul.mubr.f32.gmra.mrb[0].mxu0 %v1158
      %v2188 = vpop.f32.mrb[0].mxu0
      %v2189 = vadd.f32 %v1467, %v2188
      %v2190 = vpop.f32.mrb[0].mxu0
      %v2191 = vadd.f32 %v1471, %v2190
      %2192 = vmatprep.mubr.f32.mxu0 %v1163
      %2193 = vmatmul.mubr.f32.gmra.mrb[0].mxu0 %v1162
      %v2194 = vpop.f32.mrb[0].mxu0
      %v2195 = vadd.f32 %v1467, %v2194
      %v2196 = vpop.f32.mrb[0].mxu0
      %v2197 = vadd.f32 %v1471, %v2196
      %2198 = vmatprep.mubr.f32.mxu0 %v1167
      %2199 = vmatmul.mubr.f32.gmra.mrb[0].mxu0 %v1166
      %v2200 = vpop.f32.mrb[0].mxu0
      %v2201 = vadd.f32 %v1467, %v2200
      %v2202 = vpop.f32.mrb[0].mxu0
      %v2203 = vadd.f32 %v1471, %v2202
      %2204 = vmatprep.mubr.f32.mxu0 %v1171
      %2205 = vmatmul.mubr.f32.gmra.mrb[0].mxu0 %v1170
      %v2206 = vpop.f32.mrb[0].mxu0
      %v2207 = vadd.f32 %v1467, %v2206
      %v2208 = vpop.f32.mrb[0].mxu0
      %v2209 = vadd.f32 %v1471, %v2208
      %2210 = vmatprep.mubr.f32.mxu0 %v1175
      %2211 = vmatmul.mubr.f32.gmra.mrb[0].mxu0 %v1174
      %v2212 = vpop.f32.mrb[0].mxu0
      %v2213 = vadd.f32 %v1467, %v2212
      %v2214 = vpop.f32.mrb[0].mxu0
      %v2215 = vadd.f32 %v1471, %v2214
      %2216 = vmatprep.mubr.f32.mxu0 %v1179
      %2217 = vmatmul.mubr.f32.gmra.mrb[0].mxu0 %v1178
      %v2218 = vpop.f32.mrb[0].mxu0
      %v2219 = vadd.f32 %v1467, %v2218
      %v2220 = vpop.f32.mrb[0].mxu0
      %v2221 = vadd.f32 %v1471, %v2220
      %2222 = vmatprep.mubr.f32.mxu0 %v1183
      %2223 = vmatmul.mubr.f32.gmra.mrb[0].mxu0 %v1182
      %v2224 = vpop.f32.mrb[0].mxu0
      %v2225 = vadd.f32 %v1467, %v2224
      %v2226 = vpop.f32.mrb[0].mxu0
      %v2227 = vadd.f32 %v1471, %v2226
      %2228 = vmatprep.mubr.f32.mxu0 %v1187
      %2229 = vmatmul.mubr.f32.gmra.mrb[0].mxu0 %v1186
      %v2230 = vpop.f32.mrb[0].mxu0
      %v2231 = vadd.f32 %v1467, %v2230
      %v2232 = vpop.f32.mrb[0].mxu0
      %v2233 = vadd.f32 %v1471, %v2232
      %2234 = vmatprep.mubr.f32.mxu0 %v1191
      %2235 = vmatmul.mubr.f32.gmra.mrb[0].mxu0 %v1190
      %v2236 = vpop.f32.mrb[0].mxu0
      %v2237 = vadd.f32 %v1467, %v2236
      %v2238 = vpop.f32.mrb[0].mxu0
      %v2239 = vadd.f32 %v1471, %v2238
      %2240 = vmatprep.mubr.f32.mxu0 %v1195
      %2241 = vmatmul.mubr.f32.gmra.mrb[0].mxu0 %v1194
      %v2242 = vpop.f32.mrb[0].mxu0
      %v2243 = vadd.f32 %v1467, %v2242
      %v2244 = vpop.f32.mrb[0].mxu0
      %v2245 = vadd.f32 %v1471, %v2244
      %2246 = vdwg.mxu0
      %2247 = vmatprep.subr.mxu0 %v1329
      %2248 = vmatpush1.msra.mxu0 %v1328
      %2249 = vmatprep.subr.mxu0 %v1333
      %2250 = vmatpush1.msra.mxu0 %v1332
      %2251 = vmatprep.subr.mxu0 %v1337
      %2252 = vmatpush1.msra.mxu0 %v1336
      %2253 = vmatprep.subr.mxu0 %v1341
      %2254 = vmatpush1.msra.mxu0 %v1340
      %2255 = vmatprep.subr.mxu0 %v1345
      %2256 = vmatpush1.msra.mxu0 %v1344
      %2257 = vmatprep.subr.mxu0 %v1349
      %2258 = vmatpush1.msra.mxu0 %v1348
      %2259 = vmatprep.subr.mxu0 %v1353
      %2260 = vmatpush1.msra.mxu0 %v1352
      %2261 = vmatprep.subr.mxu0 %v1357
      %2262 = vmatpush1.msra.mxu0 %v1356
      %2263 = vmatprep.subr.mxu0 %v1361
      %2264 = vmatpush1.msra.mxu0 %v1360
      %2265 = vmatprep.subr.mxu0 %v1365
      %2266 = vmatpush1.msra.mxu0 %v1364
      %2267 = vmatprep.subr.mxu0 %v1369
      %2268 = vmatpush1.msra.mxu0 %v1368
      %2269 = vmatprep.subr.mxu0 %v1373
      %2270 = vmatpush1.msra.mxu0 %v1372
      %2271 = vmatprep.subr.mxu0 %v1377
      %2272 = vmatpush1.msra.mxu0 %v1376
      %2273 = vmatprep.subr.mxu0 %v1381
      %2274 = vmatpush1.msra.mxu0 %v1380
      %2275 = vmatprep.subr.mxu0 %v1385
      %2276 = vmatpush1.msra.mxu0 %v1384
      %2277 = vmatprep.subr.mxu0 %v1389
      %2278 = vmatpush1.msra.mxu0 %v1388
      %2279 = vmatprep.subr.mxu0 %v1393
      %2280 = vmatpush1.msra.mxu0 %v1392
      %2281 = vmatprep.subr.mxu0 %v1397
      %2282 = vmatpush1.msra.mxu0 %v1396
      %2283 = vmatprep.subr.mxu0 %v1401
      %2284 = vmatpush1.msra.mxu0 %v1400
      %2285 = vmatprep.subr.mxu0 %v1405
      %2286 = vmatpush1.msra.mxu0 %v1404
      %2287 = vmatprep.subr.mxu0 %v1409
      %2288 = vmatpush1.msra.mxu0 %v1408
      %2289 = vmatprep.subr.mxu0 %v1413
      %2290 = vmatpush1.msra.mxu0 %v1412
      %2291 = vmatprep.subr.mxu0 %v1417
      %2292 = vmatpush1.msra.mxu0 %v1416
      %2293 = vmatprep.subr.mxu0 %v1421
      %2294 = vmatpush1.msra.mxu0 %v1420
      %2295 = vmatprep.subr.mxu0 %v1425
      %2296 = vmatpush1.msra.mxu0 %v1424
      %2297 = vmatprep.subr.mxu0 %v1429
      %2298 = vmatpush1.msra.mxu0 %v1428
      %2299 = vmatprep.subr.mxu0 %v1433
      %2300 = vmatpush1.msra.mxu0 %v1432
      %2301 = vmatprep.subr.mxu0 %v1437
      %2302 = vmatpush1.msra.mxu0 %v1436
      %2303 = vmatprep.subr.mxu0 %v1441
      %2304 = vmatpush1.msra.mxu0 %v1440
      %2305 = vmatprep.subr.mxu0 %v1445
      %2306 = vmatpush1.msra.mxu0 %v1444
      %2307 = vmatprep.subr.mxu0 %v1449
      %2308 = vmatpush1.msra.mxu0 %v1448
      %2309 = vmatprep.subr.mxu0 %v1453
      %2310 = vmatpush1.msra.mxu0 %v1452
      %2311 = vmatprep.mubr.f32.mxu0 %v1073
      %2312 = vmatmul.mubr.f32.gmra.mrb[0].mxu0 %v1072
      %v2313 = vpop.f32.mrb[0].mxu0
      %v2314 = vadd.f32 %v2057, %v2313
      %v2315 = vpop.f32.mrb[0].mxu0
      %v2316 = vadd.f32 %v2059, %v2315
      %2317 = vmatprep.mubr.f32.mxu0 %v1077
      %2318 = vmatmul.mubr.f32.gmra.mrb[0].mxu0 %v1076
      %v2319 = vpop.f32.mrb[0].mxu0
      %v2320 = vadd.f32 %v2063, %v2319
      %v2321 = vpop.f32.mrb[0].mxu0
      %v2322 = vadd.f32 %v2065, %v2321
      %2323 = vmatprep.mubr.f32.mxu0 %v1081
      %2324 = vmatmul.mubr.f32.gmra.mrb[0].mxu0 %v1080
      %v2325 = vpop.f32.mrb[0].mxu0
      %v2326 = vadd.f32 %v2069, %v2325
      %v2327 = vpop.f32.mrb[0].mxu0
      %v2328 = vadd.f32 %v2071, %v2327
      %2329 = vmatprep.mubr.f32.mxu0 %v1085
      %2330 = vmatmul.mubr.f32.gmra.mrb[0].mxu0 %v1084
      %v2331 = vpop.f32.mrb[0].mxu0
      %v2332 = vadd.f32 %v2075, %v2331
      %v2333 = vpop.f32.mrb[0].mxu0
      %v2334 = vadd.f32 %v2077, %v2333
      %2335 = vmatprep.mubr.f32.mxu0 %v1089
      %2336 = vmatmul.mubr.f32.gmra.mrb[0].mxu0 %v1088
      %v2337 = vpop.f32.mrb[0].mxu0
      %v2338 = vadd.f32 %v2081, %v2337
      %v2339 = vpop.f32.mrb[0].mxu0
      %v2340 = vadd.f32 %v2083, %v2339
      %2341 = vmatprep.mubr.f32.mxu0 %v1093
      %2342 = vmatmul.mubr.f32.gmra.mrb[0].mxu0 %v1092
      %v2343 = vpop.f32.mrb[0].mxu0
      %v2344 = vadd.f32 %v2087, %v2343
      %v2345 = vpop.f32.mrb[0].mxu0
      %v2346 = vadd.f32 %v2089, %v2345
      %2347 = vmatprep.mubr.f32.mxu0 %v1097
      %2348 = vmatmul.mubr.f32.gmra.mrb[0].mxu0 %v1096
      %v2349 = vpop.f32.mrb[0].mxu0
      %v2350 = vadd.f32 %v2093, %v2349
      %v2351 = vpop.f32.mrb[0].mxu0
      %v2352 = vadd.f32 %v2095, %v2351
      %2353 = vmatprep.mubr.f32.mxu0 %v1101
      %2354 = vmatmul.mubr.f32.gmra.mrb[0].mxu0 %v1100
      %v2355 = vpop.f32.mrb[0].mxu0
      %v2356 = vadd.f32 %v2099, %v2355
      %v2357 = vpop.f32.mrb[0].mxu0
      %v2358 = vadd.f32 %v2101, %v2357
      %2359 = vmatprep.mubr.f32.mxu0 %v1105
      %2360 = vmatmul.mubr.f32.gmra.mrb[0].mxu0 %v1104
      %v2361 = vpop.f32.mrb[0].mxu0
      %v2362 = vadd.f32 %v2105, %v2361
      %v2363 = vpop.f32.mrb[0].mxu0
      %v2364 = vadd.f32 %v2107, %v2363
      %2365 = vmatprep.mubr.f32.mxu0 %v1109
      %2366 = vmatmul.mubr.f32.gmra.mrb[0].mxu0 %v1108
      %v2367 = vpop.f32.mrb[0].mxu0
      %v2368 = vadd.f32 %v2111, %v2367
      %v2369 = vpop.f32.mrb[0].mxu0
      %v2370 = vadd.f32 %v2113, %v2369
      %2371 = vmatprep.mubr.f32.mxu0 %v1113
      %2372 = vmatmul.mubr.f32.gmra.mrb[0].mxu0 %v1112
      %v2373 = vpop.f32.mrb[0].mxu0
      %v2374 = vadd.f32 %v2117, %v2373
      %v2375 = vpop.f32.mrb[0].mxu0
      %v2376 = vadd.f32 %v2119, %v2375
      %2377 = vmatprep.mubr.f32.mxu0 %v1117
      %2378 = vmatmul.mubr.f32.gmra.mrb[0].mxu0 %v1116
      %v2379 = vpop.f32.mrb[0].mxu0
      %v2380 = vadd.f32 %v2123, %v2379
      %v2381 = vpop.f32.mrb[0].mxu0
      %v2382 = vadd.f32 %v2125, %v2381
      %2383 = vmatprep.mubr.f32.mxu0 %v1121
      %2384 = vmatmul.mubr.f32.gmra.mrb[0].mxu0 %v1120
      %v2385 = vpop.f32.mrb[0].mxu0
      %v2386 = vadd.f32 %v2129, %v2385
      %v2387 = vpop.f32.mrb[0].mxu0
      %v2388 = vadd.f32 %v2131, %v2387
      %2389 = vmatprep.mubr.f32.mxu0 %v1125
      %2390 = vmatmul.mubr.f32.gmra.mrb[0].mxu0 %v1124
      %v2391 = vpop.f32.mrb[0].mxu0
      %v2392 = vadd.f32 %v2135, %v2391
      %v2393 = vpop.f32.mrb[0].mxu0
      %v2394 = vadd.f32 %v2137, %v2393
      %2395 = vmatprep.mubr.f32.mxu0 %v1129
      %2396 = vmatmul.mubr.f32.gmra.mrb[0].mxu0 %v1128
      %v2397 = vpop.f32.mrb[0].mxu0
      %v2398 = vadd.f32 %v2141, %v2397
      %v2399 = vpop.f32.mrb[0].mxu0
      %v2400 = vadd.f32 %v2143, %v2399
      %2401 = vmatprep.mubr.f32.mxu0 %v1133
      %2402 = vmatmul.mubr.f32.gmra.mrb[0].mxu0 %v1132
      %v2403 = vpop.f32.mrb[0].mxu0
      %v2404 = vadd.f32 %v2147, %v2403
      %v2405 = vpop.f32.mrb[0].mxu0
      %v2406 = vadd.f32 %v2149, %v2405
      %2407 = vmatprep.mubr.f32.mxu0 %v1137
      %2408 = vmatmul.mubr.f32.gmra.mrb[0].mxu0 %v1136
      %v2409 = vpop.f32.mrb[0].mxu0
      %v2410 = vadd.f32 %v2153, %v2409
      %v2411 = vpop.f32.mrb[0].mxu0
      %v2412 = vadd.f32 %v2155, %v2411
      %2413 = vmatprep.mubr.f32.mxu0 %v1141
      %2414 = vmatmul.mubr.f32.gmra.mrb[0].mxu0 %v1140
      %v2415 = vpop.f32.mrb[0].mxu0
      %v2416 = vadd.f32 %v2159, %v2415
      %v2417 = vpop.f32.mrb[0].mxu0
      %v2418 = vadd.f32 %v2161, %v2417
      %2419 = vmatprep.mubr.f32.mxu0 %v1145
      %2420 = vmatmul.mubr.f32.gmra.mrb[0].mxu0 %v1144
      %v2421 = vpop.f32.mrb[0].mxu0
      %v2422 = vadd.f32 %v2165, %v2421
      %v2423 = vpop.f32.mrb[0].mxu0
      %v2424 = vadd.f32 %v2167, %v2423
      %2425 = vmatprep.mubr.f32.mxu0 %v1149
      %2426 = vmatmul.mubr.f32.gmra.mrb[0].mxu0 %v1148
      %v2427 = vpop.f32.mrb[0].mxu0
      %v2428 = vadd.f32 %v2171, %v2427
      %v2429 = vpop.f32.mrb[0].mxu0
      %v2430 = vadd.f32 %v2173, %v2429
      %2431 = vmatprep.mubr.f32.mxu0 %v1153
      %2432 = vmatmul.mubr.f32.gmra.mrb[0].mxu0 %v1152
      %v2433 = vpop.f32.mrb[0].mxu0
      %v2434 = vadd.f32 %v2177, %v2433
      %v2435 = vpop.f32.mrb[0].mxu0
      %v2436 = vadd.f32 %v2179, %v2435
      %2437 = vmatprep.mubr.f32.mxu0 %v1157
      %2438 = vmatmul.mubr.f32.gmra.mrb[0].mxu0 %v1156
      %v2439 = vpop.f32.mrb[0].mxu0
      %v2440 = vadd.f32 %v2183, %v2439
      %v2441 = vpop.f32.mrb[0].mxu0
      %v2442 = vadd.f32 %v2185, %v2441
      %2443 = vmatprep.mubr.f32.mxu0 %v1161
      %2444 = vmatmul.mubr.f32.gmra.mrb[0].mxu0 %v1160
      %v2445 = vpop.f32.mrb[0].mxu0
      %v2446 = vadd.f32 %v2189, %v2445
      %v2447 = vpop.f32.mrb[0].mxu0
      %v2448 = vadd.f32 %v2191, %v2447
      %2449 = vmatprep.mubr.f32.mxu0 %v1165
      %2450 = vmatmul.mubr.f32.gmra.mrb[0].mxu0 %v1164
      %v2451 = vpop.f32.mrb[0].mxu0
      %v2452 = vadd.f32 %v2195, %v2451
      %v2453 = vpop.f32.mrb[0].mxu0
      %v2454 = vadd.f32 %v2197, %v2453
      %2455 = vmatprep.mubr.f32.mxu0 %v1169
      %2456 = vmatmul.mubr.f32.gmra.mrb[0].mxu0 %v1168
      %v2457 = vpop.f32.mrb[0].mxu0
      %v2458 = vadd.f32 %v2201, %v2457
      %v2459 = vpop.f32.mrb[0].mxu0
      %v2460 = vadd.f32 %v2203, %v2459
      %2461 = vmatprep.mubr.f32.mxu0 %v1173
      %2462 = vmatmul.mubr.f32.gmra.mrb[0].mxu0 %v1172
      %v2463 = vpop.f32.mrb[0].mxu0
      %v2464 = vadd.f32 %v2207, %v2463
      %v2465 = vpop.f32.mrb[0].mxu0
      %v2466 = vadd.f32 %v2209, %v2465
      %2467 = vmatprep.mubr.f32.mxu0 %v1177
      %2468 = vmatmul.mubr.f32.gmra.mrb[0].mxu0 %v1176
      %v2469 = vpop.f32.mrb[0].mxu0
      %v2470 = vadd.f32 %v2213, %v2469
      %v2471 = vpop.f32.mrb[0].mxu0
      %v2472 = vadd.f32 %v2215, %v2471
      %2473 = vmatprep.mubr.f32.mxu0 %v1181
      %2474 = vmatmul.mubr.f32.gmra.mrb[0].mxu0 %v1180
      %v2475 = vpop.f32.mrb[0].mxu0
      %v2476 = vadd.f32 %v2219, %v2475
      %v2477 = vpop.f32.mrb[0].mxu0
      %v2478 = vadd.f32 %v2221, %v2477
      %2479 = vmatprep.mubr.f32.mxu0 %v1185
      %2480 = vmatmul.mubr.f32.gmra.mrb[0].mxu0 %v1184
      %v2481 = vpop.f32.mrb[0].mxu0
      %v2482 = vadd.f32 %v2225, %v2481
      %v2483 = vpop.f32.mrb[0].mxu0
      %v2484 = vadd.f32 %v2227, %v2483
      %2485 = vmatprep.mubr.f32.mxu0 %v1189
      %2486 = vmatmul.mubr.f32.gmra.mrb[0].mxu0 %v1188
      %v2487 = vpop.f32.mrb[0].mxu0
      %v2488 = vadd.f32 %v2231, %v2487
      %v2489 = vpop.f32.mrb[0].mxu0
      %v2490 = vadd.f32 %v2233, %v2489
      %2491 = vmatprep.mubr.f32.mxu0 %v1193
      %2492 = vmatmul.mubr.f32.gmra.mrb[0].mxu0 %v1192
      %v2493 = vpop.f32.mrb[0].mxu0
      %v2494 = vadd.f32 %v2237, %v2493
      %v2495 = vpop.f32.mrb[0].mxu0
      %v2496 = vadd.f32 %v2239, %v2495
      %2497 = vmatprep.mubr.f32.mxu0 %v1197
      %2498 = vmatmul.mubr.f32.gmra.mrb[0].mxu0 %v1196
      %v2499 = vpop.f32.mrb[0].mxu0
      %v2500 = vadd.f32 %v2243, %v2499
      %v2501 = vpop.f32.mrb[0].mxu0
      %v2502 = vadd.f32 %v2245, %v2501
      %2503 = vdwg.mxu0
      %v2504 = vmax.f32 %v1800, 0.0
      %v2505 = vmax.f32 %v1802, 0.0
      %v2506 = vmax.f32 %v2314, 0.0
      %v2507 = vmax.f32 %v2316, 0.0
      %v2508 = vmax.f32 %v1806, 0.0
      %v2509 = vmax.f32 %v1808, 0.0
      %v2510 = vmax.f32 %v2320, 0.0
      %v2511 = vmax.f32 %v2322, 0.0
      %v2512 = vmax.f32 %v1812, 0.0
      %v2513 = vmax.f32 %v1814, 0.0
      %v2514 = vmax.f32 %v2326, 0.0
      %v2515 = vmax.f32 %v2328, 0.0
      %v2516 = vmax.f32 %v1818, 0.0
      %v2517 = vmax.f32 %v1820, 0.0
      %v2518 = vmax.f32 %v2332, 0.0
      %v2519 = vmax.f32 %v2334, 0.0
      %v2520 = vmax.f32 %v1824, 0.0
      %v2521 = vmax.f32 %v1826, 0.0
      %v2522 = vmax.f32 %v2338, 0.0
      %v2523 = vmax.f32 %v2340, 0.0
      %v2524 = vmax.f32 %v1830, 0.0
      %v2525 = vmax.f32 %v1832, 0.0
      %v2526 = vmax.f32 %v2344, 0.0
      %v2527 = vmax.f32 %v2346, 0.0
      %v2528 = vmax.f32 %v1836, 0.0
      %v2529 = vmax.f32 %v1838, 0.0
      %v2530 = vmax.f32 %v2350, 0.0
      %v2531 = vmax.f32 %v2352, 0.0
      %v2532 = vmax.f32 %v1842, 0.0
      %v2533 = vmax.f32 %v1844, 0.0
      %v2534 = vmax.f32 %v2356, 0.0
      %v2535 = vmax.f32 %v2358, 0.0
      %v2536 = vmax.f32 %v1848, 0.0
      %v2537 = vmax.f32 %v1850, 0.0
      %v2538 = vmax.f32 %v2362, 0.0
      %v2539 = vmax.f32 %v2364, 0.0
      %v2540 = vmax.f32 %v1854, 0.0
      %v2541 = vmax.f32 %v1856, 0.0
      %v2542 = vmax.f32 %v2368, 0.0
      %v2543 = vmax.f32 %v2370, 0.0
      %v2544 = vmax.f32 %v1860, 0.0
      %v2545 = vmax.f32 %v1862, 0.0
      %v2546 = vmax.f32 %v2374, 0.0
      %v2547 = vmax.f32 %v2376, 0.0
      %v2548 = vmax.f32 %v1866, 0.0
      %v2549 = vmax.f32 %v1868, 0.0
      %v2550 = vmax.f32 %v2380, 0.0
      %v2551 = vmax.f32 %v2382, 0.0
      %v2552 = vmax.f32 %v1872, 0.0
      %v2553 = vmax.f32 %v1874, 0.0
      %v2554 = vmax.f32 %v2386, 0.0
      %v2555 = vmax.f32 %v2388, 0.0
      %v2556 = vmax.f32 %v1878, 0.0
      %v2557 = vmax.f32 %v1880, 0.0
      %v2558 = vmax.f32 %v2392, 0.0
      %v2559 = vmax.f32 %v2394, 0.0
      %v2560 = vmax.f32 %v1884, 0.0
      %v2561 = vmax.f32 %v1886, 0.0
      %v2562 = vmax.f32 %v2398, 0.0
      %v2563 = vmax.f32 %v2400, 0.0
      %v2564 = vmax.f32 %v1890, 0.0
      %v2565 = vmax.f32 %v1892, 0.0
      %v2566 = vmax.f32 %v2404, 0.0
      %v2567 = vmax.f32 %v2406, 0.0
      %v2568 = vmax.f32 %v1896, 0.0
      %v2569 = vmax.f32 %v1898, 0.0
      %v2570 = vmax.f32 %v2410, 0.0
      %v2571 = vmax.f32 %v2412, 0.0
      %v2572 = vmax.f32 %v1902, 0.0
      %v2573 = vmax.f32 %v1904, 0.0
      %v2574 = vmax.f32 %v2416, 0.0
      %v2575 = vmax.f32 %v2418, 0.0
      %v2576 = vmax.f32 %v1908, 0.0
      %v2577 = vmax.f32 %v1910, 0.0
      %v2578 = vmax.f32 %v2422, 0.0
      %v2579 = vmax.f32 %v2424, 0.0
      %v2580 = vmax.f32 %v1914, 0.0
      %v2581 = vmax.f32 %v1916, 0.0
      %v2582 = vmax.f32 %v2428, 0.0
      %v2583 = vmax.f32 %v2430, 0.0
      %v2584 = vmax.f32 %v1920, 0.0
      %v2585 = vmax.f32 %v1922, 0.0
      %v2586 = vmax.f32 %v2434, 0.0
      %v2587 = vmax.f32 %v2436, 0.0
      %v2588 = vmax.f32 %v1926, 0.0
      %v2589 = vmax.f32 %v1928, 0.0
      %v2590 = vmax.f32 %v2440, 0.0
      %v2591 = vmax.f32 %v2442, 0.0
      %v2592 = vmax.f32 %v1932, 0.0
      %v2593 = vmax.f32 %v1934, 0.0
      %v2594 = vmax.f32 %v2446, 0.0
      %v2595 = vmax.f32 %v2448, 0.0
      %v2596 = vmax.f32 %v1938, 0.0
      %v2597 = vmax.f32 %v1940, 0.0
      %v2598 = vmax.f32 %v2452, 0.0
      %v2599 = vmax.f32 %v2454, 0.0
      %v2600 = vmax.f32 %v1944, 0.0
      %v2601 = vmax.f32 %v1946, 0.0
      %v2602 = vmax.f32 %v2458, 0.0
      %v2603 = vmax.f32 %v2460, 0.0
      %v2604 = vmax.f32 %v1950, 0.0
      %v2605 = vmax.f32 %v1952, 0.0
      %v2606 = vmax.f32 %v2464, 0.0
      %v2607 = vmax.f32 %v2466, 0.0
      %v2608 = vmax.f32 %v1956, 0.0
      %v2609 = vmax.f32 %v1958, 0.0
      %v2610 = vmax.f32 %v2470, 0.0
      %v2611 = vmax.f32 %v2472, 0.0
      %v2612 = vmax.f32 %v1962, 0.0
      %v2613 = vmax.f32 %v1964, 0.0
      %v2614 = vmax.f32 %v2476, 0.0
      %v2615 = vmax.f32 %v2478, 0.0
      %v2616 = vmax.f32 %v1968, 0.0
      %v2617 = vmax.f32 %v1970, 0.0
      %v2618 = vmax.f32 %v2482, 0.0
      %v2619 = vmax.f32 %v2484, 0.0
      %v2620 = vmax.f32 %v1974, 0.0
      %v2621 = vmax.f32 %v1976, 0.0
      %v2622 = vmax.f32 %v2488, 0.0
      %v2623 = vmax.f32 %v2490, 0.0
      %v2624 = vmax.f32 %v1980, 0.0
      %v2625 = vmax.f32 %v1982, 0.0
      %v2626 = vmax.f32 %v2494, 0.0
      %v2627 = vmax.f32 %v2496, 0.0
      %v2628 = vmax.f32 %v1986, 0.0
      %v2629 = vmax.f32 %v1988, 0.0
      %v2630 = vmax.f32 %v2500, 0.0
      %v2631 = vmax.f32 %v2502, 0.0
      %v2632 = vld [vmem:[%s5] sm:$0xff]
      %v2633 = vld [vmem:[%s5 + $0x8] sm:$0xff]
      %v2634 = vld [vmem:[%s5 + $0x10] sm:$0xff]
      %v2635 = vld [vmem:[%s5 + $0x18] sm:$0xff]
      %v2636 = vld [vmem:[%s5 + $0x20] sm:$0xff]
      %v2637 = vld [vmem:[%s5 + $0x28] sm:$0xff]
      %v2638 = vld [vmem:[%s5 + $0x30] sm:$0xff]
      %v2639 = vld [vmem:[%s5 + $0x38] sm:$0xff]
      %v2640 = vld [vmem:[%s5 + $0x40] sm:$0xff]
      %v2641 = vld [vmem:[%s5 + $0x48] sm:$0xff]
      %v2642 = vld [vmem:[%s5 + $0x50] sm:$0xff]
      %v2643 = vld [vmem:[%s5 + $0x58] sm:$0xff]
      %v2644 = vld [vmem:[%s5 + $0x60] sm:$0xff]
      %v2645 = vld [vmem:[%s5 + $0x68] sm:$0xff]
      %v2646 = vld [vmem:[%s5 + $0x70] sm:$0xff]
      %v2647 = vld [vmem:[%s5 + $0x78] sm:$0xff]
      %v2648 = vld [vmem:[%s5 + $0x80] sm:$0xff]
      %v2649 = vld [vmem:[%s5 + $0x88] sm:$0xff]
      %v2650 = vld [vmem:[%s5 + $0x90] sm:$0xff]
      %v2651 = vld [vmem:[%s5 + $0x98] sm:$0xff]
      %v2652 = vld [vmem:[%s5 + $0xa0] sm:$0xff]
      %v2653 = vld [vmem:[%s5 + $0xa8] sm:$0xff]
      %v2654 = vld [vmem:[%s5 + $0xb0] sm:$0xff]
      %v2655 = vld [vmem:[%s5 + $0xb8] sm:$0xff]
      %v2656 = vld [vmem:[%s5 + $0xc0] sm:$0xff]
      %v2657 = vld [vmem:[%s5 + $0xc8] sm:$0xff]
      %v2658 = vld [vmem:[%s5 + $0xd0] sm:$0xff]
      %v2659 = vld [vmem:[%s5 + $0xd8] sm:$0xff]
      %v2660 = vld [vmem:[%s5 + $0xe0] sm:$0xff]
      %v2661 = vld [vmem:[%s5 + $0xe8] sm:$0xff]
      %v2662 = vld [vmem:[%s5 + $0xf0] sm:$0xff]
      %v2663 = vld [vmem:[%s5 + $0xf8] sm:$0xff]
      %v2664 = vld [vmem:[%s5 + $0x100] sm:$0xff]
      %v2665 = vld [vmem:[%s5 + $0x108] sm:$0xff]
      %v2666 = vld [vmem:[%s5 + $0x110] sm:$0xff]
      %v2667 = vld [vmem:[%s5 + $0x118] sm:$0xff]
      %v2668 = vld [vmem:[%s5 + $0x120] sm:$0xff]
      %v2669 = vld [vmem:[%s5 + $0x128] sm:$0xff]
      %v2670 = vld [vmem:[%s5 + $0x130] sm:$0xff]
      %v2671 = vld [vmem:[%s5 + $0x138] sm:$0xff]
      %v2672 = vld [vmem:[%s5 + $0x140] sm:$0xff]
      %v2673 = vld [vmem:[%s5 + $0x148] sm:$0xff]
      %v2674 = vld [vmem:[%s5 + $0x150] sm:$0xff]
      %v2675 = vld [vmem:[%s5 + $0x158] sm:$0xff]
      %v2676 = vld [vmem:[%s5 + $0x160] sm:$0xff]
      %v2677 = vld [vmem:[%s5 + $0x168] sm:$0xff]
      %v2678 = vld [vmem:[%s5 + $0x170] sm:$0xff]
      %v2679 = vld [vmem:[%s5 + $0x178] sm:$0xff]
      %v2680 = vld [vmem:[%s5 + $0x180] sm:$0xff]
      %v2681 = vld [vmem:[%s5 + $0x188] sm:$0xff]
      %v2682 = vld [vmem:[%s5 + $0x190] sm:$0xff]
      %v2683 = vld [vmem:[%s5 + $0x198] sm:$0xff]
      %v2684 = vld [vmem:[%s5 + $0x1a0] sm:$0xff]
      %v2685 = vld [vmem:[%s5 + $0x1a8] sm:$0xff]
      %v2686 = vld [vmem:[%s5 + $0x1b0] sm:$0xff]
      %v2687 = vld [vmem:[%s5 + $0x1b8] sm:$0xff]
      %v2688 = vld [vmem:[%s5 + $0x1c0] sm:$0xff]
      %v2689 = vld [vmem:[%s5 + $0x1c8] sm:$0xff]
      %v2690 = vld [vmem:[%s5 + $0x1d0] sm:$0xff]
      %v2691 = vld [vmem:[%s5 + $0x1d8] sm:$0xff]
      %v2692 = vld [vmem:[%s5 + $0x1e0] sm:$0xff]
      %v2693 = vld [vmem:[%s5 + $0x1e8] sm:$0xff]
      %v2694 = vld [vmem:[%s5 + $0x1f0] sm:$0xff]
      %v2695 = vld [vmem:[%s5 + $0x1f8] sm:$0xff]
      %v2696 = vld [vmem:[%s5 + $0x200] sm:$0xff]
      %v2697 = vld [vmem:[%s5 + $0x208] sm:$0xff]
      %v2698 = vld [vmem:[%s5 + $0x210] sm:$0xff]
      %v2699 = vld [vmem:[%s5 + $0x218] sm:$0xff]
      %v2700 = vld [vmem:[%s5 + $0x220] sm:$0xff]
      %v2701 = vld [vmem:[%s5 + $0x228] sm:$0xff]
      %v2702 = vld [vmem:[%s5 + $0x230] sm:$0xff]
      %v2703 = vld [vmem:[%s5 + $0x238] sm:$0xff]
      %v2704 = vld [vmem:[%s5 + $0x240] sm:$0xff]
      %v2705 = vld [vmem:[%s5 + $0x248] sm:$0xff]
      %v2706 = vld [vmem:[%s5 + $0x250] sm:$0xff]
      %v2707 = vld [vmem:[%s5 + $0x258] sm:$0xff]
      %v2708 = vld [vmem:[%s5 + $0x260] sm:$0xff]
      %v2709 = vld [vmem:[%s5 + $0x268] sm:$0xff]
      %v2710 = vld [vmem:[%s5 + $0x270] sm:$0xff]
      %v2711 = vld [vmem:[%s5 + $0x278] sm:$0xff]
      %v2712 = vld [vmem:[%s5 + $0x280] sm:$0xff]
      %v2713 = vld [vmem:[%s5 + $0x288] sm:$0xff]
      %v2714 = vld [vmem:[%s5 + $0x290] sm:$0xff]
      %v2715 = vld [vmem:[%s5 + $0x298] sm:$0xff]
      %v2716 = vld [vmem:[%s5 + $0x2a0] sm:$0xff]
      %v2717 = vld [vmem:[%s5 + $0x2a8] sm:$0xff]
      %v2718 = vld [vmem:[%s5 + $0x2b0] sm:$0xff]
      %v2719 = vld [vmem:[%s5 + $0x2b8] sm:$0xff]
      %v2720 = vld [vmem:[%s5 + $0x2c0] sm:$0xff]
      %v2721 = vld [vmem:[%s5 + $0x2c8] sm:$0xff]
      %v2722 = vld [vmem:[%s5 + $0x2d0] sm:$0xff]
      %v2723 = vld [vmem:[%s5 + $0x2d8] sm:$0xff]
      %v2724 = vld [vmem:[%s5 + $0x2e0] sm:$0xff]
      %v2725 = vld [vmem:[%s5 + $0x2e8] sm:$0xff]
      %v2726 = vld [vmem:[%s5 + $0x2f0] sm:$0xff]
      %v2727 = vld [vmem:[%s5 + $0x2f8] sm:$0xff]
      %v2728 = vld [vmem:[%s5 + $0x300] sm:$0xff]
      %v2729 = vld [vmem:[%s5 + $0x308] sm:$0xff]
      %v2730 = vld [vmem:[%s5 + $0x310] sm:$0xff]
      %v2731 = vld [vmem:[%s5 + $0x318] sm:$0xff]
      %v2732 = vld [vmem:[%s5 + $0x320] sm:$0xff]
      %v2733 = vld [vmem:[%s5 + $0x328] sm:$0xff]
      %v2734 = vld [vmem:[%s5 + $0x330] sm:$0xff]
      %v2735 = vld [vmem:[%s5 + $0x338] sm:$0xff]
      %v2736 = vld [vmem:[%s5 + $0x340] sm:$0xff]
      %v2737 = vld [vmem:[%s5 + $0x348] sm:$0xff]
      %v2738 = vld [vmem:[%s5 + $0x350] sm:$0xff]
      %v2739 = vld [vmem:[%s5 + $0x358] sm:$0xff]
      %v2740 = vld [vmem:[%s5 + $0x360] sm:$0xff]
      %v2741 = vld [vmem:[%s5 + $0x368] sm:$0xff]
      %v2742 = vld [vmem:[%s5 + $0x370] sm:$0xff]
      %v2743 = vld [vmem:[%s5 + $0x378] sm:$0xff]
      %v2744 = vld [vmem:[%s5 + $0x380] sm:$0xff]
      %v2745 = vld [vmem:[%s5 + $0x388] sm:$0xff]
      %v2746 = vld [vmem:[%s5 + $0x390] sm:$0xff]
      %v2747 = vld [vmem:[%s5 + $0x398] sm:$0xff]
      %v2748 = vld [vmem:[%s5 + $0x3a0] sm:$0xff]
      %v2749 = vld [vmem:[%s5 + $0x3a8] sm:$0xff]
      %v2750 = vld [vmem:[%s5 + $0x3b0] sm:$0xff]
      %v2751 = vld [vmem:[%s5 + $0x3b8] sm:$0xff]
      %v2752 = vld [vmem:[%s5 + $0x3c0] sm:$0xff]
      %v2753 = vld [vmem:[%s5 + $0x3c8] sm:$0xff]
      %v2754 = vld [vmem:[%s5 + $0x3d0] sm:$0xff]
      %v2755 = vld [vmem:[%s5 + $0x3d8] sm:$0xff]
      %v2756 = vld [vmem:[%s5 + $0x3e0] sm:$0xff]
      %v2757 = vld [vmem:[%s5 + $0x3e8] sm:$0xff]
      %v2758 = vld [vmem:[%s5 + $0x3f0] sm:$0xff]
      %v2759 = vld [vmem:[%s5 + $0x3f8] sm:$0xff]
      %v2760 = vld [vmem:[%s6] sm:$0x3]
      %v2762 = vlaneseq
      %v2763 = vshrl.u32 %v2762, 7
      %v2764 = vsub.s32 0, %v2763
      %v2765 = vrot.slane %v2760, %v2764
      %v2766 = vlaneseq
      %v2767 = vshrl.u32 %v2766, 7
      %v2768 = vsub.s32 1, %v2767
      %v2769 = vrot.slane %v2760, %v2768
      %2772 = vmatprep.subr.mxu0 %v2633
      %2773 = vmatpush1.msra.mxu0 %v2632
      %2774 = vmatprep.subr.mxu0 %v2635
      %2775 = vmatpush1.msra.mxu0 %v2634
      %2776 = vmatprep.subr.mxu0 %v2637
      %2777 = vmatpush1.msra.mxu0 %v2636
      %2778 = vmatprep.subr.mxu0 %v2639
      %2779 = vmatpush1.msra.mxu0 %v2638
      %2780 = vmatprep.subr.mxu0 %v2641
      %2781 = vmatpush1.msra.mxu0 %v2640
      %2782 = vmatprep.subr.mxu0 %v2643
      %2783 = vmatpush1.msra.mxu0 %v2642
      %2784 = vmatprep.subr.mxu0 %v2645
      %2785 = vmatpush1.msra.mxu0 %v2644
      %2786 = vmatprep.subr.mxu0 %v2647
      %2787 = vmatpush1.msra.mxu0 %v2646
      %2788 = vmatprep.subr.mxu0 %v2649
      %2789 = vmatpush1.msra.mxu0 %v2648
      %2790 = vmatprep.subr.mxu0 %v2651
      %2791 = vmatpush1.msra.mxu0 %v2650
      %2792 = vmatprep.subr.mxu0 %v2653
      %2793 = vmatpush1.msra.mxu0 %v2652
      %2794 = vmatprep.subr.mxu0 %v2655
      %2795 = vmatpush1.msra.mxu0 %v2654
      %2796 = vmatprep.subr.mxu0 %v2657
      %2797 = vmatpush1.msra.mxu0 %v2656
      %2798 = vmatprep.subr.mxu0 %v2659
      %2799 = vmatpush1.msra.mxu0 %v2658
      %2800 = vmatprep.subr.mxu0 %v2661
      %2801 = vmatpush1.msra.mxu0 %v2660
      %2802 = vmatprep.subr.mxu0 %v2663
      %2803 = vmatpush1.msra.mxu0 %v2662
      %2804 = vmatprep.subr.mxu0 %v2665
      %2805 = vmatpush1.msra.mxu0 %v2664
      %2806 = vmatprep.subr.mxu0 %v2667
      %2807 = vmatpush1.msra.mxu0 %v2666
      %2808 = vmatprep.subr.mxu0 %v2669
      %2809 = vmatpush1.msra.mxu0 %v2668
      %2810 = vmatprep.subr.mxu0 %v2671
      %2811 = vmatpush1.msra.mxu0 %v2670
      %2812 = vmatprep.subr.mxu0 %v2673
      %2813 = vmatpush1.msra.mxu0 %v2672
      %2814 = vmatprep.subr.mxu0 %v2675
      %2815 = vmatpush1.msra.mxu0 %v2674
      %2816 = vmatprep.subr.mxu0 %v2677
      %2817 = vmatpush1.msra.mxu0 %v2676
      %2818 = vmatprep.subr.mxu0 %v2679
      %2819 = vmatpush1.msra.mxu0 %v2678
      %2820 = vmatprep.subr.mxu0 %v2681
      %2821 = vmatpush1.msra.mxu0 %v2680
      %2822 = vmatprep.subr.mxu0 %v2683
      %2823 = vmatpush1.msra.mxu0 %v2682
      %2824 = vmatprep.subr.mxu0 %v2685
      %2825 = vmatpush1.msra.mxu0 %v2684
      %2826 = vmatprep.subr.mxu0 %v2687
      %2827 = vmatpush1.msra.mxu0 %v2686
      %2828 = vmatprep.subr.mxu0 %v2689
      %2829 = vmatpush1.msra.mxu0 %v2688
      %2830 = vmatprep.subr.mxu0 %v2691
      %2831 = vmatpush1.msra.mxu0 %v2690
      %2832 = vmatprep.subr.mxu0 %v2693
      %2833 = vmatpush1.msra.mxu0 %v2692
      %2834 = vmatprep.subr.mxu0 %v2695
      %2835 = vmatpush1.msra.mxu0 %v2694
      %2836 = vmatprep.mubr.f32.mxu0 %v2505
      %2837 = vmatmul.mubr.f32.gmra.mrb[0].mxu0 %v2504
      %v2838 = vpop.f32.mrb[0].mxu0
      %v2839 = vadd.f32 %v2765, %v2838
      %v2840 = vpop.f32.mrb[0].mxu0
      %v2841 = vadd.f32 %v2769, %v2840
      %2842 = vmatprep.mubr.f32.mxu0 %v2509
      %2843 = vmatmul.mubr.f32.gmra.mrb[0].mxu0 %v2508
      %v2844 = vpop.f32.mrb[0].mxu0
      %v2845 = vadd.f32 %v2765, %v2844
      %v2846 = vpop.f32.mrb[0].mxu0
      %v2847 = vadd.f32 %v2769, %v2846
      %2848 = vmatprep.mubr.f32.mxu0 %v2513
      %2849 = vmatmul.mubr.f32.gmra.mrb[0].mxu0 %v2512
      %v2850 = vpop.f32.mrb[0].mxu0
      %v2851 = vadd.f32 %v2765, %v2850
      %v2852 = vpop.f32.mrb[0].mxu0
      %v2853 = vadd.f32 %v2769, %v2852
      %2854 = vmatprep.mubr.f32.mxu0 %v2517
      %2855 = vmatmul.mubr.f32.gmra.mrb[0].mxu0 %v2516
      %v2856 = vpop.f32.mrb[0].mxu0
      %v2857 = vadd.f32 %v2765, %v2856
      %v2858 = vpop.f32.mrb[0].mxu0
      %v2859 = vadd.f32 %v2769, %v2858
      %2860 = vmatprep.mubr.f32.mxu0 %v2521
      %2861 = vmatmul.mubr.f32.gmra.mrb[0].mxu0 %v2520
      %v2862 = vpop.f32.mrb[0].mxu0
      %v2863 = vadd.f32 %v2765, %v2862
      %v2864 = vpop.f32.mrb[0].mxu0
      %v2865 = vadd.f32 %v2769, %v2864
      %2866 = vmatprep.mubr.f32.mxu0 %v2525
      %2867 = vmatmul.mubr.f32.gmra.mrb[0].mxu0 %v2524
      %v2868 = vpop.f32.mrb[0].mxu0
      %v2869 = vadd.f32 %v2765, %v2868
      %v2870 = vpop.f32.mrb[0].mxu0
      %v2871 = vadd.f32 %v2769, %v2870
      %2872 = vmatprep.mubr.f32.mxu0 %v2529
      %2873 = vmatmul.mubr.f32.gmra.mrb[0].mxu0 %v2528
      %v2874 = vpop.f32.mrb[0].mxu0
      %v2875 = vadd.f32 %v2765, %v2874
      %v2876 = vpop.f32.mrb[0].mxu0
      %v2877 = vadd.f32 %v2769, %v2876
      %2878 = vmatprep.mubr.f32.mxu0 %v2533
      %2879 = vmatmul.mubr.f32.gmra.mrb[0].mxu0 %v2532
      %v2880 = vpop.f32.mrb[0].mxu0
      %v2881 = vadd.f32 %v2765, %v2880
      %v2882 = vpop.f32.mrb[0].mxu0
      %v2883 = vadd.f32 %v2769, %v2882
      %2884 = vmatprep.mubr.f32.mxu0 %v2537
      %2885 = vmatmul.mubr.f32.gmra.mrb[0].mxu0 %v2536
      %v2886 = vpop.f32.mrb[0].mxu0
      %v2887 = vadd.f32 %v2765, %v2886
      %v2888 = vpop.f32.mrb[0].mxu0
      %v2889 = vadd.f32 %v2769, %v2888
      %2890 = vmatprep.mubr.f32.mxu0 %v2541
      %2891 = vmatmul.mubr.f32.gmra.mrb[0].mxu0 %v2540
      %v2892 = vpop.f32.mrb[0].mxu0
      %v2893 = vadd.f32 %v2765, %v2892
      %v2894 = vpop.f32.mrb[0].mxu0
      %v2895 = vadd.f32 %v2769, %v2894
      %2896 = vmatprep.mubr.f32.mxu0 %v2545
      %2897 = vmatmul.mubr.f32.gmra.mrb[0].mxu0 %v2544
      %v2898 = vpop.f32.mrb[0].mxu0
      %v2899 = vadd.f32 %v2765, %v2898
      %v2900 = vpop.f32.mrb[0].mxu0
      %v2901 = vadd.f32 %v2769, %v2900
      %2902 = vmatprep.mubr.f32.mxu0 %v2549
      %2903 = vmatmul.mubr.f32.gmra.mrb[0].mxu0 %v2548
      %v2904 = vpop.f32.mrb[0].mxu0
      %v2905 = vadd.f32 %v2765, %v2904
      %v2906 = vpop.f32.mrb[0].mxu0
      %v2907 = vadd.f32 %v2769, %v2906
      %2908 = vmatprep.mubr.f32.mxu0 %v2553
      %2909 = vmatmul.mubr.f32.gmra.mrb[0].mxu0 %v2552
      %v2910 = vpop.f32.mrb[0].mxu0
      %v2911 = vadd.f32 %v2765, %v2910
      %v2912 = vpop.f32.mrb[0].mxu0
      %v2913 = vadd.f32 %v2769, %v2912
      %2914 = vmatprep.mubr.f32.mxu0 %v2557
      %2915 = vmatmul.mubr.f32.gmra.mrb[0].mxu0 %v2556
      %v2916 = vpop.f32.mrb[0].mxu0
      %v2917 = vadd.f32 %v2765, %v2916
      %v2918 = vpop.f32.mrb[0].mxu0
      %v2919 = vadd.f32 %v2769, %v2918
      %2920 = vmatprep.mubr.f32.mxu0 %v2561
      %2921 = vmatmul.mubr.f32.gmra.mrb[0].mxu0 %v2560
      %v2922 = vpop.f32.mrb[0].mxu0
      %v2923 = vadd.f32 %v2765, %v2922
      %v2924 = vpop.f32.mrb[0].mxu0
      %v2925 = vadd.f32 %v2769, %v2924
      %2926 = vmatprep.mubr.f32.mxu0 %v2565
      %2927 = vmatmul.mubr.f32.gmra.mrb[0].mxu0 %v2564
      %v2928 = vpop.f32.mrb[0].mxu0
      %v2929 = vadd.f32 %v2765, %v2928
      %v2930 = vpop.f32.mrb[0].mxu0
      %v2931 = vadd.f32 %v2769, %v2930
      %2932 = vmatprep.mubr.f32.mxu0 %v2569
      %2933 = vmatmul.mubr.f32.gmra.mrb[0].mxu0 %v2568
      %v2934 = vpop.f32.mrb[0].mxu0
      %v2935 = vadd.f32 %v2765, %v2934
      %v2936 = vpop.f32.mrb[0].mxu0
      %v2937 = vadd.f32 %v2769, %v2936
      %2938 = vmatprep.mubr.f32.mxu0 %v2573
      %2939 = vmatmul.mubr.f32.gmra.mrb[0].mxu0 %v2572
      %v2940 = vpop.f32.mrb[0].mxu0
      %v2941 = vadd.f32 %v2765, %v2940
      %v2942 = vpop.f32.mrb[0].mxu0
      %v2943 = vadd.f32 %v2769, %v2942
      %2944 = vmatprep.mubr.f32.mxu0 %v2577
      %2945 = vmatmul.mubr.f32.gmra.mrb[0].mxu0 %v2576
      %v2946 = vpop.f32.mrb[0].mxu0
      %v2947 = vadd.f32 %v2765, %v2946
      %v2948 = vpop.f32.mrb[0].mxu0
      %v2949 = vadd.f32 %v2769, %v2948
      %2950 = vmatprep.mubr.f32.mxu0 %v2581
      %2951 = vmatmul.mubr.f32.gmra.mrb[0].mxu0 %v2580
      %v2952 = vpop.f32.mrb[0].mxu0
      %v2953 = vadd.f32 %v2765, %v2952
      %v2954 = vpop.f32.mrb[0].mxu0
      %v2955 = vadd.f32 %v2769, %v2954
      %2956 = vmatprep.mubr.f32.mxu0 %v2585
      %2957 = vmatmul.mubr.f32.gmra.mrb[0].mxu0 %v2584
      %v2958 = vpop.f32.mrb[0].mxu0
      %v2959 = vadd.f32 %v2765, %v2958
      %v2960 = vpop.f32.mrb[0].mxu0
      %v2961 = vadd.f32 %v2769, %v2960
      %2962 = vmatprep.mubr.f32.mxu0 %v2589
      %2963 = vmatmul.mubr.f32.gmra.mrb[0].mxu0 %v2588
      %v2964 = vpop.f32.mrb[0].mxu0
      %v2965 = vadd.f32 %v2765, %v2964
      %v2966 = vpop.f32.mrb[0].mxu0
      %v2967 = vadd.f32 %v2769, %v2966
      %2968 = vmatprep.mubr.f32.mxu0 %v2593
      %2969 = vmatmul.mubr.f32.gmra.mrb[0].mxu0 %v2592
      %v2970 = vpop.f32.mrb[0].mxu0
      %v2971 = vadd.f32 %v2765, %v2970
      %v2972 = vpop.f32.mrb[0].mxu0
      %v2973 = vadd.f32 %v2769, %v2972
      %2974 = vmatprep.mubr.f32.mxu0 %v2597
      %2975 = vmatmul.mubr.f32.gmra.mrb[0].mxu0 %v2596
      %v2976 = vpop.f32.mrb[0].mxu0
      %v2977 = vadd.f32 %v2765, %v2976
      %v2978 = vpop.f32.mrb[0].mxu0
      %v2979 = vadd.f32 %v2769, %v2978
      %2980 = vmatprep.mubr.f32.mxu0 %v2601
      %2981 = vmatmul.mubr.f32.gmra.mrb[0].mxu0 %v2600
      %v2982 = vpop.f32.mrb[0].mxu0
      %v2983 = vadd.f32 %v2765, %v2982
      %v2984 = vpop.f32.mrb[0].mxu0
      %v2985 = vadd.f32 %v2769, %v2984
      %2986 = vmatprep.mubr.f32.mxu0 %v2605
      %2987 = vmatmul.mubr.f32.gmra.mrb[0].mxu0 %v2604
      %v2988 = vpop.f32.mrb[0].mxu0
      %v2989 = vadd.f32 %v2765, %v2988
      %v2990 = vpop.f32.mrb[0].mxu0
      %v2991 = vadd.f32 %v2769, %v2990
      %2992 = vmatprep.mubr.f32.mxu0 %v2609
      %2993 = vmatmul.mubr.f32.gmra.mrb[0].mxu0 %v2608
      %v2994 = vpop.f32.mrb[0].mxu0
      %v2995 = vadd.f32 %v2765, %v2994
      %v2996 = vpop.f32.mrb[0].mxu0
      %v2997 = vadd.f32 %v2769, %v2996
      %2998 = vmatprep.mubr.f32.mxu0 %v2613
      %2999 = vmatmul.mubr.f32.gmra.mrb[0].mxu0 %v2612
      %v3000 = vpop.f32.mrb[0].mxu0
      %v3001 = vadd.f32 %v2765, %v3000
      %v3002 = vpop.f32.mrb[0].mxu0
      %v3003 = vadd.f32 %v2769, %v3002
      %3004 = vmatprep.mubr.f32.mxu0 %v2617
      %3005 = vmatmul.mubr.f32.gmra.mrb[0].mxu0 %v2616
      %v3006 = vpop.f32.mrb[0].mxu0
      %v3007 = vadd.f32 %v2765, %v3006
      %v3008 = vpop.f32.mrb[0].mxu0
      %v3009 = vadd.f32 %v2769, %v3008
      %3010 = vmatprep.mubr.f32.mxu0 %v2621
      %3011 = vmatmul.mubr.f32.gmra.mrb[0].mxu0 %v2620
      %v3012 = vpop.f32.mrb[0].mxu0
      %v3013 = vadd.f32 %v2765, %v3012
      %v3014 = vpop.f32.mrb[0].mxu0
      %v3015 = vadd.f32 %v2769, %v3014
      %3016 = vmatprep.mubr.f32.mxu0 %v2625
      %3017 = vmatmul.mubr.f32.gmra.mrb[0].mxu0 %v2624
      %v3018 = vpop.f32.mrb[0].mxu0
      %v3019 = vadd.f32 %v2765, %v3018
      %v3020 = vpop.f32.mrb[0].mxu0
      %v3021 = vadd.f32 %v2769, %v3020
      %3022 = vmatprep.mubr.f32.mxu0 %v2629
      %3023 = vmatmul.mubr.f32.gmra.mrb[0].mxu0 %v2628
      %v3024 = vpop.f32.mrb[0].mxu0
      %v3025 = vadd.f32 %v2765, %v3024
      %v3026 = vpop.f32.mrb[0].mxu0
      %v3027 = vadd.f32 %v2769, %v3026
      %3028 = vdwg.mxu0
      %3029 = vmatprep.subr.mxu0 %v2697
      %3030 = vmatpush1.msra.mxu0 %v2696
      %3031 = vmatprep.subr.mxu0 %v2699
      %3032 = vmatpush1.msra.mxu0 %v2698
      %3033 = vmatprep.subr.mxu0 %v2701
      %3034 = vmatpush1.msra.mxu0 %v2700
      %3035 = vmatprep.subr.mxu0 %v2703
      %3036 = vmatpush1.msra.mxu0 %v2702
      %3037 = vmatprep.subr.mxu0 %v2705
      %3038 = vmatpush1.msra.mxu0 %v2704
      %3039 = vmatprep.subr.mxu0 %v2707
      %3040 = vmatpush1.msra.mxu0 %v2706
      %3041 = vmatprep.subr.mxu0 %v2709
      %3042 = vmatpush1.msra.mxu0 %v2708
      %3043 = vmatprep.subr.mxu0 %v2711
      %3044 = vmatpush1.msra.mxu0 %v2710
      %3045 = vmatprep.subr.mxu0 %v2713
      %3046 = vmatpush1.msra.mxu0 %v2712
      %3047 = vmatprep.subr.mxu0 %v2715
      %3048 = vmatpush1.msra.mxu0 %v2714
      %3049 = vmatprep.subr.mxu0 %v2717
      %3050 = vmatpush1.msra.mxu0 %v2716
      %3051 = vmatprep.subr.mxu0 %v2719
      %3052 = vmatpush1.msra.mxu0 %v2718
      %3053 = vmatprep.subr.mxu0 %v2721
      %3054 = vmatpush1.msra.mxu0 %v2720
      %3055 = vmatprep.subr.mxu0 %v2723
      %3056 = vmatpush1.msra.mxu0 %v2722
      %3057 = vmatprep.subr.mxu0 %v2725
      %3058 = vmatpush1.msra.mxu0 %v2724
      %3059 = vmatprep.subr.mxu0 %v2727
      %3060 = vmatpush1.msra.mxu0 %v2726
      %3061 = vmatprep.subr.mxu0 %v2729
      %3062 = vmatpush1.msra.mxu0 %v2728
      %3063 = vmatprep.subr.mxu0 %v2731
      %3064 = vmatpush1.msra.mxu0 %v2730
      %3065 = vmatprep.subr.mxu0 %v2733
      %3066 = vmatpush1.msra.mxu0 %v2732
      %3067 = vmatprep.subr.mxu0 %v2735
      %3068 = vmatpush1.msra.mxu0 %v2734
      %3069 = vmatprep.subr.mxu0 %v2737
      %3070 = vmatpush1.msra.mxu0 %v2736
      %3071 = vmatprep.subr.mxu0 %v2739
      %3072 = vmatpush1.msra.mxu0 %v2738
      %3073 = vmatprep.subr.mxu0 %v2741
      %3074 = vmatpush1.msra.mxu0 %v2740
      %3075 = vmatprep.subr.mxu0 %v2743
      %3076 = vmatpush1.msra.mxu0 %v2742
      %3077 = vmatprep.subr.mxu0 %v2745
      %3078 = vmatpush1.msra.mxu0 %v2744
      %3079 = vmatprep.subr.mxu0 %v2747
      %3080 = vmatpush1.msra.mxu0 %v2746
      %3081 = vmatprep.subr.mxu0 %v2749
      %3082 = vmatpush1.msra.mxu0 %v2748
      %3083 = vmatprep.subr.mxu0 %v2751
      %3084 = vmatpush1.msra.mxu0 %v2750
      %3085 = vmatprep.subr.mxu0 %v2753
      %3086 = vmatpush1.msra.mxu0 %v2752
      %3087 = vmatprep.subr.mxu0 %v2755
      %3088 = vmatpush1.msra.mxu0 %v2754
      %3089 = vmatprep.subr.mxu0 %v2757
      %3090 = vmatpush1.msra.mxu0 %v2756
      %3091 = vmatprep.subr.mxu0 %v2759
      %3092 = vmatpush1.msra.mxu0 %v2758
      %3093 = vmatprep.mubr.f32.mxu0 %v2507
      %3094 = vmatmul.mubr.f32.gmra.mrb[0].mxu0 %v2506
      %v3095 = vpop.f32.mrb[0].mxu0
      %v3096 = vadd.f32 %v2839, %v3095
      %v3097 = vpop.f32.mrb[0].mxu0
      %v3098 = vadd.f32 %v2841, %v3097
      %3099 = vmatprep.mubr.f32.mxu0 %v2511
      %3100 = vmatmul.mubr.f32.gmra.mrb[0].mxu0 %v2510
      %v3101 = vpop.f32.mrb[0].mxu0
      %v3102 = vadd.f32 %v2845, %v3101
      %v3103 = vpop.f32.mrb[0].mxu0
      %v3104 = vadd.f32 %v2847, %v3103
      %3105 = vmatprep.mubr.f32.mxu0 %v2515
      %3106 = vmatmul.mubr.f32.gmra.mrb[0].mxu0 %v2514
      %v3107 = vpop.f32.mrb[0].mxu0
      %v3108 = vadd.f32 %v2851, %v3107
      %v3109 = vpop.f32.mrb[0].mxu0
      %v3110 = vadd.f32 %v2853, %v3109
      %3111 = vmatprep.mubr.f32.mxu0 %v2519
      %3112 = vmatmul.mubr.f32.gmra.mrb[0].mxu0 %v2518
      %v3113 = vpop.f32.mrb[0].mxu0
      %v3114 = vadd.f32 %v2857, %v3113
      %v3115 = vpop.f32.mrb[0].mxu0
      %v3116 = vadd.f32 %v2859, %v3115
      %3117 = vmatprep.mubr.f32.mxu0 %v2523
      %3118 = vmatmul.mubr.f32.gmra.mrb[0].mxu0 %v2522
      %v3119 = vpop.f32.mrb[0].mxu0
      %v3120 = vadd.f32 %v2863, %v3119
      %v3121 = vpop.f32.mrb[0].mxu0
      %v3122 = vadd.f32 %v2865, %v3121
      %3123 = vmatprep.mubr.f32.mxu0 %v2527
      %3124 = vmatmul.mubr.f32.gmra.mrb[0].mxu0 %v2526
      %v3125 = vpop.f32.mrb[0].mxu0
      %v3126 = vadd.f32 %v2869, %v3125
      %v3127 = vpop.f32.mrb[0].mxu0
      %v3128 = vadd.f32 %v2871, %v3127
      %3129 = vmatprep.mubr.f32.mxu0 %v2531
      %3130 = vmatmul.mubr.f32.gmra.mrb[0].mxu0 %v2530
      %v3131 = vpop.f32.mrb[0].mxu0
      %v3132 = vadd.f32 %v2875, %v3131
      %v3133 = vpop.f32.mrb[0].mxu0
      %v3134 = vadd.f32 %v2877, %v3133
      %3135 = vmatprep.mubr.f32.mxu0 %v2535
      %3136 = vmatmul.mubr.f32.gmra.mrb[0].mxu0 %v2534
      %v3137 = vpop.f32.mrb[0].mxu0
      %v3138 = vadd.f32 %v2881, %v3137
      %v3139 = vpop.f32.mrb[0].mxu0
      %v3140 = vadd.f32 %v2883, %v3139
      %3141 = vmatprep.mubr.f32.mxu0 %v2539
      %3142 = vmatmul.mubr.f32.gmra.mrb[0].mxu0 %v2538
      %v3143 = vpop.f32.mrb[0].mxu0
      %v3144 = vadd.f32 %v2887, %v3143
      %v3145 = vpop.f32.mrb[0].mxu0
      %v3146 = vadd.f32 %v2889, %v3145
      %3147 = vmatprep.mubr.f32.mxu0 %v2543
      %3148 = vmatmul.mubr.f32.gmra.mrb[0].mxu0 %v2542
      %v3149 = vpop.f32.mrb[0].mxu0
      %v3150 = vadd.f32 %v2893, %v3149
      %v3151 = vpop.f32.mrb[0].mxu0
      %v3152 = vadd.f32 %v2895, %v3151
      %3153 = vmatprep.mubr.f32.mxu0 %v2547
      %3154 = vmatmul.mubr.f32.gmra.mrb[0].mxu0 %v2546
      %v3155 = vpop.f32.mrb[0].mxu0
      %v3156 = vadd.f32 %v2899, %v3155
      %v3157 = vpop.f32.mrb[0].mxu0
      %v3158 = vadd.f32 %v2901, %v3157
      %3159 = vmatprep.mubr.f32.mxu0 %v2551
      %3160 = vmatmul.mubr.f32.gmra.mrb[0].mxu0 %v2550
      %v3161 = vpop.f32.mrb[0].mxu0
      %v3162 = vadd.f32 %v2905, %v3161
      %v3163 = vpop.f32.mrb[0].mxu0
      %v3164 = vadd.f32 %v2907, %v3163
      %3165 = vmatprep.mubr.f32.mxu0 %v2555
      %3166 = vmatmul.mubr.f32.gmra.mrb[0].mxu0 %v2554
      %v3167 = vpop.f32.mrb[0].mxu0
      %v3168 = vadd.f32 %v2911, %v3167
      %v3169 = vpop.f32.mrb[0].mxu0
      %v3170 = vadd.f32 %v2913, %v3169
      %3171 = vmatprep.mubr.f32.mxu0 %v2559
      %3172 = vmatmul.mubr.f32.gmra.mrb[0].mxu0 %v2558
      %v3173 = vpop.f32.mrb[0].mxu0
      %v3174 = vadd.f32 %v2917, %v3173
      %v3175 = vpop.f32.mrb[0].mxu0
      %v3176 = vadd.f32 %v2919, %v3175
      %3177 = vmatprep.mubr.f32.mxu0 %v2563
      %3178 = vmatmul.mubr.f32.gmra.mrb[0].mxu0 %v2562
      %v3179 = vpop.f32.mrb[0].mxu0
      %v3180 = vadd.f32 %v2923, %v3179
      %v3181 = vpop.f32.mrb[0].mxu0
      %v3182 = vadd.f32 %v2925, %v3181
      %3183 = vmatprep.mubr.f32.mxu0 %v2567
      %3184 = vmatmul.mubr.f32.gmra.mrb[0].mxu0 %v2566
      %v3185 = vpop.f32.mrb[0].mxu0
      %v3186 = vadd.f32 %v2929, %v3185
      %v3187 = vpop.f32.mrb[0].mxu0
      %v3188 = vadd.f32 %v2931, %v3187
      %3189 = vmatprep.mubr.f32.mxu0 %v2571
      %3190 = vmatmul.mubr.f32.gmra.mrb[0].mxu0 %v2570
      %v3191 = vpop.f32.mrb[0].mxu0
      %v3192 = vadd.f32 %v2935, %v3191
      %v3193 = vpop.f32.mrb[0].mxu0
      %v3194 = vadd.f32 %v2937, %v3193
      %3195 = vmatprep.mubr.f32.mxu0 %v2575
      %3196 = vmatmul.mubr.f32.gmra.mrb[0].mxu0 %v2574
      %v3197 = vpop.f32.mrb[0].mxu0
      %v3198 = vadd.f32 %v2941, %v3197
      %v3199 = vpop.f32.mrb[0].mxu0
      %v3200 = vadd.f32 %v2943, %v3199
      %3201 = vmatprep.mubr.f32.mxu0 %v2579
      %3202 = vmatmul.mubr.f32.gmra.mrb[0].mxu0 %v2578
      %v3203 = vpop.f32.mrb[0].mxu0
      %v3204 = vadd.f32 %v2947, %v3203
      %v3205 = vpop.f32.mrb[0].mxu0
      %v3206 = vadd.f32 %v2949, %v3205
      %3207 = vmatprep.mubr.f32.mxu0 %v2583
      %3208 = vmatmul.mubr.f32.gmra.mrb[0].mxu0 %v2582
      %v3209 = vpop.f32.mrb[0].mxu0
      %v3210 = vadd.f32 %v2953, %v3209
      %v3211 = vpop.f32.mrb[0].mxu0
      %v3212 = vadd.f32 %v2955, %v3211
      %3213 = vmatprep.mubr.f32.mxu0 %v2587
      %3214 = vmatmul.mubr.f32.gmra.mrb[0].mxu0 %v2586
      %v3215 = vpop.f32.mrb[0].mxu0
      %v3216 = vadd.f32 %v2959, %v3215
      %v3217 = vpop.f32.mrb[0].mxu0
      %v3218 = vadd.f32 %v2961, %v3217
      %3219 = vmatprep.mubr.f32.mxu0 %v2591
      %3220 = vmatmul.mubr.f32.gmra.mrb[0].mxu0 %v2590
      %v3221 = vpop.f32.mrb[0].mxu0
      %v3222 = vadd.f32 %v2965, %v3221
      %v3223 = vpop.f32.mrb[0].mxu0
      %v3224 = vadd.f32 %v2967, %v3223
      %3225 = vmatprep.mubr.f32.mxu0 %v2595
      %3226 = vmatmul.mubr.f32.gmra.mrb[0].mxu0 %v2594
      %v3227 = vpop.f32.mrb[0].mxu0
      %v3228 = vadd.f32 %v2971, %v3227
      %v3229 = vpop.f32.mrb[0].mxu0
      %v3230 = vadd.f32 %v2973, %v3229
      %3231 = vmatprep.mubr.f32.mxu0 %v2599
      %3232 = vmatmul.mubr.f32.gmra.mrb[0].mxu0 %v2598
      %v3233 = vpop.f32.mrb[0].mxu0
      %v3234 = vadd.f32 %v2977, %v3233
      %v3235 = vpop.f32.mrb[0].mxu0
      %v3236 = vadd.f32 %v2979, %v3235
      %3237 = vmatprep.mubr.f32.mxu0 %v2603
      %3238 = vmatmul.mubr.f32.gmra.mrb[0].mxu0 %v2602
      %v3239 = vpop.f32.mrb[0].mxu0
      %v3240 = vadd.f32 %v2983, %v3239
      %v3241 = vpop.f32.mrb[0].mxu0
      %v3242 = vadd.f32 %v2985, %v3241
      %3243 = vmatprep.mubr.f32.mxu0 %v2607
      %3244 = vmatmul.mubr.f32.gmra.mrb[0].mxu0 %v2606
      %v3245 = vpop.f32.mrb[0].mxu0
      %v3246 = vadd.f32 %v2989, %v3245
      %v3247 = vpop.f32.mrb[0].mxu0
      %v3248 = vadd.f32 %v2991, %v3247
      %3249 = vmatprep.mubr.f32.mxu0 %v2611
      %3250 = vmatmul.mubr.f32.gmra.mrb[0].mxu0 %v2610
      %v3251 = vpop.f32.mrb[0].mxu0
      %v3252 = vadd.f32 %v2995, %v3251
      %v3253 = vpop.f32.mrb[0].mxu0
      %v3254 = vadd.f32 %v2997, %v3253
      %3255 = vmatprep.mubr.f32.mxu0 %v2615
      %3256 = vmatmul.mubr.f32.gmra.mrb[0].mxu0 %v2614
      %v3257 = vpop.f32.mrb[0].mxu0
      %v3258 = vadd.f32 %v3001, %v3257
      %v3259 = vpop.f32.mrb[0].mxu0
      %v3260 = vadd.f32 %v3003, %v3259
      %3261 = vmatprep.mubr.f32.mxu0 %v2619
      %3262 = vmatmul.mubr.f32.gmra.mrb[0].mxu0 %v2618
      %v3263 = vpop.f32.mrb[0].mxu0
      %v3264 = vadd.f32 %v3007, %v3263
      %v3265 = vpop.f32.mrb[0].mxu0
      %v3266 = vadd.f32 %v3009, %v3265
      %3267 = vmatprep.mubr.f32.mxu0 %v2623
      %3268 = vmatmul.mubr.f32.gmra.mrb[0].mxu0 %v2622
      %v3269 = vpop.f32.mrb[0].mxu0
      %v3270 = vadd.f32 %v3013, %v3269
      %v3271 = vpop.f32.mrb[0].mxu0
      %v3272 = vadd.f32 %v3015, %v3271
      %3273 = vmatprep.mubr.f32.mxu0 %v2627
      %3274 = vmatmul.mubr.f32.gmra.mrb[0].mxu0 %v2626
      %v3275 = vpop.f32.mrb[0].mxu0
      %v3276 = vadd.f32 %v3019, %v3275
      %v3277 = vpop.f32.mrb[0].mxu0
      %v3278 = vadd.f32 %v3021, %v3277
      %3279 = vmatprep.mubr.f32.mxu0 %v2631
      %3280 = vmatmul.mubr.f32.gmra.mrb[0].mxu0 %v2630
      %v3281 = vpop.f32.mrb[0].mxu0
      %v3282 = vadd.f32 %v3025, %v3281
      %v3283 = vpop.f32.mrb[0].mxu0
      %v3284 = vadd.f32 %v3027, %v3283
      %3285 = vdwg.mxu0
      %v3286 = vmax.f32 %v3096, 0.0
      %v3287 = vmax.f32 %v3098, 0.0
      %v3288 = vmax.f32 %v3102, 0.0
      %v3289 = vmax.f32 %v3104, 0.0
      %v3290 = vmax.f32 %v3108, 0.0
      %v3291 = vmax.f32 %v3110, 0.0
      %v3292 = vmax.f32 %v3114, 0.0
      %v3293 = vmax.f32 %v3116, 0.0
      %v3294 = vmax.f32 %v3120, 0.0
      %v3295 = vmax.f32 %v3122, 0.0
      %v3296 = vmax.f32 %v3126, 0.0
      %v3297 = vmax.f32 %v3128, 0.0
      %v3298 = vmax.f32 %v3132, 0.0
      %v3299 = vmax.f32 %v3134, 0.0
      %v3300 = vmax.f32 %v3138, 0.0
      %v3301 = vmax.f32 %v3140, 0.0
      %v3302 = vmax.f32 %v3144, 0.0
      %v3303 = vmax.f32 %v3146, 0.0
      %v3304 = vmax.f32 %v3150, 0.0
      %v3305 = vmax.f32 %v3152, 0.0
      %v3306 = vmax.f32 %v3156, 0.0
      %v3307 = vmax.f32 %v3158, 0.0
      %v3308 = vmax.f32 %v3162, 0.0
      %v3309 = vmax.f32 %v3164, 0.0
      %v3310 = vmax.f32 %v3168, 0.0
      %v3311 = vmax.f32 %v3170, 0.0
      %v3312 = vmax.f32 %v3174, 0.0
      %v3313 = vmax.f32 %v3176, 0.0
      %v3314 = vmax.f32 %v3180, 0.0
      %v3315 = vmax.f32 %v3182, 0.0
      %v3316 = vmax.f32 %v3186, 0.0
      %v3317 = vmax.f32 %v3188, 0.0
      %v3318 = vmax.f32 %v3192, 0.0
      %v3319 = vmax.f32 %v3194, 0.0
      %v3320 = vmax.f32 %v3198, 0.0
      %v3321 = vmax.f32 %v3200, 0.0
      %v3322 = vmax.f32 %v3204, 0.0
      %v3323 = vmax.f32 %v3206, 0.0
      %v3324 = vmax.f32 %v3210, 0.0
      %v3325 = vmax.f32 %v3212, 0.0
      %v3326 = vmax.f32 %v3216, 0.0
      %v3327 = vmax.f32 %v3218, 0.0
      %v3328 = vmax.f32 %v3222, 0.0
      %v3329 = vmax.f32 %v3224, 0.0
      %v3330 = vmax.f32 %v3228, 0.0
      %v3331 = vmax.f32 %v3230, 0.0
      %v3332 = vmax.f32 %v3234, 0.0
      %v3333 = vmax.f32 %v3236, 0.0
      %v3334 = vmax.f32 %v3240, 0.0
      %v3335 = vmax.f32 %v3242, 0.0
      %v3336 = vmax.f32 %v3246, 0.0
      %v3337 = vmax.f32 %v3248, 0.0
      %v3338 = vmax.f32 %v3252, 0.0
      %v3339 = vmax.f32 %v3254, 0.0
      %v3340 = vmax.f32 %v3258, 0.0
      %v3341 = vmax.f32 %v3260, 0.0
      %v3342 = vmax.f32 %v3264, 0.0
      %v3343 = vmax.f32 %v3266, 0.0
      %v3344 = vmax.f32 %v3270, 0.0
      %v3345 = vmax.f32 %v3272, 0.0
      %v3346 = vmax.f32 %v3276, 0.0
      %v3347 = vmax.f32 %v3278, 0.0
      %v3348 = vmax.f32 %v3282, 0.0
      %v3349 = vmax.f32 %v3284, 0.0
      %v3350 = vld [vmem:[%s7] sm:$0xff]
      %v3351 = vld [vmem:[%s7 + $0x8] sm:$0xff]
      %v3352 = vld [vmem:[%s7 + $0x10] sm:$0xff]
      %v3353 = vld [vmem:[%s7 + $0x18] sm:$0xff]
      %v3354 = vld [vmem:[%s7 + $0x20] sm:$0xff]
      %v3355 = vld [vmem:[%s7 + $0x28] sm:$0xff]
      %v3356 = vld [vmem:[%s7 + $0x30] sm:$0xff]
      %v3357 = vld [vmem:[%s7 + $0x38] sm:$0xff]
      %v3358 = vld [vmem:[%s7 + $0x40] sm:$0xff]
      %v3359 = vld [vmem:[%s7 + $0x48] sm:$0xff]
      %v3360 = vld [vmem:[%s7 + $0x50] sm:$0xff]
      %v3361 = vld [vmem:[%s7 + $0x58] sm:$0xff]
      %v3362 = vld [vmem:[%s7 + $0x60] sm:$0xff]
      %v3363 = vld [vmem:[%s7 + $0x68] sm:$0xff]
      %v3364 = vld [vmem:[%s7 + $0x70] sm:$0xff]
      %v3365 = vld [vmem:[%s7 + $0x78] sm:$0xff]
      %v3366 = vld [vmem:[%s7 + $0x80] sm:$0xff]
      %v3367 = vld [vmem:[%s7 + $0x88] sm:$0xff]
      %v3368 = vld [vmem:[%s7 + $0x90] sm:$0xff]
      %v3369 = vld [vmem:[%s7 + $0x98] sm:$0xff]
      %v3370 = vld [vmem:[%s7 + $0xa0] sm:$0xff]
      %v3371 = vld [vmem:[%s7 + $0xa8] sm:$0xff]
      %v3372 = vld [vmem:[%s7 + $0xb0] sm:$0xff]
      %v3373 = vld [vmem:[%s7 + $0xb8] sm:$0xff]
      %v3374 = vld [vmem:[%s7 + $0xc0] sm:$0xff]
      %v3375 = vld [vmem:[%s7 + $0xc8] sm:$0xff]
      %v3376 = vld [vmem:[%s7 + $0xd0] sm:$0xff]
      %v3377 = vld [vmem:[%s7 + $0xd8] sm:$0xff]
      %v3378 = vld [vmem:[%s7 + $0xe0] sm:$0xff]
      %v3379 = vld [vmem:[%s7 + $0xe8] sm:$0xff]
      %v3380 = vld [vmem:[%s7 + $0xf0] sm:$0xff]
      %v3381 = vld [vmem:[%s7 + $0xf8] sm:$0xff]
      %v3382 = vld [vmem:[%s8] sm:$0x1]
      %v3384 = vlaneseq
      %v3385 = vshrl.u32 %v3384, 7
      %v3386 = vsub.s32 0, %v3385
      %v3387 = vrot.slane %v3382, %v3386
      %3389 = vmatprep.subr.mxu0 0.0
      %3390 = vmatpush1.msra.mxu0 %v3350
      %3391 = vmatprep.subr.mxu0 0.0
      %3392 = vmatpush1.msra.mxu0 %v3351
      %3393 = vmatprep.subr.mxu0 0.0
      %3394 = vmatpush1.msra.mxu0 %v3352
      %3395 = vmatprep.subr.mxu0 0.0
      %3396 = vmatpush1.msra.mxu0 %v3353
      %3397 = vmatprep.subr.mxu0 0.0
      %3398 = vmatpush1.msra.mxu0 %v3354
      %3399 = vmatprep.subr.mxu0 0.0
      %3400 = vmatpush1.msra.mxu0 %v3355
      %3401 = vmatprep.subr.mxu0 0.0
      %3402 = vmatpush1.msra.mxu0 %v3356
      %3403 = vmatprep.subr.mxu0 0.0
      %3404 = vmatpush1.msra.mxu0 %v3357
      %3405 = vmatprep.subr.mxu0 0.0
      %3406 = vmatpush1.msra.mxu0 %v3358
      %3407 = vmatprep.subr.mxu0 0.0
      %3408 = vmatpush1.msra.mxu0 %v3359
      %3409 = vmatprep.subr.mxu0 0.0
      %3410 = vmatpush1.msra.mxu0 %v3360
      %3411 = vmatprep.subr.mxu0 0.0
      %3412 = vmatpush1.msra.mxu0 %v3361
      %3413 = vmatprep.subr.mxu0 0.0
      %3414 = vmatpush1.msra.mxu0 %v3362
      %3415 = vmatprep.subr.mxu0 0.0
      %3416 = vmatpush1.msra.mxu0 %v3363
      %3417 = vmatprep.subr.mxu0 0.0
      %3418 = vmatpush1.msra.mxu0 %v3364
      %3419 = vmatprep.subr.mxu0 0.0
      %3420 = vmatpush1.msra.mxu0 %v3365
      %3421 = vmatprep.subr.mxu0 0.0
      %3422 = vmatpush1.msra.mxu0 %v3366
      %3423 = vmatprep.subr.mxu0 0.0
      %3424 = vmatpush1.msra.mxu0 %v3367
      %3425 = vmatprep.subr.mxu0 0.0
      %3426 = vmatpush1.msra.mxu0 %v3368
      %3427 = vmatprep.subr.mxu0 0.0
      %3428 = vmatpush1.msra.mxu0 %v3369
      %3429 = vmatprep.subr.mxu0 0.0
      %3430 = vmatpush1.msra.mxu0 %v3370
      %3431 = vmatprep.subr.mxu0 0.0
      %3432 = vmatpush1.msra.mxu0 %v3371
      %3433 = vmatprep.subr.mxu0 0.0
      %3434 = vmatpush1.msra.mxu0 %v3372
      %3435 = vmatprep.subr.mxu0 0.0
      %3436 = vmatpush1.msra.mxu0 %v3373
      %3437 = vmatprep.subr.mxu0 0.0
      %3438 = vmatpush1.msra.mxu0 %v3374
      %3439 = vmatprep.subr.mxu0 0.0
      %3440 = vmatpush1.msra.mxu0 %v3375
      %3441 = vmatprep.subr.mxu0 0.0
      %3442 = vmatpush1.msra.mxu0 %v3376
      %3443 = vmatprep.subr.mxu0 0.0
      %3444 = vmatpush1.msra.mxu0 %v3377
      %3445 = vmatprep.subr.mxu0 0.0
      %3446 = vmatpush1.msra.mxu0 %v3378
      %3447 = vmatprep.subr.mxu0 0.0
      %3448 = vmatpush1.msra.mxu0 %v3379
      %3449 = vmatprep.subr.mxu0 0.0
      %3450 = vmatpush1.msra.mxu0 %v3380
      %3451 = vmatprep.subr.mxu0 0.0
      %3452 = vmatpush1.msra.mxu0 %v3381
      %3453 = vmatprep.mubr.f32.mxu0 %v3287
      %3454 = vmatmul.mubr.f32.gmra.mrb[0].mxu0 %v3286
      %v3455 = vpop.f32.mrb[0].mxu0
      %v3456 = vadd.f32 %v3387, %v3455
      %v3457 = vpop.f32.mrb[0].mxu0
      %3458 = vmatprep.mubr.f32.mxu0 %v3289
      %3459 = vmatmul.mubr.f32.gmra.mrb[0].mxu0 %v3288
      %v3460 = vpop.f32.mrb[0].mxu0
      %v3461 = vadd.f32 %v3387, %v3460
      %v3462 = vpop.f32.mrb[0].mxu0
      %3463 = vmatprep.mubr.f32.mxu0 %v3291
      %3464 = vmatmul.mubr.f32.gmra.mrb[0].mxu0 %v3290
      %v3465 = vpop.f32.mrb[0].mxu0
      %v3466 = vadd.f32 %v3387, %v3465
      %v3467 = vpop.f32.mrb[0].mxu0
      %3468 = vmatprep.mubr.f32.mxu0 %v3293
      %3469 = vmatmul.mubr.f32.gmra.mrb[0].mxu0 %v3292
      %v3470 = vpop.f32.mrb[0].mxu0
      %v3471 = vadd.f32 %v3387, %v3470
      %v3472 = vpop.f32.mrb[0].mxu0
      %3473 = vmatprep.mubr.f32.mxu0 %v3295
      %3474 = vmatmul.mubr.f32.gmra.mrb[0].mxu0 %v3294
      %v3475 = vpop.f32.mrb[0].mxu0
      %v3476 = vadd.f32 %v3387, %v3475
      %v3477 = vpop.f32.mrb[0].mxu0
      %3478 = vmatprep.mubr.f32.mxu0 %v3297
      %3479 = vmatmul.mubr.f32.gmra.mrb[0].mxu0 %v3296
      %v3480 = vpop.f32.mrb[0].mxu0
      %v3481 = vadd.f32 %v3387, %v3480
      %v3482 = vpop.f32.mrb[0].mxu0
      %3483 = vmatprep.mubr.f32.mxu0 %v3299
      %3484 = vmatmul.mubr.f32.gmra.mrb[0].mxu0 %v3298
      %v3485 = vpop.f32.mrb[0].mxu0
      %v3486 = vadd.f32 %v3387, %v3485
      %v3487 = vpop.f32.mrb[0].mxu0
      %3488 = vmatprep.mubr.f32.mxu0 %v3301
      %3489 = vmatmul.mubr.f32.gmra.mrb[0].mxu0 %v3300
      %v3490 = vpop.f32.mrb[0].mxu0
      %v3491 = vadd.f32 %v3387, %v3490
      %v3492 = vpop.f32.mrb[0].mxu0
      %3493 = vmatprep.mubr.f32.mxu0 %v3303
      %3494 = vmatmul.mubr.f32.gmra.mrb[0].mxu0 %v3302
      %v3495 = vpop.f32.mrb[0].mxu0
      %v3496 = vadd.f32 %v3387, %v3495
      %v3497 = vpop.f32.mrb[0].mxu0
      %3498 = vmatprep.mubr.f32.mxu0 %v3305
      %3499 = vmatmul.mubr.f32.gmra.mrb[0].mxu0 %v3304
      %v3500 = vpop.f32.mrb[0].mxu0
      %v3501 = vadd.f32 %v3387, %v3500
      %v3502 = vpop.f32.mrb[0].mxu0
      %3503 = vmatprep.mubr.f32.mxu0 %v3307
      %3504 = vmatmul.mubr.f32.gmra.mrb[0].mxu0 %v3306
      %v3505 = vpop.f32.mrb[0].mxu0
      %v3506 = vadd.f32 %v3387, %v3505
      %v3507 = vpop.f32.mrb[0].mxu0
      %3508 = vmatprep.mubr.f32.mxu0 %v3309
      %3509 = vmatmul.mubr.f32.gmra.mrb[0].mxu0 %v3308
      %v3510 = vpop.f32.mrb[0].mxu0
      %v3511 = vadd.f32 %v3387, %v3510
      %v3512 = vpop.f32.mrb[0].mxu0
      %3513 = vmatprep.mubr.f32.mxu0 %v3311
      %3514 = vmatmul.mubr.f32.gmra.mrb[0].mxu0 %v3310
      %v3515 = vpop.f32.mrb[0].mxu0
      %v3516 = vadd.f32 %v3387, %v3515
      %v3517 = vpop.f32.mrb[0].mxu0
      %3518 = vmatprep.mubr.f32.mxu0 %v3313
      %3519 = vmatmul.mubr.f32.gmra.mrb[0].mxu0 %v3312
      %v3520 = vpop.f32.mrb[0].mxu0
      %v3521 = vadd.f32 %v3387, %v3520
      %v3522 = vpop.f32.mrb[0].mxu0
      %3523 = vmatprep.mubr.f32.mxu0 %v3315
      %3524 = vmatmul.mubr.f32.gmra.mrb[0].mxu0 %v3314
      %v3525 = vpop.f32.mrb[0].mxu0
      %v3526 = vadd.f32 %v3387, %v3525
      %v3527 = vpop.f32.mrb[0].mxu0
      %3528 = vmatprep.mubr.f32.mxu0 %v3317
      %3529 = vmatmul.mubr.f32.gmra.mrb[0].mxu0 %v3316
      %v3530 = vpop.f32.mrb[0].mxu0
      %v3531 = vadd.f32 %v3387, %v3530
      %v3532 = vpop.f32.mrb[0].mxu0
      %3533 = vmatprep.mubr.f32.mxu0 %v3319
      %3534 = vmatmul.mubr.f32.gmra.mrb[0].mxu0 %v3318
      %v3535 = vpop.f32.mrb[0].mxu0
      %v3536 = vadd.f32 %v3387, %v3535
      %v3537 = vpop.f32.mrb[0].mxu0
      %3538 = vmatprep.mubr.f32.mxu0 %v3321
      %3539 = vmatmul.mubr.f32.gmra.mrb[0].mxu0 %v3320
      %v3540 = vpop.f32.mrb[0].mxu0
      %v3541 = vadd.f32 %v3387, %v3540
      %v3542 = vpop.f32.mrb[0].mxu0
      %3543 = vmatprep.mubr.f32.mxu0 %v3323
      %3544 = vmatmul.mubr.f32.gmra.mrb[0].mxu0 %v3322
      %v3545 = vpop.f32.mrb[0].mxu0
      %v3546 = vadd.f32 %v3387, %v3545
      %v3547 = vpop.f32.mrb[0].mxu0
      %3548 = vmatprep.mubr.f32.mxu0 %v3325
      %3549 = vmatmul.mubr.f32.gmra.mrb[0].mxu0 %v3324
      %v3550 = vpop.f32.mrb[0].mxu0
      %v3551 = vadd.f32 %v3387, %v3550
      %v3552 = vpop.f32.mrb[0].mxu0
      %3553 = vmatprep.mubr.f32.mxu0 %v3327
      %3554 = vmatmul.mubr.f32.gmra.mrb[0].mxu0 %v3326
      %v3555 = vpop.f32.mrb[0].mxu0
      %v3556 = vadd.f32 %v3387, %v3555
      %v3557 = vpop.f32.mrb[0].mxu0
      %3558 = vmatprep.mubr.f32.mxu0 %v3329
      %3559 = vmatmul.mubr.f32.gmra.mrb[0].mxu0 %v3328
      %v3560 = vpop.f32.mrb[0].mxu0
      %v3561 = vadd.f32 %v3387, %v3560
      %v3562 = vpop.f32.mrb[0].mxu0
      %3563 = vmatprep.mubr.f32.mxu0 %v3331
      %3564 = vmatmul.mubr.f32.gmra.mrb[0].mxu0 %v3330
      %v3565 = vpop.f32.mrb[0].mxu0
      %v3566 = vadd.f32 %v3387, %v3565
      %v3567 = vpop.f32.mrb[0].mxu0
      %3568 = vmatprep.mubr.f32.mxu0 %v3333
      %3569 = vmatmul.mubr.f32.gmra.mrb[0].mxu0 %v3332
      %v3570 = vpop.f32.mrb[0].mxu0
      %v3571 = vadd.f32 %v3387, %v3570
      %v3572 = vpop.f32.mrb[0].mxu0
      %3573 = vmatprep.mubr.f32.mxu0 %v3335
      %3574 = vmatmul.mubr.f32.gmra.mrb[0].mxu0 %v3334
      %v3575 = vpop.f32.mrb[0].mxu0
      %v3576 = vadd.f32 %v3387, %v3575
      %v3577 = vpop.f32.mrb[0].mxu0
      %3578 = vmatprep.mubr.f32.mxu0 %v3337
      %3579 = vmatmul.mubr.f32.gmra.mrb[0].mxu0 %v3336
      %v3580 = vpop.f32.mrb[0].mxu0
      %v3581 = vadd.f32 %v3387, %v3580
      %v3582 = vpop.f32.mrb[0].mxu0
      %3583 = vmatprep.mubr.f32.mxu0 %v3339
      %3584 = vmatmul.mubr.f32.gmra.mrb[0].mxu0 %v3338
      %v3585 = vpop.f32.mrb[0].mxu0
      %v3586 = vadd.f32 %v3387, %v3585
      %v3587 = vpop.f32.mrb[0].mxu0
      %3588 = vmatprep.mubr.f32.mxu0 %v3341
      %3589 = vmatmul.mubr.f32.gmra.mrb[0].mxu0 %v3340
      %v3590 = vpop.f32.mrb[0].mxu0
      %v3591 = vadd.f32 %v3387, %v3590
      %v3592 = vpop.f32.mrb[0].mxu0
      %3593 = vmatprep.mubr.f32.mxu0 %v3343
      %3594 = vmatmul.mubr.f32.gmra.mrb[0].mxu0 %v3342
      %v3595 = vpop.f32.mrb[0].mxu0
      %v3596 = vadd.f32 %v3387, %v3595
      %v3597 = vpop.f32.mrb[0].mxu0
      %3598 = vmatprep.mubr.f32.mxu0 %v3345
      %3599 = vmatmul.mubr.f32.gmra.mrb[0].mxu0 %v3344
      %v3600 = vpop.f32.mrb[0].mxu0
      %v3601 = vadd.f32 %v3387, %v3600
      %v3602 = vpop.f32.mrb[0].mxu0
      %3603 = vmatprep.mubr.f32.mxu0 %v3347
      %3604 = vmatmul.mubr.f32.gmra.mrb[0].mxu0 %v3346
      %v3605 = vpop.f32.mrb[0].mxu0
      %v3606 = vadd.f32 %v3387, %v3605
      %v3607 = vpop.f32.mrb[0].mxu0
      %3608 = vmatprep.mubr.f32.mxu0 %v3349
      %3609 = vmatmul.mubr.f32.gmra.mrb[0].mxu0 %v3348
      %v3610 = vpop.f32.mrb[0].mxu0
      %v3611 = vadd.f32 %v3387, %v3610
      %v3612 = vpop.f32.mrb[0].mxu0
      %3613 = vdwg.mxu0
      %v3614 = vmax.f32 %v3456, 0.0
      %v3615 = vmax.f32 %v3461, 0.0
      %v3616 = vmax.f32 %v3466, 0.0
      %v3617 = vmax.f32 %v3471, 0.0
      %v3618 = vmax.f32 %v3476, 0.0
      %v3619 = vmax.f32 %v3481, 0.0
      %v3620 = vmax.f32 %v3486, 0.0
      %v3621 = vmax.f32 %v3491, 0.0
      %v3622 = vmax.f32 %v3496, 0.0
      %v3623 = vmax.f32 %v3501, 0.0
      %v3624 = vmax.f32 %v3506, 0.0
      %v3625 = vmax.f32 %v3511, 0.0
      %v3626 = vmax.f32 %v3516, 0.0
      %v3627 = vmax.f32 %v3521, 0.0
      %v3628 = vmax.f32 %v3526, 0.0
      %v3629 = vmax.f32 %v3531, 0.0
      %v3630 = vmax.f32 %v3536, 0.0
      %v3631 = vmax.f32 %v3541, 0.0
      %v3632 = vmax.f32 %v3546, 0.0
      %v3633 = vmax.f32 %v3551, 0.0
      %v3634 = vmax.f32 %v3556, 0.0
      %v3635 = vmax.f32 %v3561, 0.0
      %v3636 = vmax.f32 %v3566, 0.0
      %v3637 = vmax.f32 %v3571, 0.0
      %v3638 = vmax.f32 %v3576, 0.0
      %v3639 = vmax.f32 %v3581, 0.0
      %v3640 = vmax.f32 %v3586, 0.0
      %v3641 = vmax.f32 %v3591, 0.0
      %v3642 = vmax.f32 %v3596, 0.0
      %v3643 = vmax.f32 %v3601, 0.0
      %v3644 = vmax.f32 %v3606, 0.0
      %v3645 = vmax.f32 %v3611, 0.0
      %v3646 = vld [vmem:[%s9] sm:$0xff]
      %v3647 = vld [vmem:[%s9 + $0x8] sm:$0xff]
      %v3648 = vld [vmem:[%s9 + $0x10] sm:$0xff]
      %v3649 = vld [vmem:[%s9 + $0x18] sm:$0xff]
      %v3650 = vld [vmem:[%s9 + $0x20] sm:$0xff]
      %v3651 = vld [vmem:[%s9 + $0x28] sm:$0xff]
      %v3652 = vld [vmem:[%s9 + $0x30] sm:$0xff]
      %v3653 = vld [vmem:[%s9 + $0x38] sm:$0xff]
      %v3654 = vld [vmem:[%s9 + $0x40] sm:$0xff]
      %v3655 = vld [vmem:[%s9 + $0x48] sm:$0xff]
      %v3656 = vld [vmem:[%s9 + $0x50] sm:$0xff]
      %v3657 = vld [vmem:[%s9 + $0x58] sm:$0xff]
      %v3658 = vld [vmem:[%s9 + $0x60] sm:$0xff]
      %v3659 = vld [vmem:[%s9 + $0x68] sm:$0xff]
      %v3660 = vld [vmem:[%s9 + $0x70] sm:$0xff]
      %v3661 = vld [vmem:[%s9 + $0x78] sm:$0xff]
      %v3662 = vld [vmem:[%s10] sm:$0x1]
      %v3664 = vlaneseq
      %v3665 = vshrl.u32 %v3664, 7
      %v3666 = vsub.s32 0, %v3665
      %v3667 = vrot.slane %v3662, %v3666
      %3669 = vmatprep.subr.mxu0 0.0
      %3670 = vmatpush1.msra.mxu0 %v3646
      %3671 = vmatprep.subr.mxu0 0.0
      %3672 = vmatpush1.msra.mxu0 %v3647
      %3673 = vmatprep.subr.mxu0 0.0
      %3674 = vmatpush1.msra.mxu0 %v3648
      %3675 = vmatprep.subr.mxu0 0.0
      %3676 = vmatpush1.msra.mxu0 %v3649
      %3677 = vmatprep.subr.mxu0 0.0
      %3678 = vmatpush1.msra.mxu0 %v3650
      %3679 = vmatprep.subr.mxu0 0.0
      %3680 = vmatpush1.msra.mxu0 %v3651
      %3681 = vmatprep.subr.mxu0 0.0
      %3682 = vmatpush1.msra.mxu0 %v3652
      %3683 = vmatprep.subr.mxu0 0.0
      %3684 = vmatpush1.msra.mxu0 %v3653
      %3685 = vmatprep.subr.mxu0 0.0
      %3686 = vmatpush1.msra.mxu0 %v3654
      %3687 = vmatprep.subr.mxu0 0.0
      %3688 = vmatpush1.msra.mxu0 %v3655
      %3689 = vmatprep.subr.mxu0 0.0
      %3690 = vmatpush1.msra.mxu0 %v3656
      %3691 = vmatprep.subr.mxu0 0.0
      %3692 = vmatpush1.msra.mxu0 %v3657
      %3693 = vmatprep.subr.mxu0 0.0
      %3694 = vmatpush1.msra.mxu0 %v3658
      %3695 = vmatprep.subr.mxu0 0.0
      %3696 = vmatpush1.msra.mxu0 %v3659
      %3697 = vmatprep.subr.mxu0 0.0
      %3698 = vmatpush1.msra.mxu0 %v3660
      %3699 = vmatprep.subr.mxu0 0.0
      %3700 = vmatpush1.msra.mxu0 %v3661
      %3701 = vmatprep.subr.mxu0 0.0
      %3702 = vmatpush1.msra.mxu0 0.0
      %3703 = vmatprep.subr.mxu0 0.0
      %3704 = vmatpush1.msra.mxu0 0.0
      %3705 = vmatprep.subr.mxu0 0.0
      %3706 = vmatpush1.msra.mxu0 0.0
      %3707 = vmatprep.subr.mxu0 0.0
      %3708 = vmatpush1.msra.mxu0 0.0
      %3709 = vmatprep.subr.mxu0 0.0
      %3710 = vmatpush1.msra.mxu0 0.0
      %3711 = vmatprep.subr.mxu0 0.0
      %3712 = vmatpush1.msra.mxu0 0.0
      %3713 = vmatprep.subr.mxu0 0.0
      %3714 = vmatpush1.msra.mxu0 0.0
      %3715 = vmatprep.subr.mxu0 0.0
      %3716 = vmatpush1.msra.mxu0 0.0
      %3717 = vmatprep.subr.mxu0 0.0
      %3718 = vmatpush1.msra.mxu0 0.0
      %3719 = vmatprep.subr.mxu0 0.0
      %3720 = vmatpush1.msra.mxu0 0.0
      %3721 = vmatprep.subr.mxu0 0.0
      %3722 = vmatpush1.msra.mxu0 0.0
      %3723 = vmatprep.subr.mxu0 0.0
      %3724 = vmatpush1.msra.mxu0 0.0
      %3725 = vmatprep.subr.mxu0 0.0
      %3726 = vmatpush1.msra.mxu0 0.0
      %3727 = vmatprep.subr.mxu0 0.0
      %3728 = vmatpush1.msra.mxu0 0.0
      %3729 = vmatprep.subr.mxu0 0.0
      %3730 = vmatpush1.msra.mxu0 0.0
      %3731 = vmatprep.subr.mxu0 0.0
      %3732 = vmatpush1.msra.mxu0 0.0
      %3733 = vmatprep.mubr.f32.mxu0 0.0
      %3734 = vmatmul.mubr.f32.gmra.mrb[0].mxu0 %v3614
      %v3735 = vpop.f32.mrb[0].mxu0
      %v3736 = vadd.f32 %v3667, %v3735
      %v3737 = vpop.f32.mrb[0].mxu0
      %3738 = vmatprep.mubr.f32.mxu0 0.0
      %3739 = vmatmul.mubr.f32.gmra.mrb[0].mxu0 %v3615
      %v3740 = vpop.f32.mrb[0].mxu0
      %v3741 = vadd.f32 %v3667, %v3740
      %v3742 = vpop.f32.mrb[0].mxu0
      %3743 = vmatprep.mubr.f32.mxu0 0.0
      %3744 = vmatmul.mubr.f32.gmra.mrb[0].mxu0 %v3616
      %v3745 = vpop.f32.mrb[0].mxu0
      %v3746 = vadd.f32 %v3667, %v3745
      %v3747 = vpop.f32.mrb[0].mxu0
      %3748 = vmatprep.mubr.f32.mxu0 0.0
      %3749 = vmatmul.mubr.f32.gmra.mrb[0].mxu0 %v3617
      %v3750 = vpop.f32.mrb[0].mxu0
      %v3751 = vadd.f32 %v3667, %v3750
      %v3752 = vpop.f32.mrb[0].mxu0
      %3753 = vmatprep.mubr.f32.mxu0 0.0
      %3754 = vmatmul.mubr.f32.gmra.mrb[0].mxu0 %v3618
      %v3755 = vpop.f32.mrb[0].mxu0
      %v3756 = vadd.f32 %v3667, %v3755
      %v3757 = vpop.f32.mrb[0].mxu0
      %3758 = vmatprep.mubr.f32.mxu0 0.0
      %3759 = vmatmul.mubr.f32.gmra.mrb[0].mxu0 %v3619
      %v3760 = vpop.f32.mrb[0].mxu0
      %v3761 = vadd.f32 %v3667, %v3760
      %v3762 = vpop.f32.mrb[0].mxu0
      %3763 = vmatprep.mubr.f32.mxu0 0.0
      %3764 = vmatmul.mubr.f32.gmra.mrb[0].mxu0 %v3620
      %v3765 = vpop.f32.mrb[0].mxu0
      %v3766 = vadd.f32 %v3667, %v3765
      %v3767 = vpop.f32.mrb[0].mxu0
      %3768 = vmatprep.mubr.f32.mxu0 0.0
      %3769 = vmatmul.mubr.f32.gmra.mrb[0].mxu0 %v3621
      %v3770 = vpop.f32.mrb[0].mxu0
      %v3771 = vadd.f32 %v3667, %v3770
      %v3772 = vpop.f32.mrb[0].mxu0
      %3773 = vmatprep.mubr.f32.mxu0 0.0
      %3774 = vmatmul.mubr.f32.gmra.mrb[0].mxu0 %v3622
      %v3775 = vpop.f32.mrb[0].mxu0
      %v3776 = vadd.f32 %v3667, %v3775
      %v3777 = vpop.f32.mrb[0].mxu0
      %3778 = vmatprep.mubr.f32.mxu0 0.0
      %3779 = vmatmul.mubr.f32.gmra.mrb[0].mxu0 %v3623
      %v3780 = vpop.f32.mrb[0].mxu0
      %v3781 = vadd.f32 %v3667, %v3780
      %v3782 = vpop.f32.mrb[0].mxu0
      %3783 = vmatprep.mubr.f32.mxu0 0.0
      %3784 = vmatmul.mubr.f32.gmra.mrb[0].mxu0 %v3624
      %v3785 = vpop.f32.mrb[0].mxu0
      %v3786 = vadd.f32 %v3667, %v3785
      %v3787 = vpop.f32.mrb[0].mxu0
      %3788 = vmatprep.mubr.f32.mxu0 0.0
      %3789 = vmatmul.mubr.f32.gmra.mrb[0].mxu0 %v3625
      %v3790 = vpop.f32.mrb[0].mxu0
      %v3791 = vadd.f32 %v3667, %v3790
      %v3792 = vpop.f32.mrb[0].mxu0
      %3793 = vmatprep.mubr.f32.mxu0 0.0
      %3794 = vmatmul.mubr.f32.gmra.mrb[0].mxu0 %v3626
      %v3795 = vpop.f32.mrb[0].mxu0
      %v3796 = vadd.f32 %v3667, %v3795
      %v3797 = vpop.f32.mrb[0].mxu0
      %3798 = vmatprep.mubr.f32.mxu0 0.0
      %3799 = vmatmul.mubr.f32.gmra.mrb[0].mxu0 %v3627
      %v3800 = vpop.f32.mrb[0].mxu0
      %v3801 = vadd.f32 %v3667, %v3800
      %v3802 = vpop.f32.mrb[0].mxu0
      %3803 = vmatprep.mubr.f32.mxu0 0.0
      %3804 = vmatmul.mubr.f32.gmra.mrb[0].mxu0 %v3628
      %v3805 = vpop.f32.mrb[0].mxu0
      %v3806 = vadd.f32 %v3667, %v3805
      %v3807 = vpop.f32.mrb[0].mxu0
      %3808 = vmatprep.mubr.f32.mxu0 0.0
      %3809 = vmatmul.mubr.f32.gmra.mrb[0].mxu0 %v3629
      %v3810 = vpop.f32.mrb[0].mxu0
      %v3811 = vadd.f32 %v3667, %v3810
      %v3812 = vpop.f32.mrb[0].mxu0
      %3813 = vmatprep.mubr.f32.mxu0 0.0
      %3814 = vmatmul.mubr.f32.gmra.mrb[0].mxu0 %v3630
      %v3815 = vpop.f32.mrb[0].mxu0
      %v3816 = vadd.f32 %v3667, %v3815
      %v3817 = vpop.f32.mrb[0].mxu0
      %3818 = vmatprep.mubr.f32.mxu0 0.0
      %3819 = vmatmul.mubr.f32.gmra.mrb[0].mxu0 %v3631
      %v3820 = vpop.f32.mrb[0].mxu0
      %v3821 = vadd.f32 %v3667, %v3820
      %v3822 = vpop.f32.mrb[0].mxu0
      %3823 = vmatprep.mubr.f32.mxu0 0.0
      %3824 = vmatmul.mubr.f32.gmra.mrb[0].mxu0 %v3632
      %v3825 = vpop.f32.mrb[0].mxu0
      %v3826 = vadd.f32 %v3667, %v3825
      %v3827 = vpop.f32.mrb[0].mxu0
      %3828 = vmatprep.mubr.f32.mxu0 0.0
      %3829 = vmatmul.mubr.f32.gmra.mrb[0].mxu0 %v3633
      %v3830 = vpop.f32.mrb[0].mxu0
      %v3831 = vadd.f32 %v3667, %v3830
      %v3832 = vpop.f32.mrb[0].mxu0
      %3833 = vmatprep.mubr.f32.mxu0 0.0
      %3834 = vmatmul.mubr.f32.gmra.mrb[0].mxu0 %v3634
      %v3835 = vpop.f32.mrb[0].mxu0
      %v3836 = vadd.f32 %v3667, %v3835
      %v3837 = vpop.f32.mrb[0].mxu0
      %3838 = vmatprep.mubr.f32.mxu0 0.0
      %3839 = vmatmul.mubr.f32.gmra.mrb[0].mxu0 %v3635
      %v3840 = vpop.f32.mrb[0].mxu0
      %v3841 = vadd.f32 %v3667, %v3840
      %v3842 = vpop.f32.mrb[0].mxu0
      %3843 = vmatprep.mubr.f32.mxu0 0.0
      %3844 = vmatmul.mubr.f32.gmra.mrb[0].mxu0 %v3636
      %v3845 = vpop.f32.mrb[0].mxu0
      %v3846 = vadd.f32 %v3667, %v3845
      %v3847 = vpop.f32.mrb[0].mxu0
      %3848 = vmatprep.mubr.f32.mxu0 0.0
      %3849 = vmatmul.mubr.f32.gmra.mrb[0].mxu0 %v3637
      %v3850 = vpop.f32.mrb[0].mxu0
      %v3851 = vadd.f32 %v3667, %v3850
      %v3852 = vpop.f32.mrb[0].mxu0
      %3853 = vmatprep.mubr.f32.mxu0 0.0
      %3854 = vmatmul.mubr.f32.gmra.mrb[0].mxu0 %v3638
      %v3855 = vpop.f32.mrb[0].mxu0
      %v3856 = vadd.f32 %v3667, %v3855
      %v3857 = vpop.f32.mrb[0].mxu0
      %3858 = vmatprep.mubr.f32.mxu0 0.0
      %3859 = vmatmul.mubr.f32.gmra.mrb[0].mxu0 %v3639
      %v3860 = vpop.f32.mrb[0].mxu0
      %v3861 = vadd.f32 %v3667, %v3860
      %v3862 = vpop.f32.mrb[0].mxu0
      %3863 = vmatprep.mubr.f32.mxu0 0.0
      %3864 = vmatmul.mubr.f32.gmra.mrb[0].mxu0 %v3640
      %v3865 = vpop.f32.mrb[0].mxu0
      %v3866 = vadd.f32 %v3667, %v3865
      %v3867 = vpop.f32.mrb[0].mxu0
      %3868 = vmatprep.mubr.f32.mxu0 0.0
      %3869 = vmatmul.mubr.f32.gmra.mrb[0].mxu0 %v3641
      %v3870 = vpop.f32.mrb[0].mxu0
      %v3871 = vadd.f32 %v3667, %v3870
      %v3872 = vpop.f32.mrb[0].mxu0
      %3873 = vmatprep.mubr.f32.mxu0 0.0
      %3874 = vmatmul.mubr.f32.gmra.mrb[0].mxu0 %v3642
      %v3875 = vpop.f32.mrb[0].mxu0
      %v3876 = vadd.f32 %v3667, %v3875
      %v3877 = vpop.f32.mrb[0].mxu0
      %3878 = vmatprep.mubr.f32.mxu0 0.0
      %3879 = vmatmul.mubr.f32.gmra.mrb[0].mxu0 %v3643
      %v3880 = vpop.f32.mrb[0].mxu0
      %v3881 = vadd.f32 %v3667, %v3880
      %v3882 = vpop.f32.mrb[0].mxu0
      %3883 = vmatprep.mubr.f32.mxu0 0.0
      %3884 = vmatmul.mubr.f32.gmra.mrb[0].mxu0 %v3644
      %v3885 = vpop.f32.mrb[0].mxu0
      %v3886 = vadd.f32 %v3667, %v3885
      %v3887 = vpop.f32.mrb[0].mxu0
      %3888 = vmatprep.mubr.f32.mxu0 0.0
      %3889 = vmatmul.mubr.f32.gmra.mrb[0].mxu0 %v3645
      %v3890 = vpop.f32.mrb[0].mxu0
      %v3891 = vadd.f32 %v3667, %v3890
      %v3892 = vpop.f32.mrb[0].mxu0
      %3893 = vdwg.mxu0
      %3894 = vst [vmem:[%s388] sm:$0xff] %v3736
      %3895 = vst [vmem:[%s388 + $0x8] sm:$0xff] %v3741
      %3896 = vst [vmem:[%s388 + $0x10] sm:$0xff] %v3746
      %3897 = vst [vmem:[%s388 + $0x18] sm:$0xff] %v3751
      %3898 = vst [vmem:[%s388 + $0x20] sm:$0xff] %v3756
      %3899 = vst [vmem:[%s388 + $0x28] sm:$0xff] %v3761
      %3900 = vst [vmem:[%s388 + $0x30] sm:$0xff] %v3766
      %3901 = vst [vmem:[%s388 + $0x38] sm:$0xff] %v3771
      %3902 = vst [vmem:[%s388 + $0x40] sm:$0xff] %v3776
      %3903 = vst [vmem:[%s388 + $0x48] sm:$0xff] %v3781
      %3904 = vst [vmem:[%s388 + $0x50] sm:$0xff] %v3786
      %3905 = vst [vmem:[%s388 + $0x58] sm:$0xff] %v3791
      %3906 = vst [vmem:[%s388 + $0x60] sm:$0xff] %v3796
      %3907 = vst [vmem:[%s388 + $0x68] sm:$0xff] %v3801
      %3908 = vst [vmem:[%s388 + $0x70] sm:$0xff] %v3806
      %3909 = vst [vmem:[%s388 + $0x78] sm:$0xff] %v3811
      %3910 = vst [vmem:[%s388 + $0x80] sm:$0xff] %v3816
      %3911 = vst [vmem:[%s388 + $0x88] sm:$0xff] %v3821
      %3912 = vst [vmem:[%s388 + $0x90] sm:$0xff] %v3826
      %3913 = vst [vmem:[%s388 + $0x98] sm:$0xff] %v3831
      %3914 = vst [vmem:[%s388 + $0xa0] sm:$0xff] %v3836
      %3915 = vst [vmem:[%s388 + $0xa8] sm:$0xff] %v3841
      %3916 = vst [vmem:[%s388 + $0xb0] sm:$0xff] %v3846
      %3917 = vst [vmem:[%s388 + $0xb8] sm:$0xff] %v3851
      %3918 = vst [vmem:[%s388 + $0xc0] sm:$0xff] %v3856
      %3919 = vst [vmem:[%s388 + $0xc8] sm:$0xff] %v3861
      %3920 = vst [vmem:[%s388 + $0xd0] sm:$0xff] %v3866
      %3921 = vst [vmem:[%s388 + $0xd8] sm:$0xff] %v3871
      %3922 = vst [vmem:[%s388 + $0xe0] sm:$0xff] %v3876
      %3923 = vst [vmem:[%s388 + $0xe8] sm:$0xff] %v3881
      %3924 = vst [vmem:[%s388 + $0xf0] sm:$0xff] %v3886
      %3925 = vst [vmem:[%s388 + $0xf8] sm:$0xff] %v3891
      %s3926 = smul.u32 32, %s22
      %p3927 = scmp.lt.s32.totalorder %s3926, 63
      %s3928 = scalar_select %p3927, %s3926, 63
      %s3929 = smul.addr %s3928, 8
      %s3930 = scalar_lea.vmem %s11, %s3929
      // Predicated region
      $region65: #{flamelet_mlp.1} parent=63 // pred_check
        %p3931 = pneg %p276
      $region66: #{flamelet_mlp.1} parent=63 // pred_check_branch
        %3933 = sbr.rel (%p3931) target = $region68
      $region67: #{flamelet_mlp.1} parent=63 // pred_region
        %s3934 = smul.u32 32, %s22
      $region68: #{flamelet_mlp.1} parent=63 // pred_fallthru
        _
    $region64: #{flamelet_mlp.1} parent=5 // pred_fallthru
      _
    %p3935 = scmp.le.s32.totalorder 2, %s17
    // Predicated region
    $region69: #{flamelet_mlp.1} parent=5 // pred_check
      %p3936 = pneg %p3935
    $region70: #{flamelet_mlp.1} parent=5 // pred_check_branch
      %3938 = sbr.rel (%p3936) target = $region72
    $region71: #{flamelet_mlp.1} parent=5 // pred_region
      %s3939 = ssub.s32 %s17, 2
      // Predicated region
      $region73: #{flamelet_mlp.1} parent=71 // pred_check
        %p3940 = pneg %p282
      $region74: #{flamelet_mlp.1} parent=71 // pred_check_branch
        %3942 = sbr.rel (%p3940) target = $region76
      $region75: #{flamelet_mlp.1} parent=71 // pred_region
        %s3943 = smul.u32 32, %s23
        %p3944 = scmp.lt.s32.totalorder %s3943, 63
        %s3945 = scalar_select %p3944, %s3943, 63
        %s3946 = smul.addr %s3945, 8
        %s3947 = scalar_lea.vmem %s11, %s3946
      $region76: #{flamelet_mlp.1} parent=71 // pred_fallthru
        _
    $region72: #{flamelet_mlp.1} parent=5 // pred_fallthru
      _
  $region6: #{flamelet_mlp.1} parent=0 // loop_footer
    %s21 = sadd.s32 1, %s17
  $region7: #{flamelet_mlp.1} parent=0 // loop_footer_branch
    %16 = sbr.rel target = $region3
  $region8: #{flamelet_mlp.1} parent=0 // loop_exit
    _

</llo_original>
